<compile_context>
chip_gen: v7x
topology: tpu7x:2x2x1
jax: 0.10.0
libtpu: 0.0.40
codegen_flags: <defaults>
</compile_context>

<pallas_src>
import functools

import jax
import jax.numpy as jnp
from jax.experimental import pallas as pl
from jax.experimental.pallas import tpu as pltpu


def mhsa_kernel(x_ref, xt_ref, wq_ref, wk_ref, wqt_ref, wvt_ref, pos_ref, out_ref, *,
                heads, dim_head, mxu_dtype):
    """One batch element per grid step (all heads).

    x_ref   : (1, C+1, N)   bf16  [x ; ones]           (channels, spatial)
    xt_ref  : (1, N, C+1)   bf16  [x^T | ones]
    wq_ref  : (C, C+1)      bf16  [Wq | bq]
    wk_ref  : (C, C+1)      bf16  [Wk | bk]
    wqt_ref : (C+1, C)      bf16  [Wq^T ; bq]
    wvt_ref : (C+1, C)      bf16  [Wv^T ; bv]
    pos_ref : (heads, N, d) bf16  per-head (rel_h + rel_w), N-major
    out_ref : (1, N, C)           out^T per batch element (lane-dense store)
    """
    f32 = jnp.float32
    d = dim_head

    x = x_ref[0]       # (C+1, N)
    xt = xt_ref[0]     # (N, C+1)

    # Projections for ALL heads at once, biases folded in via the ones row/column.
    # bf16 operands, f32 accumulation (MXU fast path); results re-cast to bf16 once.
    q = jnp.dot(wq_ref[...], x, preferred_element_type=f32).astype(mxu_dtype)     # (C, N)
    k = jnp.dot(wk_ref[...], x, preferred_element_type=f32).astype(mxu_dtype)     # (C, N)
    qt = jnp.dot(xt, wqt_ref[...], preferred_element_type=f32).astype(mxu_dtype)  # (N, C)
    vt = jnp.dot(xt, wvt_ref[...], preferred_element_type=f32).astype(mxu_dtype)  # (N, C)

    outs = []
    for h in range(heads):          # static unroll; heads is small (2-4)
        sl = slice(h * d, (h + 1) * d)
        qh = q[sl, :]               # (d, N) bf16
        kh = k[sl, :]               # (d, N) bf16
        qht = qt[:, sl]             # (N, d) bf16
        vht = vt[:, sl]             # (N, d) bf16
        ph = pos_ref[h]             # (N, d) bf16

        # energy = q^T k + pos q : two natural (M,K)x(K,N) MXU matmuls, f32 accumulate.
        energy = (jnp.dot(qht, kh, preferred_element_type=f32)
                  + jnp.dot(ph, qh, preferred_element_type=f32))                   # (N, N)

        # Row softmax in f32 (exp on EUP; division replaced by approx reciprocal on EUP).
        m = jnp.max(energy, axis=-1, keepdims=True)
        p = jnp.exp(energy - m)
        att = p * pl.reciprocal(jnp.sum(p, axis=-1, keepdims=True), approx=True)

        # out_h^T = att @ v_h^T : natural (N,N)x(N,d) — no attention transpose needed.
        oth = jnp.dot(att.astype(mxu_dtype), vht, preferred_element_type=f32)      # (N, d)
        outs.append(oth.astype(out_ref.dtype))

    # Single lane-dense (N, C) store (heads concatenated along lanes).
    out_ref[0] = jnp.concatenate(outs, axis=-1)


def mhsa_forward(x, wq, bq, wk, bk, wv, bv, rel_h, rel_w, heads,
                 mxu_dtype=jnp.bfloat16):
    # TODO(synk): on v7x evaluate fp8 (with per-row scaling) for the attention matmuls
    # via mxu_dtype; keep bf16 on v5e/v6e.
    B, C, W, H = x.shape
    N = W * H
    assert C % heads == 0
    d = C // heads
    assert d % 8 == 0, "head dim must be a multiple of 8 (sublane tiling)"
    # TODO(synk): for N not a multiple of 128 (real BoTNet 14x14 -> 196), pad the spatial
    # axis (masking padded keys with -inf energy) to keep stores lane-dense.
    # TODO(synk): for very large C / N (e.g. C=2048), tile the (C,C) weights over K and
    # switch to a key-tiled online-softmax loop; set vmem_limit_bytes accordingly (v7x).

    f32 = jnp.float32
    xf = x.reshape(B, C, N).astype(f32)

    # Bias folding: augment x with a ones row (channel-major) / ones column (spatial-major)
    # and append the bias as an extra weight column / row.  Cast everything fed to the MXU
    # to bf16 in the wrapper (halves DMA bytes and removes in-kernel cast work).
    x_aug = jnp.concatenate([xf, jnp.ones((B, 1, N), f32)], axis=1).astype(mxu_dtype)       # (B, C+1, N)
    xt_aug = jnp.concatenate([xf.transpose(0, 2, 1), jnp.ones((B, N, 1), f32)],
                             axis=2).astype(mxu_dtype)                                      # (B, N, C+1)

    wq_aug = jnp.concatenate([wq, bq[:, None]], axis=1).astype(mxu_dtype)    # (C, C+1)
    wk_aug = jnp.concatenate([wk, bk[:, None]], axis=1).astype(mxu_dtype)    # (C, C+1)
    wqt_aug = jnp.concatenate([wq.T, bq[None, :]], axis=0).astype(mxu_dtype)  # (C+1, C)
    wvt_aug = jnp.concatenate([wv.T, bv[None, :]], axis=0).astype(mxu_dtype)  # (C+1, C)

    # (1, heads, d, 1, H) + (1, heads, d, W, 1) -> (heads, d, N) -> N-major (heads, N, d)
    pos = (rel_h + rel_w).reshape(heads, d, N).transpose(0, 2, 1).astype(mxu_dtype)

    kernel = functools.partial(mhsa_kernel, heads=heads, dim_head=d, mxu_dtype=mxu_dtype)

    # Advisory cost estimate for XLA's scheduler around the custom call.
    proj_flops = 4 * 2 * N * (C + 1) * C
    attn_flops = heads * 6 * N * N * d
    cost = pl.CostEstimate(
        flops=int(B * (proj_flops + attn_flops)),
        transcendentals=int(B * heads * N * N),
        bytes_accessed=int(2 * (2 * B * (C + 1) * N + 4 * (C + 1) * C + heads * N * d)
                           + 4 * B * N * C),
    )

    out_t = pl.pallas_call(
        kernel,
        out_shape=jax.ShapeDtypeStruct((B, N, C), x.dtype),
        grid=(B,),
        in_specs=[
            pl.BlockSpec((1, C + 1, N), lambda b: (b, 0, 0)),      # x_aug
            pl.BlockSpec((1, N, C + 1), lambda b: (b, 0, 0)),      # xT_aug
            pl.BlockSpec((C, C + 1), lambda b: (0, 0)),            # [Wq | bq]   (fetched once)
            pl.BlockSpec((C, C + 1), lambda b: (0, 0)),            # [Wk | bk]
            pl.BlockSpec((C + 1, C), lambda b: (0, 0)),            # [Wq^T ; bq]
            pl.BlockSpec((C + 1, C), lambda b: (0, 0)),            # [Wv^T ; bv]
            pl.BlockSpec((heads, N, d), lambda b: (0, 0, 0)),      # pos
        ],
        out_specs=pl.BlockSpec((1, N, C), lambda b: (b, 0, 0)),    # lane-dense out^T slab
        compiler_params=pltpu.CompilerParams(dimension_semantics=("parallel",)),
        cost_estimate=cost,
    )(x_aug, xt_aug, wq_aug, wk_aug, wqt_aug, wvt_aug, pos)

    # out_t[b, n, c] == out[b, c, n]
    return out_t.transpose(0, 2, 1).reshape(B, C, W, H)


def mhsa_reference(x, wq, bq, wk, bk, wv, bv, rel_h, rel_w, heads):
    """Plain-JAX transcription of the PyTorch forward (f32, highest precision)."""
    B, C, W, H = x.shape
    d = C // heads
    N = W * H
    hp = jax.lax.Precision.HIGHEST
    xf = x.reshape(B, C, N)
    q = (jnp.einsum('oc,bcn->bon', wq, xf, precision=hp)
         + bq[None, :, None]).reshape(B, heads, d, N)
    k = (jnp.einsum('oc,bcn->bon', wk, xf, precision=hp)
         + bk[None, :, None]).reshape(B, heads, d, N)
    v = (jnp.einsum('oc,bcn->bon', wv, xf, precision=hp)
         + bv[None, :, None]).reshape(B, heads, d, N)
    cc = jnp.einsum('bhdi,bhdj->bhij', q, k, precision=hp)
    pos = (rel_h + rel_w).reshape(heads, d, N).transpose(0, 2, 1)      # (heads, N, d)
    cp = jnp.einsum('hid,bhdj->bhij', pos, q, precision=hp)
    att = jax.nn.softmax(cc + cp, axis=-1)
    out = jnp.einsum('bhdj,bhij->bhdi', v, att, precision=hp)
    return out.reshape(B, C, W, H)


if __name__ == "__main__":
    def run_case(B, C, W, H, heads, w_scale, b_scale, rel_scale):
        d = C // heads
        key = jax.random.PRNGKey(0)
        ks = jax.random.split(key, 9)
        x = jax.random.normal(ks[0], (B, C, W, H), jnp.float32)
        wq = jax.random.normal(ks[1], (C, C), jnp.float32) * w_scale
        wk = jax.random.normal(ks[2], (C, C), jnp.float32) * w_scale
        wv = jax.random.normal(ks[3], (C, C), jnp.float32) * w_scale
        bq = jax.random.normal(ks[4], (C,), jnp.float32) * b_scale
        bk = jax.random.normal(ks[5], (C,), jnp.float32) * b_scale
        bv = jax.random.normal(ks[6], (C,), jnp.float32) * b_scale
        rel_h = jax.random.normal(ks[7], (1, heads, d, 1, H), jnp.float32) * rel_scale
        rel_w = jax.random.normal(ks[8], (1, heads, d, W, 1), jnp.float32) * rel_scale

        out = mhsa_forward(x, wq, bq, wk, bk, wv, bv, rel_h, rel_w, heads)
        out = jax.block_until_ready(out)

        ref = mhsa_reference(x, wq, bq, wk, bk, wv, bv, rel_h, rel_w, heads)
        assert out.shape == (B, C, W, H)
        assert jnp.allclose(out, ref, rtol=2e-2, atol=2e-2), (
            f"mismatch vs reference: max abs err = {jnp.max(jnp.abs(out - ref))}")

    # Small config (d = 8): exercises unaligned head-dim slicing.
    run_case(B=2, C=16, W=16, H=16, heads=2, w_scale=0.1, b_scale=0.1, rel_scale=0.5)
    # Aligned config (d = 128): lane-aligned per-head slices, full bf16 MXU path.
    run_case(B=2, C=256, W=16, H=16, heads=2, w_scale=0.02, b_scale=0.05, rel_scale=0.15)

    print("KERNEL_OK")
</pallas_src>

<mosaic_0001>
module attributes {stable_mosaic.version = 11 : i64} {
  func.func @mhsa_kernel(%arg0: i32, %arg1: memref<1x17x256xbf16, #tpu.memory_space<vmem>>, %arg2: memref<1x256x17xbf16, #tpu.memory_space<vmem>>, %arg3: memref<16x17xbf16, #tpu.memory_space<vmem>>, %arg4: memref<16x17xbf16, #tpu.memory_space<vmem>>, %arg5: memref<17x16xbf16, #tpu.memory_space<vmem>>, %arg6: memref<17x16xbf16, #tpu.memory_space<vmem>>, %arg7: memref<2x256x8xbf16, #tpu.memory_space<vmem>>, %arg8: memref<1x256x16xf32, #tpu.memory_space<vmem>>) attributes {dimension_semantics = [#tpu.dimension_semantics<parallel>], iteration_bounds = array<i64: 2>, scalar_prefetch = 0 : i64, scratch_operands = 0 : i64, tpu.core_type = #tpu.core_type<tc>, window_params = [{transform_indices = @transform_0, window_bounds = array<i64: 1, 17, 256>}, {transform_indices = @transform_1, window_bounds = array<i64: 1, 256, 17>}, {pipeline_mode = #tpu.pipeline_mode<synchronous>, transform_indices = @transform_2, window_bounds = array<i64: 16, 17>}, {pipeline_mode = #tpu.pipeline_mode<synchronous>, transform_indices = @transform_3, window_bounds = array<i64: 16, 17>}, {pipeline_mode = #tpu.pipeline_mode<synchronous>, transform_indices = @transform_4, window_bounds = array<i64: 17, 16>}, {pipeline_mode = #tpu.pipeline_mode<synchronous>, transform_indices = @transform_5, window_bounds = array<i64: 17, 16>}, {pipeline_mode = #tpu.pipeline_mode<synchronous>, transform_indices = @transform_6, window_bounds = array<i64: 2, 256, 8>}, {transform_indices = @transform_7, window_bounds = array<i64: 1, 256, 16>}]} {
    %c0 = arith.constant 0 : index
    %c0_0 = arith.constant 0 : index
    %c0_1 = arith.constant 0 : index
    %0 = vector.load %arg1[%c0, %c0_0, %c0_1] : memref<1x17x256xbf16, #tpu.memory_space<vmem>>, vector<1x17x256xbf16>
    %1 = vector.shape_cast %0 : vector<1x17x256xbf16> to vector<17x256xbf16>
    %c0_2 = arith.constant 0 : index
    %c0_3 = arith.constant 0 : index
    %c0_4 = arith.constant 0 : index
    %2 = vector.load %arg2[%c0_2, %c0_3, %c0_4] : memref<1x256x17xbf16, #tpu.memory_space<vmem>>, vector<1x256x17xbf16>
    %3 = vector.shape_cast %2 : vector<1x256x17xbf16> to vector<256x17xbf16>
    %c0_5 = arith.constant 0 : index
    %c0_6 = arith.constant 0 : index
    %4 = vector.load %arg3[%c0_5, %c0_6] : memref<16x17xbf16, #tpu.memory_space<vmem>>, vector<16x17xbf16>
    %cst = arith.constant dense<0.000000e+00> : vector<16x256xf32>
    %5 = tpu.matmul %4, %1, %cst {dimension_numbers = #tpu.dot_dimension_numbers<[1], [0], [0], [1], [0, 0, 1, 1], [], []>} : vector<16x17xbf16>, vector<17x256xbf16>, vector<16x256xf32> -> vector<16x256xf32>
    %6 = arith.truncf %5 : vector<16x256xf32> to vector<16x256xbf16>
    %c0_7 = arith.constant 0 : index
    %c0_8 = arith.constant 0 : index
    %7 = vector.load %arg4[%c0_7, %c0_8] : memref<16x17xbf16, #tpu.memory_space<vmem>>, vector<16x17xbf16>
    %cst_9 = arith.constant dense<0.000000e+00> : vector<16x256xf32>
    %8 = tpu.matmul %7, %1, %cst_9 {dimension_numbers = #tpu.dot_dimension_numbers<[1], [0], [0], [1], [0, 0, 1, 1], [], []>} : vector<16x17xbf16>, vector<17x256xbf16>, vector<16x256xf32> -> vector<16x256xf32>
    %9 = arith.truncf %8 : vector<16x256xf32> to vector<16x256xbf16>
    %c0_10 = arith.constant 0 : index
    %c0_11 = arith.constant 0 : index
    %10 = vector.load %arg5[%c0_10, %c0_11] : memref<17x16xbf16, #tpu.memory_space<vmem>>, vector<17x16xbf16>
    %cst_12 = arith.constant dense<0.000000e+00> : vector<256x16xf32>
    %11 = tpu.matmul %3, %10, %cst_12 {dimension_numbers = #tpu.dot_dimension_numbers<[1], [0], [0], [1], [0, 0, 1, 1], [], []>} : vector<256x17xbf16>, vector<17x16xbf16>, vector<256x16xf32> -> vector<256x16xf32>
    %12 = arith.truncf %11 : vector<256x16xf32> to vector<256x16xbf16>
    %c0_13 = arith.constant 0 : index
    %c0_14 = arith.constant 0 : index
    %13 = vector.load %arg6[%c0_13, %c0_14] : memref<17x16xbf16, #tpu.memory_space<vmem>>, vector<17x16xbf16>
    %cst_15 = arith.constant dense<0.000000e+00> : vector<256x16xf32>
    %14 = tpu.matmul %3, %13, %cst_15 {dimension_numbers = #tpu.dot_dimension_numbers<[1], [0], [0], [1], [0, 0, 1, 1], [], []>} : vector<256x17xbf16>, vector<17x16xbf16>, vector<256x16xf32> -> vector<256x16xf32>
    %15 = arith.truncf %14 : vector<256x16xf32> to vector<256x16xbf16>
    %16 = vector.extract_strided_slice %6 {offsets = [0, 0], sizes = [8, 256], strides = [1, 1]} : vector<16x256xbf16> to vector<8x256xbf16>
    %17 = vector.extract_strided_slice %9 {offsets = [0, 0], sizes = [8, 256], strides = [1, 1]} : vector<16x256xbf16> to vector<8x256xbf16>
    %18 = vector.extract_strided_slice %12 {offsets = [0, 0], sizes = [256, 8], strides = [1, 1]} : vector<256x16xbf16> to vector<256x8xbf16>
    %19 = vector.extract_strided_slice %15 {offsets = [0, 0], sizes = [256, 8], strides = [1, 1]} : vector<256x16xbf16> to vector<256x8xbf16>
    %c0_16 = arith.constant 0 : index
    %c0_17 = arith.constant 0 : index
    %c0_18 = arith.constant 0 : index
    %20 = vector.load %arg7[%c0_16, %c0_17, %c0_18] : memref<2x256x8xbf16, #tpu.memory_space<vmem>>, vector<1x256x8xbf16>
    %21 = vector.shape_cast %20 : vector<1x256x8xbf16> to vector<256x8xbf16>
    %cst_19 = arith.constant dense<0.000000e+00> : vector<256x256xf32>
    %22 = tpu.matmul %18, %17, %cst_19 {dimension_numbers = #tpu.dot_dimension_numbers<[1], [0], [0], [1], [0, 0, 1, 1], [], []>} : vector<256x8xbf16>, vector<8x256xbf16>, vector<256x256xf32> -> vector<256x256xf32>
    %cst_20 = arith.constant dense<0.000000e+00> : vector<256x256xf32>
    %23 = tpu.matmul %21, %16, %cst_20 {dimension_numbers = #tpu.dot_dimension_numbers<[1], [0], [0], [1], [0, 0, 1, 1], [], []>} : vector<256x8xbf16>, vector<8x256xbf16>, vector<256x256xf32> -> vector<256x256xf32>
    %24 = arith.addf %22, %23 : vector<256x256xf32>
    %cst_21 = arith.constant dense<0xFF800000> : vector<256xf32>
    %25 = vector.multi_reduction <maximumf>, %24, %cst_21 [1] : vector<256x256xf32> to vector<256xf32>
    %26 = vector.shape_cast %25 : vector<256xf32> to vector<256x1xf32>
    %27 = vector.broadcast %26 : vector<256x1xf32> to vector<256x256xf32>
    %28 = arith.subf %24, %27 : vector<256x256xf32>
    %29 = math.exp %28 : vector<256x256xf32>
    %cst_22 = arith.constant dense<0.000000e+00> : vector<256xf32>
    %30 = vector.multi_reduction <add>, %29, %cst_22 [1] : vector<256x256xf32> to vector<256xf32>
    %31 = vector.shape_cast %30 : vector<256xf32> to vector<256x1xf32>
    %32 = tpu.reciprocal %31 {approx = true} : vector<256x1xf32> -> vector<256x1xf32>
    %33 = vector.broadcast %32 : vector<256x1xf32> to vector<256x256xf32>
    %34 = arith.mulf %29, %33 : vector<256x256xf32>
    %35 = arith.truncf %34 : vector<256x256xf32> to vector<256x256xbf16>
    %cst_23 = arith.constant dense<0.000000e+00> : vector<256x8xf32>
    %36 = tpu.matmul %35, %19, %cst_23 {dimension_numbers = #tpu.dot_dimension_numbers<[1], [0], [0], [1], [0, 0, 1, 1], [], []>} : vector<256x256xbf16>, vector<256x8xbf16>, vector<256x8xf32> -> vector<256x8xf32>
    %37 = vector.extract_strided_slice %6 {offsets = [8, 0], sizes = [8, 256], strides = [1, 1]} : vector<16x256xbf16> to vector<8x256xbf16>
    %38 = vector.extract_strided_slice %9 {offsets = [8, 0], sizes = [8, 256], strides = [1, 1]} : vector<16x256xbf16> to vector<8x256xbf16>
    %39 = vector.extract_strided_slice %12 {offsets = [0, 8], sizes = [256, 8], strides = [1, 1]} : vector<256x16xbf16> to vector<256x8xbf16>
    %40 = vector.extract_strided_slice %15 {offsets = [0, 8], sizes = [256, 8], strides = [1, 1]} : vector<256x16xbf16> to vector<256x8xbf16>
    %c1 = arith.constant 1 : index
    %c0_24 = arith.constant 0 : index
    %c0_25 = arith.constant 0 : index
    %41 = vector.load %arg7[%c1, %c0_24, %c0_25] : memref<2x256x8xbf16, #tpu.memory_space<vmem>>, vector<1x256x8xbf16>
    %42 = vector.shape_cast %41 : vector<1x256x8xbf16> to vector<256x8xbf16>
    %cst_26 = arith.constant dense<0.000000e+00> : vector<256x256xf32>
    %43 = tpu.matmul %39, %38, %cst_26 {dimension_numbers = #tpu.dot_dimension_numbers<[1], [0], [0], [1], [0, 0, 1, 1], [], []>} : vector<256x8xbf16>, vector<8x256xbf16>, vector<256x256xf32> -> vector<256x256xf32>
    %cst_27 = arith.constant dense<0.000000e+00> : vector<256x256xf32>
    %44 = tpu.matmul %42, %37, %cst_27 {dimension_numbers = #tpu.dot_dimension_numbers<[1], [0], [0], [1], [0, 0, 1, 1], [], []>} : vector<256x8xbf16>, vector<8x256xbf16>, vector<256x256xf32> -> vector<256x256xf32>
    %45 = arith.addf %43, %44 : vector<256x256xf32>
    %cst_28 = arith.constant dense<0xFF800000> : vector<256xf32>
    %46 = vector.multi_reduction <maximumf>, %45, %cst_28 [1] : vector<256x256xf32> to vector<256xf32>
    %47 = vector.shape_cast %46 : vector<256xf32> to vector<256x1xf32>
    %48 = vector.broadcast %47 : vector<256x1xf32> to vector<256x256xf32>
    %49 = arith.subf %45, %48 : vector<256x256xf32>
    %50 = math.exp %49 : vector<256x256xf32>
    %cst_29 = arith.constant dense<0.000000e+00> : vector<256xf32>
    %51 = vector.multi_reduction <add>, %50, %cst_29 [1] : vector<256x256xf32> to vector<256xf32>
    %52 = vector.shape_cast %51 : vector<256xf32> to vector<256x1xf32>
    %53 = tpu.reciprocal %52 {approx = true} : vector<256x1xf32> -> vector<256x1xf32>
    %54 = vector.broadcast %53 : vector<256x1xf32> to vector<256x256xf32>
    %55 = arith.mulf %50, %54 : vector<256x256xf32>
    %56 = arith.truncf %55 : vector<256x256xf32> to vector<256x256xbf16>
    %cst_30 = arith.constant dense<0.000000e+00> : vector<256x8xf32>
    %57 = tpu.matmul %56, %40, %cst_30 {dimension_numbers = #tpu.dot_dimension_numbers<[1], [0], [0], [1], [0, 0, 1, 1], [], []>} : vector<256x256xbf16>, vector<256x8xbf16>, vector<256x8xf32> -> vector<256x8xf32>
    %58 = tpu.concatenate %36, %57 in 1 : vector<256x8xf32>, vector<256x8xf32> -> vector<256x16xf32>
    %c0_31 = arith.constant 0 : index
    %c0_32 = arith.constant 0 : index
    %c0_33 = arith.constant 0 : index
    %59 = vector.load %arg8[%c0_31, %c0_32, %c0_33] : memref<1x256x16xf32, #tpu.memory_space<vmem>>, vector<1x256x16xf32>
    %60 = vector.shape_cast %59 : vector<1x256x16xf32> to vector<256x16xf32>
    %61 = vector.shape_cast %58 : vector<256x16xf32> to vector<1x256x16xf32>
    tpu.vector_store %arg8[%c0_31, %c0_32, %c0_33], %61 {strides = array<i32>} : memref<1x256x16xf32, #tpu.memory_space<vmem>>, vector<1x256x16xf32>,
    return
  }
  func.func @transform_0(%arg0: i32) -> (i32, i32, i32) {
    %c0_i32 = arith.constant 0 : i32
    %c0_i32_0 = arith.constant 0 : i32
    %c0_i32_1 = arith.constant 0 : i32
    return %arg0, %c0_i32, %c0_i32_0 : i32, i32, i32
  }
  func.func @transform_1(%arg0: i32) -> (i32, i32, i32) {
    %c0_i32 = arith.constant 0 : i32
    %c0_i32_0 = arith.constant 0 : i32
    %c0_i32_1 = arith.constant 0 : i32
    return %arg0, %c0_i32, %c0_i32_0 : i32, i32, i32
  }
  func.func @transform_2(%arg0: i32) -> (i32, i32) {
    %c0_i32 = arith.constant 0 : i32
    %c0_i32_0 = arith.constant 0 : i32
    %c0_i32_1 = arith.constant 0 : i32
    return %c0_i32, %c0_i32_0 : i32, i32
  }
  func.func @transform_3(%arg0: i32) -> (i32, i32) {
    %c0_i32 = arith.constant 0 : i32
    %c0_i32_0 = arith.constant 0 : i32
    %c0_i32_1 = arith.constant 0 : i32
    return %c0_i32, %c0_i32_0 : i32, i32
  }
  func.func @transform_4(%arg0: i32) -> (i32, i32) {
    %c0_i32 = arith.constant 0 : i32
    %c0_i32_0 = arith.constant 0 : i32
    %c0_i32_1 = arith.constant 0 : i32
    return %c0_i32, %c0_i32_0 : i32, i32
  }
  func.func @transform_5(%arg0: i32) -> (i32, i32) {
    %c0_i32 = arith.constant 0 : i32
    %c0_i32_0 = arith.constant 0 : i32
    %c0_i32_1 = arith.constant 0 : i32
    return %c0_i32, %c0_i32_0 : i32, i32
  }
  func.func @transform_6(%arg0: i32) -> (i32, i32, i32) {
    %c0_i32 = arith.constant 0 : i32
    %c0_i32_0 = arith.constant 0 : i32
    %c0_i32_1 = arith.constant 0 : i32
    %c0_i32_2 = arith.constant 0 : i32
    return %c0_i32, %c0_i32_0, %c0_i32_1 : i32, i32, i32
  }
  func.func @transform_7(%arg0: i32) -> (i32, i32, i32) {
    %c0_i32 = arith.constant 0 : i32
    %c0_i32_0 = arith.constant 0 : i32
    %c0_i32_1 = arith.constant 0 : i32
    return %arg0, %c0_i32, %c0_i32_0 : i32, i32, i32
  }
}

</mosaic_0001>

<llo_original>
// kernel: tpu_custom_call.1
$region0: #{tpu_custom_call.1}
  #allocation0 [shape = 'u32[]', space=smem, size = 0x4, offset = 0x4, fixed_abs, tag = 'smem constant byte address 0x4 - core index']
  #allocation1 [shape = 'u32[144,128]{1,0:T(1,128)}', space=vmem, size = 0x12000, scoped, tag = 'internal scratch']
  %s0 = inlined_call_operand.vmem [shape: bf16[2,17,256], index: 0, kind: input, shape index: {}]
  %s1 = inlined_call_operand.vmem [shape: bf16[2,256,17], index: 1, kind: input, shape index: {}]
  %s2 = inlined_call_operand.vmem [shape: bf16[16,17], index: 2, kind: input, shape index: {}]
  %s3 = inlined_call_operand.vmem [shape: bf16[16,17], index: 3, kind: input, shape index: {}]
  %s4 = inlined_call_operand.vmem [shape: bf16[17,16], index: 4, kind: input, shape index: {}]
  %s5 = inlined_call_operand.vmem [shape: bf16[17,16], index: 5, kind: input, shape index: {}]
  %s6 = inlined_call_operand.vmem [shape: bf16[2,256,8], index: 6, kind: input, shape index: {}]
  %s7 = inlined_call_operand.vmem [shape: f32[2,256,16], index: 7, kind: output, shape index: {}]
  %s8 = sld [smem:[#allocation0]]
  $region61: #{tpu_custom_call.1} parent=0
    _
  %s10 = ssub.s32 1, %s8
  %s11 = scalar_select 0, %s10, %s8
  loop: start=0, step=1, limit=4
  $region2: #{tpu_custom_call.1} parent=0 // loop_pre_header
    _
  $region3: #{tpu_custom_call.1} parent=0 // loop_header
    %s13 = sphi 0, %s17
    %p14 = scmp.ge.s32.totalorder %s13, 4
    %s23 = sphi 0, %s25
    %s26 = sphi 0, %s23
    %s27 = sphi 0, %s26
    %s43 = sphi 0, %s27
    %s49 = sphi 0, %s51
    %s52 = sphi 0, %s49
    %s53 = sphi 0, %s52
    %s69 = sphi 0, %s53
    %s73 = sphi 0, %s73
    %s75 = sphi 0, %s73
    %s76 = sphi 0, %s75
    %s90 = sphi 0, %s76
    %s94 = sphi 0, %s94
    %s96 = sphi 0, %s94
    %s97 = sphi 0, %s96
    %s111 = sphi 0, %s97
    %s115 = sphi 0, %s115
    %s117 = sphi 0, %s115
    %s118 = sphi 0, %s117
    %s132 = sphi 0, %s118
    %s136 = sphi 0, %s136
    %s138 = sphi 0, %s136
    %s139 = sphi 0, %s138
    %s153 = sphi 0, %s139
    %s157 = sphi 0, %s157
    %s159 = sphi 0, %s157
    %s160 = sphi 0, %s159
    %s174 = sphi 0, %s160
    %s180 = sphi 0, %s182
    %s183 = sphi 0, %s180
    %s184 = sphi 0, %s183
    %s200 = sphi 0, %s184
  $region4: #{tpu_custom_call.1} parent=0 // loop_header_branch
    %16 = sbr.rel (%p14) target = $region8
  $region5: #{tpu_custom_call.1} parent=0 // loop_body
    %s18 = ssub.s32 %s13, 1
    %s19 = ssub.s32 %s13, 2
    %s20 = sadd.s32 %s13, 1
    %s21 = ssub.s32 %s13, %s20
    %p22 = scmp.eq.s32.totalorder %s21, 0
    %s24 = sadd.s32 %s23, 1
    %s25 = scalar_select %p22, %s23, %s24
    %p28 = pneg %p22
    %p29 = scmp.eq.s32.totalorder %s13, 1
    %p30 = por %p28, %p29
    %p31 = scmp.ne.s32.totalorder %s23, %s26
    %p32 = scmp.eq.s32.totalorder %s13, 0
    %p33 = por %p31, %p32
    %p34 = scmp.ne.s32.totalorder %s23, %s26
    %p35 = scmp.eq.s32.totalorder %s18, 1
    %p36 = por %p34, %p35
    %p37 = scmp.ne.s32.totalorder %s26, %s27
    %p38 = scmp.eq.s32.totalorder %s18, 0
    %p39 = por %p37, %p38
    %p40 = scmp.ne.s32.totalorder %s26, %s27
    %p41 = scmp.eq.s32.totalorder %s19, 1
    %p42 = por %p40, %p41
    %p44 = scmp.ne.s32.totalorder %s27, %s43
    %p45 = scmp.eq.s32.totalorder %s19, 0
    %p46 = por %p44, %p45
    %s47 = ssub.s32 %s13, %s20
    %p48 = scmp.eq.s32.totalorder %s47, 0
    %s50 = sadd.s32 %s49, 1
    %s51 = scalar_select %p48, %s49, %s50
    %p54 = pneg %p48
    %p55 = scmp.eq.s32.totalorder %s13, 1
    %p56 = por %p54, %p55
    %p57 = scmp.ne.s32.totalorder %s49, %s52
    %p58 = scmp.eq.s32.totalorder %s13, 0
    %p59 = por %p57, %p58
    %p60 = scmp.ne.s32.totalorder %s49, %s52
    %p61 = scmp.eq.s32.totalorder %s18, 1
    %p62 = por %p60, %p61
    %p63 = scmp.ne.s32.totalorder %s52, %s53
    %p64 = scmp.eq.s32.totalorder %s18, 0
    %p65 = por %p63, %p64
    %p66 = scmp.ne.s32.totalorder %s52, %s53
    %p67 = scmp.eq.s32.totalorder %s19, 1
    %p68 = por %p66, %p67
    %p70 = scmp.ne.s32.totalorder %s53, %s69
    %p71 = scmp.eq.s32.totalorder %s19, 0
    %p72 = por %p70, %p71
    %s74 = sadd.s32 %s73, 1
    %p77 = scmp.eq.s32.totalorder %s13, 1
    %p78 = scmp.ne.s32.totalorder %s73, %s75
    %p79 = scmp.eq.s32.totalorder %s13, 0
    %p80 = por %p78, %p79
    %p81 = scmp.ne.s32.totalorder %s73, %s75
    %p82 = scmp.eq.s32.totalorder %s18, 1
    %p83 = por %p81, %p82
    %p84 = scmp.ne.s32.totalorder %s75, %s76
    %p85 = scmp.eq.s32.totalorder %s18, 0
    %p86 = por %p84, %p85
    %p87 = scmp.ne.s32.totalorder %s75, %s76
    %p88 = scmp.eq.s32.totalorder %s19, 1
    %p89 = por %p87, %p88
    %p91 = scmp.ne.s32.totalorder %s76, %s90
    %p92 = scmp.eq.s32.totalorder %s19, 0
    %p93 = por %p91, %p92
    %s95 = sadd.s32 %s94, 1
    %p98 = scmp.eq.s32.totalorder %s13, 1
    %p99 = scmp.ne.s32.totalorder %s94, %s96
    %p100 = scmp.eq.s32.totalorder %s13, 0
    %p101 = por %p99, %p100
    %p102 = scmp.ne.s32.totalorder %s94, %s96
    %p103 = scmp.eq.s32.totalorder %s18, 1
    %p104 = por %p102, %p103
    %p105 = scmp.ne.s32.totalorder %s96, %s97
    %p106 = scmp.eq.s32.totalorder %s18, 0
    %p107 = por %p105, %p106
    %p108 = scmp.ne.s32.totalorder %s96, %s97
    %p109 = scmp.eq.s32.totalorder %s19, 1
    %p110 = por %p108, %p109
    %p112 = scmp.ne.s32.totalorder %s97, %s111
    %p113 = scmp.eq.s32.totalorder %s19, 0
    %p114 = por %p112, %p113
    %s116 = sadd.s32 %s115, 1
    %p119 = scmp.eq.s32.totalorder %s13, 1
    %p120 = scmp.ne.s32.totalorder %s115, %s117
    %p121 = scmp.eq.s32.totalorder %s13, 0
    %p122 = por %p120, %p121
    %p123 = scmp.ne.s32.totalorder %s115, %s117
    %p124 = scmp.eq.s32.totalorder %s18, 1
    %p125 = por %p123, %p124
    %p126 = scmp.ne.s32.totalorder %s117, %s118
    %p127 = scmp.eq.s32.totalorder %s18, 0
    %p128 = por %p126, %p127
    %p129 = scmp.ne.s32.totalorder %s117, %s118
    %p130 = scmp.eq.s32.totalorder %s19, 1
    %p131 = por %p129, %p130
    %p133 = scmp.ne.s32.totalorder %s118, %s132
    %p134 = scmp.eq.s32.totalorder %s19, 0
    %p135 = por %p133, %p134
    %s137 = sadd.s32 %s136, 1
    %p140 = scmp.eq.s32.totalorder %s13, 1
    %p141 = scmp.ne.s32.totalorder %s136, %s138
    %p142 = scmp.eq.s32.totalorder %s13, 0
    %p143 = por %p141, %p142
    %p144 = scmp.ne.s32.totalorder %s136, %s138
    %p145 = scmp.eq.s32.totalorder %s18, 1
    %p146 = por %p144, %p145
    %p147 = scmp.ne.s32.totalorder %s138, %s139
    %p148 = scmp.eq.s32.totalorder %s18, 0
    %p149 = por %p147, %p148
    %p150 = scmp.ne.s32.totalorder %s138, %s139
    %p151 = scmp.eq.s32.totalorder %s19, 1
    %p152 = por %p150, %p151
    %p154 = scmp.ne.s32.totalorder %s139, %s153
    %p155 = scmp.eq.s32.totalorder %s19, 0
    %p156 = por %p154, %p155
    %s158 = sadd.s32 %s157, 1
    %p161 = scmp.eq.s32.totalorder %s13, 1
    %p162 = scmp.ne.s32.totalorder %s157, %s159
    %p163 = scmp.eq.s32.totalorder %s13, 0
    %p164 = por %p162, %p163
    %p165 = scmp.ne.s32.totalorder %s157, %s159
    %p166 = scmp.eq.s32.totalorder %s18, 1
    %p167 = por %p165, %p166
    %p168 = scmp.ne.s32.totalorder %s159, %s160
    %p169 = scmp.eq.s32.totalorder %s18, 0
    %p170 = por %p168, %p169
    %p171 = scmp.ne.s32.totalorder %s159, %s160
    %p172 = scmp.eq.s32.totalorder %s19, 1
    %p173 = por %p171, %p172
    %p175 = scmp.ne.s32.totalorder %s160, %s174
    %p176 = scmp.eq.s32.totalorder %s19, 0
    %p177 = por %p175, %p176
    %s178 = ssub.s32 %s13, %s20
    %p179 = scmp.eq.s32.totalorder %s178, 0
    %s181 = sadd.s32 %s180, 1
    %s182 = scalar_select %p179, %s180, %s181
    %p185 = pneg %p179
    %p186 = scmp.eq.s32.totalorder %s13, 1
    %p187 = por %p185, %p186
    %p188 = scmp.ne.s32.totalorder %s180, %s183
    %p189 = scmp.eq.s32.totalorder %s13, 0
    %p190 = por %p188, %p189
    %p191 = scmp.ne.s32.totalorder %s180, %s183
    %p192 = scmp.eq.s32.totalorder %s18, 1
    %p193 = por %p191, %p192
    %p194 = scmp.ne.s32.totalorder %s183, %s184
    %p195 = scmp.eq.s32.totalorder %s18, 0
    %p196 = por %p194, %p195
    %p197 = scmp.ne.s32.totalorder %s183, %s184
    %p198 = scmp.eq.s32.totalorder %s19, 1
    %p199 = por %p197, %p198
    %p201 = scmp.ne.s32.totalorder %s184, %s200
    %p202 = scmp.eq.s32.totalorder %s19, 0
    %p203 = por %p201, %p202
    %p204 = scmp.le.s32.totalorder 1, %s13
    %p205 = scmp.lt.s32.totalorder %s13, 3
    %p206 = pnand %p204, %p205
    %p207 = pneg %p206
    // Predicated region
    $region9: #{tpu_custom_call.1} parent=5 // pred_check
      _
    $region10: #{tpu_custom_call.1} parent=5 // pred_check_branch
      %209 = sbr.rel (%p206) target = $region12
    $region11: #{tpu_custom_call.1} parent=5 // pred_region
      %s210 = ssub.s32 %s13, 1
      // Predicated region
      $region13: #{tpu_custom_call.1} parent=11 // pred_check
        %p211 = pneg %p86
      $region14: #{tpu_custom_call.1} parent=11 // pred_check_branch
        %213 = sbr.rel (%p211) target = $region16
      $region15: #{tpu_custom_call.1} parent=11 // pred_region
        _
      $region16: #{tpu_custom_call.1} parent=11 // pred_fallthru
        _
      // Predicated region
      $region17: #{tpu_custom_call.1} parent=11 // pred_check
        %p214 = pneg %p107
      $region18: #{tpu_custom_call.1} parent=11 // pred_check_branch
        %216 = sbr.rel (%p214) target = $region20
      $region19: #{tpu_custom_call.1} parent=11 // pred_region
        _
      $region20: #{tpu_custom_call.1} parent=11 // pred_fallthru
        _
      // Predicated region
      $region21: #{tpu_custom_call.1} parent=11 // pred_check
        %p217 = pneg %p128
      $region22: #{tpu_custom_call.1} parent=11 // pred_check_branch
        %219 = sbr.rel (%p217) target = $region24
      $region23: #{tpu_custom_call.1} parent=11 // pred_region
        _
      $region24: #{tpu_custom_call.1} parent=11 // pred_fallthru
        _
      // Predicated region
      $region25: #{tpu_custom_call.1} parent=11 // pred_check
        %p220 = pneg %p149
      $region26: #{tpu_custom_call.1} parent=11 // pred_check_branch
        %222 = sbr.rel (%p220) target = $region28
      $region27: #{tpu_custom_call.1} parent=11 // pred_region
        _
      $region28: #{tpu_custom_call.1} parent=11 // pred_fallthru
        _
      // Predicated region
      $region29: #{tpu_custom_call.1} parent=11 // pred_check
        %p223 = pneg %p170
      $region30: #{tpu_custom_call.1} parent=11 // pred_check_branch
        %225 = sbr.rel (%p223) target = $region32
      $region31: #{tpu_custom_call.1} parent=11 // pred_region
        _
      $region32: #{tpu_custom_call.1} parent=11 // pred_fallthru
        _
    $region12: #{tpu_custom_call.1} parent=5 // pred_fallthru
      _
    %p226 = scmp.lt.s32.totalorder %s13, 2
    // Predicated region
    $region33: #{tpu_custom_call.1} parent=5 // pred_check
      %p227 = pneg %p226
    $region34: #{tpu_custom_call.1} parent=5 // pred_check_branch
      %229 = sbr.rel (%p227) target = $region36
    $region35: #{tpu_custom_call.1} parent=5 // pred_region
      // Predicated region
      $region37: #{tpu_custom_call.1} parent=35 // pred_check
        %p230 = pneg %p33
      $region38: #{tpu_custom_call.1} parent=35 // pred_check_branch
        %232 = sbr.rel (%p230) target = $region40
      $region39: #{tpu_custom_call.1} parent=35 // pred_region
        %p233 = scmp.lt.s32.totalorder %s13, 1
        %s234 = scalar_select %p233, %s13, 1
        %s235 = smul.addr %s234, 6
        %s236 = smul.addr %s235, 4
        %s237 = scalar_lea.vmem %s0, %s236
      $region40: #{tpu_custom_call.1} parent=35 // pred_fallthru
        _
      // Predicated region
      $region41: #{tpu_custom_call.1} parent=35 // pred_check
        %p238 = pneg %p59
      $region42: #{tpu_custom_call.1} parent=35 // pred_check_branch
        %240 = sbr.rel (%p238) target = $region44
      $region43: #{tpu_custom_call.1} parent=35 // pred_region
        %p241 = scmp.lt.s32.totalorder %s13, 1
        %s242 = scalar_select %p241, %s13, 1
        %s243 = smul.addr %s242, 32
        %s244 = smul.addr %s243, 4
        %s245 = scalar_lea.vmem %s1, %s244
      $region44: #{tpu_custom_call.1} parent=35 // pred_fallthru
        _
    $region36: #{tpu_custom_call.1} parent=5 // pred_fallthru
      _
    %p246 = scmp.le.s32.totalorder 1, %s13
    %p247 = scmp.lt.s32.totalorder %s13, 3
    %p248 = pnand %p246, %p247
    %p249 = pneg %p248
    // Predicated region
    $region45: #{tpu_custom_call.1} parent=5 // pred_check
      _
    $region46: #{tpu_custom_call.1} parent=5 // pred_check_branch
      %251 = sbr.rel (%p248) target = $region48
    $region47: #{tpu_custom_call.1} parent=5 // pred_region
      %s252 = ssub.s32 %s13, 1
      %p253 = scmp.lt.s32.totalorder %s18, 1
      %s254 = scalar_select %p253, %s18, 1
      %s255 = smul.addr %s254, 6
      %s256 = smul.addr %s255, 4
      %s257 = scalar_lea.vmem %s0, %s256
      %p258 = pneg %p39
      %p259 = pneg %p36
      %p260 = scmp.lt.s32.totalorder %s18, 1
      %s261 = scalar_select %p260, %s18, 1
      %s262 = smul.addr %s261, 32
      %s263 = smul.addr %s262, 4
      %s264 = scalar_lea.vmem %s1, %s263
      %p265 = pneg %p65
      %p266 = pneg %p62
      %p267 = pneg %p86
      %p268 = pneg %p83
      %p269 = pneg %p107
      %p270 = pneg %p104
      %p271 = pneg %p128
      %p272 = pneg %p125
      %p273 = pneg %p149
      %p274 = pneg %p146
      %p275 = pneg %p170
      %p276 = pneg %p167
      %p277 = pneg %p196
      %p278 = pneg %p193
      %p279 = scmp.lt.s32.totalorder %s18, 1
      %s280 = scalar_select %p279, %s18, 1
      %s281 = smul.addr %s280, 32
      %s282 = smul.addr %s281, 8
      %s283 = scalar_lea.vmem %s7, %s282
      %p284 = scmp.lt.s32.totalorder %s18, 1
      %s285 = scalar_select %p284, %s18, 1
      %s286 = smul.addr %s285, 6
      %s287 = smul.addr %s286, 4
      %s288 = scalar_lea.vmem %s0, %s287
      %p289 = scmp.lt.s32.totalorder %s18, 1
      %s290 = scalar_select %p289, %s18, 1
      %s291 = smul.addr %s290, 32
      %s292 = smul.addr %s291, 4
      %s293 = scalar_lea.vmem %s1, %s292
      %p294 = scmp.lt.s32.totalorder %s18, 1
      %s295 = scalar_select %p294, %s18, 1
      %s296 = smul.addr %s295, 32
      %s297 = smul.addr %s296, 8
      %s298 = scalar_lea.vmem %s7, %s297
      %v300 = vld [vmem:[%s288] sm:$0xff]
      %v301 = vld [vmem:[%s288 + $0x8] sm:$0xff]
      %v302 = vld [vmem:[%s288 + $0x10] sm:$0x11]
      %v303 = vld [vmem:[%s293] sm:$0xf]
      %v304 = vld [vmem:[%s293 + $0x4] sm:$0xf]
      %v305 = vld [vmem:[%s293 + $0x8] sm:$0xf]
      %v306 = vld [vmem:[%s293 + $0xc] sm:$0xf]
      %v307 = vld [vmem:[%s293 + $0x10] sm:$0xf]
      %v308 = vld [vmem:[%s293 + $0x14] sm:$0xf]
      %v309 = vld [vmem:[%s293 + $0x18] sm:$0xf]
      %v310 = vld [vmem:[%s293 + $0x1c] sm:$0xf]
      %v311 = vld [vmem:[%s293 + $0x20] sm:$0xf]
      %v312 = vld [vmem:[%s293 + $0x24] sm:$0xf]
      %v313 = vld [vmem:[%s293 + $0x28] sm:$0xf]
      %v314 = vld [vmem:[%s293 + $0x2c] sm:$0xf]
      %v315 = vld [vmem:[%s293 + $0x30] sm:$0xf]
      %v316 = vld [vmem:[%s293 + $0x34] sm:$0xf]
      %v317 = vld [vmem:[%s293 + $0x38] sm:$0xf]
      %v318 = vld [vmem:[%s293 + $0x3c] sm:$0xf]
      %v319 = vld [vmem:[%s293 + $0x40] sm:$0xf]
      %v320 = vld [vmem:[%s293 + $0x44] sm:$0xf]
      %v321 = vld [vmem:[%s293 + $0x48] sm:$0xf]
      %v322 = vld [vmem:[%s293 + $0x4c] sm:$0xf]
      %v323 = vld [vmem:[%s293 + $0x50] sm:$0xf]
      %v324 = vld [vmem:[%s293 + $0x54] sm:$0xf]
      %v325 = vld [vmem:[%s293 + $0x58] sm:$0xf]
      %v326 = vld [vmem:[%s293 + $0x5c] sm:$0xf]
      %v327 = vld [vmem:[%s293 + $0x60] sm:$0xf]
      %v328 = vld [vmem:[%s293 + $0x64] sm:$0xf]
      %v329 = vld [vmem:[%s293 + $0x68] sm:$0xf]
      %v330 = vld [vmem:[%s293 + $0x6c] sm:$0xf]
      %v331 = vld [vmem:[%s293 + $0x70] sm:$0xf]
      %v332 = vld [vmem:[%s293 + $0x74] sm:$0xf]
      %v333 = vld [vmem:[%s293 + $0x78] sm:$0xf]
      %v334 = vld [vmem:[%s293 + $0x7c] sm:$0xf]
      %v335 = vld [vmem:[%s2] sm:$0xf]
      %v336 = vld [vmem:[%s2 + $0x4] sm:$0xf]
      %v339 = vunpack.c.l.b16 %v335
      %v340 = vunpack.c.l.b16 %v336
      %v341 = vpack.c.b16 %v340, %v339
      %v345 = vunpack.c.l.b16 %v300
      %v346 = vunpack.c.h.b16 %v300
      %v347 = vunpack.c.l.b16 %v301
      %v348 = vunpack.c.h.b16 %v301
      %v349 = vunpack.c.l.b16 %v302
      %v350 = vunpack.c.h.b16 %v302
      %v351 = vpack.c.b16 %v347, %v345
      %v352 = vpack.c.b16 %v348, %v346
      %v353 = vpack.c.b16 %v349, %v349
      %v354 = vpack.c.b16 %v350, %v350
      %vm357 = vcmask 138240
      %v359 = vsel %vm357, %v341, 0
      %vm361 = vcmask 1040384
      %v362 = vsel 0, 4294967295, 65535
      %v363 = vsel %vm361, %v362, 0
      %v365 = vand.u32 %v353, %v363
      %v368 = vand.u32 %v354, %v363
      %370 = vmatprep.subr.bf16.mxu0 %v352
      %371 = vmatpush1.bf16.msra.mxu0 %v351
      %372 = vmatprep.subr.bf16.mxu0 %v368
      %373 = vmatpush1.bf16.msra.mxu0 %v365
      %374 = vmatprep.subr.bf16.mxu0 0
      %375 = vmatpush1.bf16.msra.mxu0 0
      %376 = vmatprep.subr.bf16.mxu0 0
      %377 = vmatpush1.bf16.msra.mxu0 0
      %378 = vmatprep.subr.bf16.mxu0 0
      %379 = vmatpush1.bf16.msra.mxu0 0
      %380 = vmatprep.subr.bf16.mxu0 0
      %381 = vmatpush1.bf16.msra.mxu0 0
      %382 = vmatprep.subr.bf16.mxu0 0
      %383 = vmatpush1.bf16.msra.mxu0 0
      %384 = vmatprep.subr.bf16.mxu0 0
      %385 = vmatpush1.bf16.msra.mxu0 0
      %386 = vmatprep.subr.bf16.mxu0 0
      %387 = vmatpush1.bf16.msra.mxu0 0
      %388 = vmatprep.subr.bf16.mxu0 0
      %389 = vmatpush1.bf16.msra.mxu0 0
      %390 = vmatprep.subr.bf16.mxu0 0
      %391 = vmatpush1.bf16.msra.mxu0 0
      %392 = vmatprep.subr.bf16.mxu0 0
      %393 = vmatpush1.bf16.msra.mxu0 0
      %394 = vmatprep.subr.bf16.mxu0 0
      %395 = vmatpush1.bf16.msra.mxu0 0
      %396 = vmatprep.subr.bf16.mxu0 0
      %397 = vmatpush1.bf16.msra.mxu0 0
      %398 = vmatprep.subr.bf16.mxu0 0
      %399 = vmatpush1.bf16.msra.mxu0 0
      %400 = vmatprep.subr.bf16.mxu0 0
      %401 = vmatpush1.bf16.msra.mxu0 0
      %402 = vmatprep.mubr.bf16.mxu0 0
      %403 = vmatmul.mubr.bf16.gmra.mrb[0].mxu0 %v359
      %v404 = vpop.f32.mrb[0].mxu0
      %v405 = vadd.f32 0.0, %v404
      %v406 = vpop.f32.mrb[0].mxu0
      %v407 = vadd.f32 0.0, %v406
      %v408 = vpop.f32.mrb[0].mxu0
      %v409 = vadd.f32 0.0, %v408
      %v410 = vpop.f32.mrb[0].mxu0
      %v411 = vadd.f32 0.0, %v410
      %412 = vdwg.mxu0
      %v413 = vpack.c.bf16 %v409, %v405
      %v414 = vpack.c.bf16 %v411, %v407
      %v415 = vld [vmem:[%s3] sm:$0xf]
      %v416 = vld [vmem:[%s3 + $0x4] sm:$0xf]
      %v419 = vunpack.c.l.b16 %v415
      %v420 = vunpack.c.l.b16 %v416
      %v421 = vpack.c.b16 %v420, %v419
      %v423 = vsel %vm357, %v421, 0
      %425 = vmatprep.subr.bf16.mxu0 %v352
      %426 = vmatpush1.bf16.msra.mxu0 %v351
      %427 = vmatprep.subr.bf16.mxu0 %v368
      %428 = vmatpush1.bf16.msra.mxu0 %v365
      %429 = vmatprep.subr.bf16.mxu0 0
      %430 = vmatpush1.bf16.msra.mxu0 0
      %431 = vmatprep.subr.bf16.mxu0 0
      %432 = vmatpush1.bf16.msra.mxu0 0
      %433 = vmatprep.subr.bf16.mxu0 0
      %434 = vmatpush1.bf16.msra.mxu0 0
      %435 = vmatprep.subr.bf16.mxu0 0
      %436 = vmatpush1.bf16.msra.mxu0 0
      %437 = vmatprep.subr.bf16.mxu0 0
      %438 = vmatpush1.bf16.msra.mxu0 0
      %439 = vmatprep.subr.bf16.mxu0 0
      %440 = vmatpush1.bf16.msra.mxu0 0
      %441 = vmatprep.subr.bf16.mxu0 0
      %442 = vmatpush1.bf16.msra.mxu0 0
      %443 = vmatprep.subr.bf16.mxu0 0
      %444 = vmatpush1.bf16.msra.mxu0 0
      %445 = vmatprep.subr.bf16.mxu0 0
      %446 = vmatpush1.bf16.msra.mxu0 0
      %447 = vmatprep.subr.bf16.mxu0 0
      %448 = vmatpush1.bf16.msra.mxu0 0
      %449 = vmatprep.subr.bf16.mxu0 0
      %450 = vmatpush1.bf16.msra.mxu0 0
      %451 = vmatprep.subr.bf16.mxu0 0
      %452 = vmatpush1.bf16.msra.mxu0 0
      %453 = vmatprep.subr.bf16.mxu0 0
      %454 = vmatpush1.bf16.msra.mxu0 0
      %455 = vmatprep.subr.bf16.mxu0 0
      %456 = vmatpush1.bf16.msra.mxu0 0
      %457 = vmatprep.mubr.bf16.mxu0 0
      %458 = vmatmul.mubr.bf16.gmra.mrb[0].mxu0 %v423
      %v459 = vpop.f32.mrb[0].mxu0
      %v460 = vadd.f32 0.0, %v459
      %v461 = vpop.f32.mrb[0].mxu0
      %v462 = vadd.f32 0.0, %v461
      %v463 = vpop.f32.mrb[0].mxu0
      %v464 = vadd.f32 0.0, %v463
      %v465 = vpop.f32.mrb[0].mxu0
      %v466 = vadd.f32 0.0, %v465
      %467 = vdwg.mxu0
      %v468 = vpack.c.bf16 %v464, %v460
      %v469 = vpack.c.bf16 %v466, %v462
      %v470 = vld [vmem:[%s4] sm:$0xf]
      %v471 = vld [vmem:[%s4 + $0x4] sm:$0xf]
      %v472 = vld [vmem:[%s4 + $0x8] sm:$0x1]
      %v505 = vunpack.c.l.b16 %v303
      %v506 = vunpack.c.l.b16 %v304
      %v507 = vunpack.c.l.b16 %v305
      %v508 = vunpack.c.l.b16 %v306
      %v509 = vunpack.c.l.b16 %v307
      %v510 = vunpack.c.l.b16 %v308
      %v511 = vunpack.c.l.b16 %v309
      %v512 = vunpack.c.l.b16 %v310
      %v513 = vunpack.c.l.b16 %v311
      %v514 = vunpack.c.l.b16 %v312
      %v515 = vunpack.c.l.b16 %v313
      %v516 = vunpack.c.l.b16 %v314
      %v517 = vunpack.c.l.b16 %v315
      %v518 = vunpack.c.l.b16 %v316
      %v519 = vunpack.c.l.b16 %v317
      %v520 = vunpack.c.l.b16 %v318
      %v521 = vunpack.c.l.b16 %v319
      %v522 = vunpack.c.l.b16 %v320
      %v523 = vunpack.c.l.b16 %v321
      %v524 = vunpack.c.l.b16 %v322
      %v525 = vunpack.c.l.b16 %v323
      %v526 = vunpack.c.l.b16 %v324
      %v527 = vunpack.c.l.b16 %v325
      %v528 = vunpack.c.l.b16 %v326
      %v529 = vunpack.c.l.b16 %v327
      %v530 = vunpack.c.l.b16 %v328
      %v531 = vunpack.c.l.b16 %v329
      %v532 = vunpack.c.l.b16 %v330
      %v533 = vunpack.c.l.b16 %v331
      %v534 = vunpack.c.l.b16 %v332
      %v535 = vunpack.c.l.b16 %v333
      %v536 = vunpack.c.l.b16 %v334
      %v537 = vpack.c.b16 %v506, %v505
      %v538 = vpack.c.b16 %v508, %v507
      %v539 = vpack.c.b16 %v510, %v509
      %v540 = vpack.c.b16 %v512, %v511
      %v541 = vpack.c.b16 %v514, %v513
      %v542 = vpack.c.b16 %v516, %v515
      %v543 = vpack.c.b16 %v518, %v517
      %v544 = vpack.c.b16 %v520, %v519
      %v545 = vpack.c.b16 %v522, %v521
      %v546 = vpack.c.b16 %v524, %v523
      %v547 = vpack.c.b16 %v526, %v525
      %v548 = vpack.c.b16 %v528, %v527
      %v549 = vpack.c.b16 %v530, %v529
      %v550 = vpack.c.b16 %v532, %v531
      %v551 = vpack.c.b16 %v534, %v533
      %v552 = vpack.c.b16 %v536, %v535
      %v556 = vunpack.c.l.b16 %v470
      %v557 = vunpack.c.l.b16 %v471
      %v558 = vunpack.c.l.b16 %v472
      %v559 = vpack.c.b16 %v557, %v556
      %v560 = vpack.c.b16 %v558, %v558
      %v563 = vsel %vm357, %v537, 0
      %v566 = vsel %vm357, %v538, 0
      %v569 = vsel %vm357, %v539, 0
      %v572 = vsel %vm357, %v540, 0
      %v575 = vsel %vm357, %v541, 0
      %v578 = vsel %vm357, %v542, 0
      %v581 = vsel %vm357, %v543, 0
      %v584 = vsel %vm357, %v544, 0
      %v587 = vsel %vm357, %v545, 0
      %v590 = vsel %vm357, %v546, 0
      %v593 = vsel %vm357, %v547, 0
      %v596 = vsel %vm357, %v548, 0
      %v599 = vsel %vm357, %v549, 0
      %v602 = vsel %vm357, %v550, 0
      %v605 = vsel %vm357, %v551, 0
      %v608 = vsel %vm357, %v552, 0
      %v611 = vand.u32 %v560, %v363
      %613 = vmatprep.subr.bf16.mxu0 0
      %614 = vmatpush1.bf16.msra.mxu0 %v559
      %615 = vmatprep.subr.bf16.mxu0 0
      %616 = vmatpush1.bf16.msra.mxu0 %v611
      %617 = vmatprep.subr.bf16.mxu0 0
      %618 = vmatpush1.bf16.msra.mxu0 0
      %619 = vmatprep.subr.bf16.mxu0 0
      %620 = vmatpush1.bf16.msra.mxu0 0
      %621 = vmatprep.subr.bf16.mxu0 0
      %622 = vmatpush1.bf16.msra.mxu0 0
      %623 = vmatprep.subr.bf16.mxu0 0
      %624 = vmatpush1.bf16.msra.mxu0 0
      %625 = vmatprep.subr.bf16.mxu0 0
      %626 = vmatpush1.bf16.msra.mxu0 0
      %627 = vmatprep.subr.bf16.mxu0 0
      %628 = vmatpush1.bf16.msra.mxu0 0
      %629 = vmatprep.subr.bf16.mxu0 0
      %630 = vmatpush1.bf16.msra.mxu0 0
      %631 = vmatprep.subr.bf16.mxu0 0
      %632 = vmatpush1.bf16.msra.mxu0 0
      %633 = vmatprep.subr.bf16.mxu0 0
      %634 = vmatpush1.bf16.msra.mxu0 0
      %635 = vmatprep.subr.bf16.mxu0 0
      %636 = vmatpush1.bf16.msra.mxu0 0
      %637 = vmatprep.subr.bf16.mxu0 0
      %638 = vmatpush1.bf16.msra.mxu0 0
      %639 = vmatprep.subr.bf16.mxu0 0
      %640 = vmatpush1.bf16.msra.mxu0 0
      %641 = vmatprep.subr.bf16.mxu0 0
      %642 = vmatpush1.bf16.msra.mxu0 0
      %643 = vmatprep.subr.bf16.mxu0 0
      %644 = vmatpush1.bf16.msra.mxu0 0
      %645 = vmatprep.mubr.bf16.mxu0 0
      %646 = vmatmul.mubr.bf16.gmra.mrb[0].mxu0 %v563
      %v647 = vpop.f32.mrb[0].mxu0
      %v648 = vadd.f32 0.0, %v647
      %v649 = vpop.f32.mrb[0].mxu0
      %v650 = vpop.f32.mrb[0].mxu0
      %v651 = vadd.f32 0.0, %v650
      %v652 = vpop.f32.mrb[0].mxu0
      %653 = vmatprep.mubr.bf16.mxu0 0
      %654 = vmatmul.mubr.bf16.gmra.mrb[0].mxu0 %v566
      %v655 = vpop.f32.mrb[0].mxu0
      %v656 = vadd.f32 0.0, %v655
      %v657 = vpop.f32.mrb[0].mxu0
      %v658 = vpop.f32.mrb[0].mxu0
      %v659 = vadd.f32 0.0, %v658
      %v660 = vpop.f32.mrb[0].mxu0
      %661 = vmatprep.mubr.bf16.mxu0 0
      %662 = vmatmul.mubr.bf16.gmra.mrb[0].mxu0 %v569
      %v663 = vpop.f32.mrb[0].mxu0
      %v664 = vadd.f32 0.0, %v663
      %v665 = vpop.f32.mrb[0].mxu0
      %v666 = vpop.f32.mrb[0].mxu0
      %v667 = vadd.f32 0.0, %v666
      %v668 = vpop.f32.mrb[0].mxu0
      %669 = vmatprep.mubr.bf16.mxu0 0
      %670 = vmatmul.mubr.bf16.gmra.mrb[0].mxu0 %v572
      %v671 = vpop.f32.mrb[0].mxu0
      %v672 = vadd.f32 0.0, %v671
      %v673 = vpop.f32.mrb[0].mxu0
      %v674 = vpop.f32.mrb[0].mxu0
      %v675 = vadd.f32 0.0, %v674
      %v676 = vpop.f32.mrb[0].mxu0
      %677 = vmatprep.mubr.bf16.mxu0 0
      %678 = vmatmul.mubr.bf16.gmra.mrb[0].mxu0 %v575
      %v679 = vpop.f32.mrb[0].mxu0
      %v680 = vadd.f32 0.0, %v679
      %v681 = vpop.f32.mrb[0].mxu0
      %v682 = vpop.f32.mrb[0].mxu0
      %v683 = vadd.f32 0.0, %v682
      %v684 = vpop.f32.mrb[0].mxu0
      %685 = vmatprep.mubr.bf16.mxu0 0
      %686 = vmatmul.mubr.bf16.gmra.mrb[0].mxu0 %v578
      %v687 = vpop.f32.mrb[0].mxu0
      %v688 = vadd.f32 0.0, %v687
      %v689 = vpop.f32.mrb[0].mxu0
      %v690 = vpop.f32.mrb[0].mxu0
      %v691 = vadd.f32 0.0, %v690
      %v692 = vpop.f32.mrb[0].mxu0
      %693 = vmatprep.mubr.bf16.mxu0 0
      %694 = vmatmul.mubr.bf16.gmra.mrb[0].mxu0 %v581
      %v695 = vpop.f32.mrb[0].mxu0
      %v696 = vadd.f32 0.0, %v695
      %v697 = vpop.f32.mrb[0].mxu0
      %v698 = vpop.f32.mrb[0].mxu0
      %v699 = vadd.f32 0.0, %v698
      %v700 = vpop.f32.mrb[0].mxu0
      %701 = vmatprep.mubr.bf16.mxu0 0
      %702 = vmatmul.mubr.bf16.gmra.mrb[0].mxu0 %v584
      %v703 = vpop.f32.mrb[0].mxu0
      %v704 = vadd.f32 0.0, %v703
      %v705 = vpop.f32.mrb[0].mxu0
      %v706 = vpop.f32.mrb[0].mxu0
      %v707 = vadd.f32 0.0, %v706
      %v708 = vpop.f32.mrb[0].mxu0
      %709 = vmatprep.mubr.bf16.mxu0 0
      %710 = vmatmul.mubr.bf16.gmra.mrb[0].mxu0 %v587
      %v711 = vpop.f32.mrb[0].mxu0
      %v712 = vadd.f32 0.0, %v711
      %v713 = vpop.f32.mrb[0].mxu0
      %v714 = vpop.f32.mrb[0].mxu0
      %v715 = vadd.f32 0.0, %v714
      %v716 = vpop.f32.mrb[0].mxu0
      %717 = vmatprep.mubr.bf16.mxu0 0
      %718 = vmatmul.mubr.bf16.gmra.mrb[0].mxu0 %v590
      %v719 = vpop.f32.mrb[0].mxu0
      %v720 = vadd.f32 0.0, %v719
      %v721 = vpop.f32.mrb[0].mxu0
      %v722 = vpop.f32.mrb[0].mxu0
      %v723 = vadd.f32 0.0, %v722
      %v724 = vpop.f32.mrb[0].mxu0
      %725 = vmatprep.mubr.bf16.mxu0 0
      %726 = vmatmul.mubr.bf16.gmra.mrb[0].mxu0 %v593
      %v727 = vpop.f32.mrb[0].mxu0
      %v728 = vadd.f32 0.0, %v727
      %v729 = vpop.f32.mrb[0].mxu0
      %v730 = vpop.f32.mrb[0].mxu0
      %v731 = vadd.f32 0.0, %v730
      %v732 = vpop.f32.mrb[0].mxu0
      %733 = vmatprep.mubr.bf16.mxu0 0
      %734 = vmatmul.mubr.bf16.gmra.mrb[0].mxu0 %v596
      %v735 = vpop.f32.mrb[0].mxu0
      %v736 = vadd.f32 0.0, %v735
      %v737 = vpop.f32.mrb[0].mxu0
      %v738 = vpop.f32.mrb[0].mxu0
      %v739 = vadd.f32 0.0, %v738
      %v740 = vpop.f32.mrb[0].mxu0
      %741 = vmatprep.mubr.bf16.mxu0 0
      %742 = vmatmul.mubr.bf16.gmra.mrb[0].mxu0 %v599
      %v743 = vpop.f32.mrb[0].mxu0
      %v744 = vadd.f32 0.0, %v743
      %v745 = vpop.f32.mrb[0].mxu0
      %v746 = vpop.f32.mrb[0].mxu0
      %v747 = vadd.f32 0.0, %v746
      %v748 = vpop.f32.mrb[0].mxu0
      %749 = vmatprep.mubr.bf16.mxu0 0
      %750 = vmatmul.mubr.bf16.gmra.mrb[0].mxu0 %v602
      %v751 = vpop.f32.mrb[0].mxu0
      %v752 = vadd.f32 0.0, %v751
      %v753 = vpop.f32.mrb[0].mxu0
      %v754 = vpop.f32.mrb[0].mxu0
      %v755 = vadd.f32 0.0, %v754
      %v756 = vpop.f32.mrb[0].mxu0
      %757 = vmatprep.mubr.bf16.mxu0 0
      %758 = vmatmul.mubr.bf16.gmra.mrb[0].mxu0 %v605
      %v759 = vpop.f32.mrb[0].mxu0
      %v760 = vadd.f32 0.0, %v759
      %v761 = vpop.f32.mrb[0].mxu0
      %v762 = vpop.f32.mrb[0].mxu0
      %v763 = vadd.f32 0.0, %v762
      %v764 = vpop.f32.mrb[0].mxu0
      %765 = vmatprep.mubr.bf16.mxu0 0
      %766 = vmatmul.mubr.bf16.gmra.mrb[0].mxu0 %v608
      %v767 = vpop.f32.mrb[0].mxu0
      %v768 = vadd.f32 0.0, %v767
      %v769 = vpop.f32.mrb[0].mxu0
      %v770 = vpop.f32.mrb[0].mxu0
      %v771 = vadd.f32 0.0, %v770
      %v772 = vpop.f32.mrb[0].mxu0
      %773 = vdwg.mxu0
      %v774 = vpack.c.bf16 %v651, %v648
      %v775 = vpack.c.bf16 %v659, %v656
      %v776 = vpack.c.bf16 %v667, %v664
      %v777 = vpack.c.bf16 %v675, %v672
      %v778 = vpack.c.bf16 %v683, %v680
      %v779 = vpack.c.bf16 %v691, %v688
      %v780 = vpack.c.bf16 %v699, %v696
      %v781 = vpack.c.bf16 %v707, %v704
      %v782 = vpack.c.bf16 %v715, %v712
      %v783 = vpack.c.bf16 %v723, %v720
      %v784 = vpack.c.bf16 %v731, %v728
      %v785 = vpack.c.bf16 %v739, %v736
      %v786 = vpack.c.bf16 %v747, %v744
      %v787 = vpack.c.bf16 %v755, %v752
      %v788 = vpack.c.bf16 %v763, %v760
      %v789 = vpack.c.bf16 %v771, %v768
      %v790 = vld [vmem:[%s5] sm:$0xf]
      %v791 = vld [vmem:[%s5 + $0x4] sm:$0xf]
      %v792 = vld [vmem:[%s5 + $0x8] sm:$0x1]
      %v796 = vunpack.c.l.b16 %v790
      %v797 = vunpack.c.l.b16 %v791
      %v798 = vunpack.c.l.b16 %v792
      %v799 = vpack.c.b16 %v797, %v796
      %v800 = vpack.c.b16 %v798, %v798
      %v803 = vand.u32 %v800, %v363
      %805 = vmatprep.subr.bf16.mxu0 0
      %806 = vmatpush1.bf16.msra.mxu0 %v799
      %807 = vmatprep.subr.bf16.mxu0 0
      %808 = vmatpush1.bf16.msra.mxu0 %v803
      %809 = vmatprep.subr.bf16.mxu0 0
      %810 = vmatpush1.bf16.msra.mxu0 0
      %811 = vmatprep.subr.bf16.mxu0 0
      %812 = vmatpush1.bf16.msra.mxu0 0
      %813 = vmatprep.subr.bf16.mxu0 0
      %814 = vmatpush1.bf16.msra.mxu0 0
      %815 = vmatprep.subr.bf16.mxu0 0
      %816 = vmatpush1.bf16.msra.mxu0 0
      %817 = vmatprep.subr.bf16.mxu0 0
      %818 = vmatpush1.bf16.msra.mxu0 0
      %819 = vmatprep.subr.bf16.mxu0 0
      %820 = vmatpush1.bf16.msra.mxu0 0
      %821 = vmatprep.subr.bf16.mxu0 0
      %822 = vmatpush1.bf16.msra.mxu0 0
      %823 = vmatprep.subr.bf16.mxu0 0
      %824 = vmatpush1.bf16.msra.mxu0 0
      %825 = vmatprep.subr.bf16.mxu0 0
      %826 = vmatpush1.bf16.msra.mxu0 0
      %827 = vmatprep.subr.bf16.mxu0 0
      %828 = vmatpush1.bf16.msra.mxu0 0
      %829 = vmatprep.subr.bf16.mxu0 0
      %830 = vmatpush1.bf16.msra.mxu0 0
      %831 = vmatprep.subr.bf16.mxu0 0
      %832 = vmatpush1.bf16.msra.mxu0 0
      %833 = vmatprep.subr.bf16.mxu0 0
      %834 = vmatpush1.bf16.msra.mxu0 0
      %835 = vmatprep.subr.bf16.mxu0 0
      %836 = vmatpush1.bf16.msra.mxu0 0
      %837 = vmatprep.mubr.bf16.mxu0 0
      %838 = vmatmul.mubr.bf16.gmra.mrb[0].mxu0 %v563
      %v839 = vpop.f32.mrb[0].mxu0
      %v840 = vadd.f32 0.0, %v839
      %v841 = vpop.f32.mrb[0].mxu0
      %v842 = vpop.f32.mrb[0].mxu0
      %v843 = vadd.f32 0.0, %v842
      %v844 = vpop.f32.mrb[0].mxu0
      %845 = vmatprep.mubr.bf16.mxu0 0
      %846 = vmatmul.mubr.bf16.gmra.mrb[0].mxu0 %v566
      %v847 = vpop.f32.mrb[0].mxu0
      %v848 = vadd.f32 0.0, %v847
      %v849 = vpop.f32.mrb[0].mxu0
      %v850 = vpop.f32.mrb[0].mxu0
      %v851 = vadd.f32 0.0, %v850
      %v852 = vpop.f32.mrb[0].mxu0
      %853 = vmatprep.mubr.bf16.mxu0 0
      %854 = vmatmul.mubr.bf16.gmra.mrb[0].mxu0 %v569
      %v855 = vpop.f32.mrb[0].mxu0
      %v856 = vadd.f32 0.0, %v855
      %v857 = vpop.f32.mrb[0].mxu0
      %v858 = vpop.f32.mrb[0].mxu0
      %v859 = vadd.f32 0.0, %v858
      %v860 = vpop.f32.mrb[0].mxu0
      %861 = vmatprep.mubr.bf16.mxu0 0
      %862 = vmatmul.mubr.bf16.gmra.mrb[0].mxu0 %v572
      %v863 = vpop.f32.mrb[0].mxu0
      %v864 = vadd.f32 0.0, %v863
      %v865 = vpop.f32.mrb[0].mxu0
      %v866 = vpop.f32.mrb[0].mxu0
      %v867 = vadd.f32 0.0, %v866
      %v868 = vpop.f32.mrb[0].mxu0
      %869 = vmatprep.mubr.bf16.mxu0 0
      %870 = vmatmul.mubr.bf16.gmra.mrb[0].mxu0 %v575
      %v871 = vpop.f32.mrb[0].mxu0
      %v872 = vadd.f32 0.0, %v871
      %v873 = vpop.f32.mrb[0].mxu0
      %v874 = vpop.f32.mrb[0].mxu0
      %v875 = vadd.f32 0.0, %v874
      %v876 = vpop.f32.mrb[0].mxu0
      %877 = vmatprep.mubr.bf16.mxu0 0
      %878 = vmatmul.mubr.bf16.gmra.mrb[0].mxu0 %v578
      %v879 = vpop.f32.mrb[0].mxu0
      %v880 = vadd.f32 0.0, %v879
      %v881 = vpop.f32.mrb[0].mxu0
      %v882 = vpop.f32.mrb[0].mxu0
      %v883 = vadd.f32 0.0, %v882
      %v884 = vpop.f32.mrb[0].mxu0
      %885 = vmatprep.mubr.bf16.mxu0 0
      %886 = vmatmul.mubr.bf16.gmra.mrb[0].mxu0 %v581
      %v887 = vpop.f32.mrb[0].mxu0
      %v888 = vadd.f32 0.0, %v887
      %v889 = vpop.f32.mrb[0].mxu0
      %v890 = vpop.f32.mrb[0].mxu0
      %v891 = vadd.f32 0.0, %v890
      %v892 = vpop.f32.mrb[0].mxu0
      %893 = vmatprep.mubr.bf16.mxu0 0
      %894 = vmatmul.mubr.bf16.gmra.mrb[0].mxu0 %v584
      %v895 = vpop.f32.mrb[0].mxu0
      %v896 = vadd.f32 0.0, %v895
      %v897 = vpop.f32.mrb[0].mxu0
      %v898 = vpop.f32.mrb[0].mxu0
      %v899 = vadd.f32 0.0, %v898
      %v900 = vpop.f32.mrb[0].mxu0
      %901 = vmatprep.mubr.bf16.mxu0 0
      %902 = vmatmul.mubr.bf16.gmra.mrb[0].mxu0 %v587
      %v903 = vpop.f32.mrb[0].mxu0
      %v904 = vadd.f32 0.0, %v903
      %v905 = vpop.f32.mrb[0].mxu0
      %v906 = vpop.f32.mrb[0].mxu0
      %v907 = vadd.f32 0.0, %v906
      %v908 = vpop.f32.mrb[0].mxu0
      %909 = vmatprep.mubr.bf16.mxu0 0
      %910 = vmatmul.mubr.bf16.gmra.mrb[0].mxu0 %v590
      %v911 = vpop.f32.mrb[0].mxu0
      %v912 = vadd.f32 0.0, %v911
      %v913 = vpop.f32.mrb[0].mxu0
      %v914 = vpop.f32.mrb[0].mxu0
      %v915 = vadd.f32 0.0, %v914
      %v916 = vpop.f32.mrb[0].mxu0
      %917 = vmatprep.mubr.bf16.mxu0 0
      %918 = vmatmul.mubr.bf16.gmra.mrb[0].mxu0 %v593
      %v919 = vpop.f32.mrb[0].mxu0
      %v920 = vadd.f32 0.0, %v919
      %v921 = vpop.f32.mrb[0].mxu0
      %v922 = vpop.f32.mrb[0].mxu0
      %v923 = vadd.f32 0.0, %v922
      %v924 = vpop.f32.mrb[0].mxu0
      %925 = vmatprep.mubr.bf16.mxu0 0
      %926 = vmatmul.mubr.bf16.gmra.mrb[0].mxu0 %v596
      %v927 = vpop.f32.mrb[0].mxu0
      %v928 = vadd.f32 0.0, %v927
      %v929 = vpop.f32.mrb[0].mxu0
      %v930 = vpop.f32.mrb[0].mxu0
      %v931 = vadd.f32 0.0, %v930
      %v932 = vpop.f32.mrb[0].mxu0
      %933 = vmatprep.mubr.bf16.mxu0 0
      %934 = vmatmul.mubr.bf16.gmra.mrb[0].mxu0 %v599
      %v935 = vpop.f32.mrb[0].mxu0
      %v936 = vadd.f32 0.0, %v935
      %v937 = vpop.f32.mrb[0].mxu0
      %v938 = vpop.f32.mrb[0].mxu0
      %v939 = vadd.f32 0.0, %v938
      %v940 = vpop.f32.mrb[0].mxu0
      %941 = vmatprep.mubr.bf16.mxu0 0
      %942 = vmatmul.mubr.bf16.gmra.mrb[0].mxu0 %v602
      %v943 = vpop.f32.mrb[0].mxu0
      %v944 = vadd.f32 0.0, %v943
      %v945 = vpop.f32.mrb[0].mxu0
      %v946 = vpop.f32.mrb[0].mxu0
      %v947 = vadd.f32 0.0, %v946
      %v948 = vpop.f32.mrb[0].mxu0
      %949 = vmatprep.mubr.bf16.mxu0 0
      %950 = vmatmul.mubr.bf16.gmra.mrb[0].mxu0 %v605
      %v951 = vpop.f32.mrb[0].mxu0
      %v952 = vadd.f32 0.0, %v951
      %v953 = vpop.f32.mrb[0].mxu0
      %v954 = vpop.f32.mrb[0].mxu0
      %v955 = vadd.f32 0.0, %v954
      %v956 = vpop.f32.mrb[0].mxu0
      %957 = vmatprep.mubr.bf16.mxu0 0
      %958 = vmatmul.mubr.bf16.gmra.mrb[0].mxu0 %v608
      %v959 = vpop.f32.mrb[0].mxu0
      %v960 = vadd.f32 0.0, %v959
      %v961 = vpop.f32.mrb[0].mxu0
      %v962 = vpop.f32.mrb[0].mxu0
      %v963 = vadd.f32 0.0, %v962
      %v964 = vpop.f32.mrb[0].mxu0
      %965 = vdwg.mxu0
      %v966 = vpack.c.bf16 %v843, %v840
      %v967 = vpack.c.bf16 %v851, %v848
      %v968 = vpack.c.bf16 %v859, %v856
      %v969 = vpack.c.bf16 %v867, %v864
      %v970 = vpack.c.bf16 %v875, %v872
      %v971 = vpack.c.bf16 %v883, %v880
      %v972 = vpack.c.bf16 %v891, %v888
      %v973 = vpack.c.bf16 %v899, %v896
      %v974 = vpack.c.bf16 %v907, %v904
      %v975 = vpack.c.bf16 %v915, %v912
      %v976 = vpack.c.bf16 %v923, %v920
      %v977 = vpack.c.bf16 %v931, %v928
      %v978 = vpack.c.bf16 %v939, %v936
      %v979 = vpack.c.bf16 %v947, %v944
      %v980 = vpack.c.bf16 %v955, %v952
      %v981 = vpack.c.bf16 %v963, %v960
      %v982 = vld [vmem:[%s6] sm:$0xf]
      %v983 = vld [vmem:[%s6 + $0x4] sm:$0xf]
      %v984 = vld [vmem:[%s6 + $0x8] sm:$0xf]
      %v985 = vld [vmem:[%s6 + $0xc] sm:$0xf]
      %v986 = vld [vmem:[%s6 + $0x10] sm:$0xf]
      %v987 = vld [vmem:[%s6 + $0x14] sm:$0xf]
      %v988 = vld [vmem:[%s6 + $0x18] sm:$0xf]
      %v989 = vld [vmem:[%s6 + $0x1c] sm:$0xf]
      %v990 = vld [vmem:[%s6 + $0x20] sm:$0xf]
      %v991 = vld [vmem:[%s6 + $0x24] sm:$0xf]
      %v992 = vld [vmem:[%s6 + $0x28] sm:$0xf]
      %v993 = vld [vmem:[%s6 + $0x2c] sm:$0xf]
      %v994 = vld [vmem:[%s6 + $0x30] sm:$0xf]
      %v995 = vld [vmem:[%s6 + $0x34] sm:$0xf]
      %v996 = vld [vmem:[%s6 + $0x38] sm:$0xf]
      %v997 = vld [vmem:[%s6 + $0x3c] sm:$0xf]
      %v998 = vld [vmem:[%s6 + $0x40] sm:$0xf]
      %v999 = vld [vmem:[%s6 + $0x44] sm:$0xf]
      %v1000 = vld [vmem:[%s6 + $0x48] sm:$0xf]
      %v1001 = vld [vmem:[%s6 + $0x4c] sm:$0xf]
      %v1002 = vld [vmem:[%s6 + $0x50] sm:$0xf]
      %v1003 = vld [vmem:[%s6 + $0x54] sm:$0xf]
      %v1004 = vld [vmem:[%s6 + $0x58] sm:$0xf]
      %v1005 = vld [vmem:[%s6 + $0x5c] sm:$0xf]
      %v1006 = vld [vmem:[%s6 + $0x60] sm:$0xf]
      %v1007 = vld [vmem:[%s6 + $0x64] sm:$0xf]
      %v1008 = vld [vmem:[%s6 + $0x68] sm:$0xf]
      %v1009 = vld [vmem:[%s6 + $0x6c] sm:$0xf]
      %v1010 = vld [vmem:[%s6 + $0x70] sm:$0xf]
      %v1011 = vld [vmem:[%s6 + $0x74] sm:$0xf]
      %v1012 = vld [vmem:[%s6 + $0x78] sm:$0xf]
      %v1013 = vld [vmem:[%s6 + $0x7c] sm:$0xf]
      %v1046 = vunpack.c.l.b16 %v982
      %v1047 = vunpack.c.l.b16 %v983
      %v1048 = vunpack.c.l.b16 %v984
      %v1049 = vunpack.c.l.b16 %v985
      %v1050 = vunpack.c.l.b16 %v986
      %v1051 = vunpack.c.l.b16 %v987
      %v1052 = vunpack.c.l.b16 %v988
      %v1053 = vunpack.c.l.b16 %v989
      %v1054 = vunpack.c.l.b16 %v990
      %v1055 = vunpack.c.l.b16 %v991
      %v1056 = vunpack.c.l.b16 %v992
      %v1057 = vunpack.c.l.b16 %v993
      %v1058 = vunpack.c.l.b16 %v994
      %v1059 = vunpack.c.l.b16 %v995
      %v1060 = vunpack.c.l.b16 %v996
      %v1061 = vunpack.c.l.b16 %v997
      %v1062 = vunpack.c.l.b16 %v998
      %v1063 = vunpack.c.l.b16 %v999
      %v1064 = vunpack.c.l.b16 %v1000
      %v1065 = vunpack.c.l.b16 %v1001
      %v1066 = vunpack.c.l.b16 %v1002
      %v1067 = vunpack.c.l.b16 %v1003
      %v1068 = vunpack.c.l.b16 %v1004
      %v1069 = vunpack.c.l.b16 %v1005
      %v1070 = vunpack.c.l.b16 %v1006
      %v1071 = vunpack.c.l.b16 %v1007
      %v1072 = vunpack.c.l.b16 %v1008
      %v1073 = vunpack.c.l.b16 %v1009
      %v1074 = vunpack.c.l.b16 %v1010
      %v1075 = vunpack.c.l.b16 %v1011
      %v1076 = vunpack.c.l.b16 %v1012
      %v1077 = vunpack.c.l.b16 %v1013
      %v1078 = vpack.c.b16 %v1047, %v1046
      %v1079 = vpack.c.b16 %v1049, %v1048
      %v1080 = vpack.c.b16 %v1051, %v1050
      %v1081 = vpack.c.b16 %v1053, %v1052
      %v1082 = vpack.c.b16 %v1055, %v1054
      %v1083 = vpack.c.b16 %v1057, %v1056
      %v1084 = vpack.c.b16 %v1059, %v1058
      %v1085 = vpack.c.b16 %v1061, %v1060
      %v1086 = vpack.c.b16 %v1063, %v1062
      %v1087 = vpack.c.b16 %v1065, %v1064
      %v1088 = vpack.c.b16 %v1067, %v1066
      %v1089 = vpack.c.b16 %v1069, %v1068
      %v1090 = vpack.c.b16 %v1071, %v1070
      %v1091 = vpack.c.b16 %v1073, %v1072
      %v1092 = vpack.c.b16 %v1075, %v1074
      %v1093 = vpack.c.b16 %v1077, %v1076
      %vm1094 = vcmask 64512
      %v1096 = vsel %vm1094, %v1078, 0
      %v1099 = vsel %vm1094, %v1079, 0
      %v1102 = vsel %vm1094, %v1080, 0
      %v1105 = vsel %vm1094, %v1081, 0
      %v1108 = vsel %vm1094, %v1082, 0
      %v1111 = vsel %vm1094, %v1083, 0
      %v1114 = vsel %vm1094, %v1084, 0
      %v1117 = vsel %vm1094, %v1085, 0
      %v1120 = vsel %vm1094, %v1086, 0
      %v1123 = vsel %vm1094, %v1087, 0
      %v1126 = vsel %vm1094, %v1088, 0
      %v1129 = vsel %vm1094, %v1089, 0
      %v1132 = vsel %vm1094, %v1090, 0
      %v1135 = vsel %vm1094, %v1091, 0
      %v1138 = vsel %vm1094, %v1092, 0
      %v1141 = vsel %vm1094, %v1093, 0
      %vm1143 = vcmask 1043456
      %v1145 = vsel %vm1143, %v413, 0
      %v1148 = vsel %vm1143, %v414, 0
      %1150 = vmatprep.subr.bf16.mxu0 %v1148
      %1151 = vmatpush1.bf16.msra.mxu0 %v1145
      %1152 = vmatprep.subr.bf16.mxu0 0
      %1153 = vmatpush1.bf16.msra.mxu0 0
      %1154 = vmatprep.subr.bf16.mxu0 0
      %1155 = vmatpush1.bf16.msra.mxu0 0
      %1156 = vmatprep.subr.bf16.mxu0 0
      %1157 = vmatpush1.bf16.msra.mxu0 0
      %1158 = vmatprep.subr.bf16.mxu0 0
      %1159 = vmatpush1.bf16.msra.mxu0 0
      %1160 = vmatprep.subr.bf16.mxu0 0
      %1161 = vmatpush1.bf16.msra.mxu0 0
      %1162 = vmatprep.subr.bf16.mxu0 0
      %1163 = vmatpush1.bf16.msra.mxu0 0
      %1164 = vmatprep.subr.bf16.mxu0 0
      %1165 = vmatpush1.bf16.msra.mxu0 0
      %1166 = vmatprep.subr.bf16.mxu0 0
      %1167 = vmatpush1.bf16.msra.mxu0 0
      %1168 = vmatprep.subr.bf16.mxu0 0
      %1169 = vmatpush1.bf16.msra.mxu0 0
      %1170 = vmatprep.subr.bf16.mxu0 0
      %1171 = vmatpush1.bf16.msra.mxu0 0
      %1172 = vmatprep.subr.bf16.mxu0 0
      %1173 = vmatpush1.bf16.msra.mxu0 0
      %1174 = vmatprep.subr.bf16.mxu0 0
      %1175 = vmatpush1.bf16.msra.mxu0 0
      %1176 = vmatprep.subr.bf16.mxu0 0
      %1177 = vmatpush1.bf16.msra.mxu0 0
      %1178 = vmatprep.subr.bf16.mxu0 0
      %1179 = vmatpush1.bf16.msra.mxu0 0
      %1180 = vmatprep.subr.bf16.mxu0 0
      %1181 = vmatpush1.bf16.msra.mxu0 0
      %1182 = vmatprep.mubr.bf16.mxu0 0
      %1183 = vmatmul.mubr.bf16.gmra.mrb[0].mxu0 %v1096
      %v1184 = vpop.f32.mrb[0].mxu0
      %v1185 = vadd.f32 0.0, %v1184
      %v1186 = vpop.f32.mrb[0].mxu0
      %v1187 = vadd.f32 0.0, %v1186
      %v1188 = vpop.f32.mrb[0].mxu0
      %v1189 = vadd.f32 0.0, %v1188
      %v1190 = vpop.f32.mrb[0].mxu0
      %v1191 = vadd.f32 0.0, %v1190
      %1192 = vmatprep.mubr.bf16.mxu0 0
      %1193 = vmatmul.mubr.bf16.gmra.mrb[0].mxu0 %v1099
      %v1194 = vpop.f32.mrb[0].mxu0
      %v1195 = vadd.f32 0.0, %v1194
      %v1196 = vpop.f32.mrb[0].mxu0
      %v1197 = vadd.f32 0.0, %v1196
      %v1198 = vpop.f32.mrb[0].mxu0
      %v1199 = vadd.f32 0.0, %v1198
      %v1200 = vpop.f32.mrb[0].mxu0
      %v1201 = vadd.f32 0.0, %v1200
      %1202 = vmatprep.mubr.bf16.mxu0 0
      %1203 = vmatmul.mubr.bf16.gmra.mrb[0].mxu0 %v1102
      %v1204 = vpop.f32.mrb[0].mxu0
      %v1205 = vadd.f32 0.0, %v1204
      %v1206 = vpop.f32.mrb[0].mxu0
      %v1207 = vadd.f32 0.0, %v1206
      %v1208 = vpop.f32.mrb[0].mxu0
      %v1209 = vadd.f32 0.0, %v1208
      %v1210 = vpop.f32.mrb[0].mxu0
      %v1211 = vadd.f32 0.0, %v1210
      %1212 = vmatprep.mubr.bf16.mxu0 0
      %1213 = vmatmul.mubr.bf16.gmra.mrb[0].mxu0 %v1105
      %v1214 = vpop.f32.mrb[0].mxu0
      %v1215 = vadd.f32 0.0, %v1214
      %v1216 = vpop.f32.mrb[0].mxu0
      %v1217 = vadd.f32 0.0, %v1216
      %v1218 = vpop.f32.mrb[0].mxu0
      %v1219 = vadd.f32 0.0, %v1218
      %v1220 = vpop.f32.mrb[0].mxu0
      %v1221 = vadd.f32 0.0, %v1220
      %1222 = vmatprep.mubr.bf16.mxu0 0
      %1223 = vmatmul.mubr.bf16.gmra.mrb[0].mxu0 %v1108
      %v1224 = vpop.f32.mrb[0].mxu0
      %v1225 = vadd.f32 0.0, %v1224
      %v1226 = vpop.f32.mrb[0].mxu0
      %v1227 = vadd.f32 0.0, %v1226
      %v1228 = vpop.f32.mrb[0].mxu0
      %v1229 = vadd.f32 0.0, %v1228
      %v1230 = vpop.f32.mrb[0].mxu0
      %v1231 = vadd.f32 0.0, %v1230
      %1232 = vmatprep.mubr.bf16.mxu0 0
      %1233 = vmatmul.mubr.bf16.gmra.mrb[0].mxu0 %v1111
      %v1234 = vpop.f32.mrb[0].mxu0
      %v1235 = vadd.f32 0.0, %v1234
      %v1236 = vpop.f32.mrb[0].mxu0
      %v1237 = vadd.f32 0.0, %v1236
      %v1238 = vpop.f32.mrb[0].mxu0
      %v1239 = vadd.f32 0.0, %v1238
      %v1240 = vpop.f32.mrb[0].mxu0
      %v1241 = vadd.f32 0.0, %v1240
      %1242 = vmatprep.mubr.bf16.mxu0 0
      %1243 = vmatmul.mubr.bf16.gmra.mrb[0].mxu0 %v1114
      %v1244 = vpop.f32.mrb[0].mxu0
      %v1245 = vadd.f32 0.0, %v1244
      %v1246 = vpop.f32.mrb[0].mxu0
      %v1247 = vadd.f32 0.0, %v1246
      %v1248 = vpop.f32.mrb[0].mxu0
      %v1249 = vadd.f32 0.0, %v1248
      %v1250 = vpop.f32.mrb[0].mxu0
      %v1251 = vadd.f32 0.0, %v1250
      %1252 = vmatprep.mubr.bf16.mxu0 0
      %1253 = vmatmul.mubr.bf16.gmra.mrb[0].mxu0 %v1117
      %v1254 = vpop.f32.mrb[0].mxu0
      %v1255 = vadd.f32 0.0, %v1254
      %v1256 = vpop.f32.mrb[0].mxu0
      %v1257 = vadd.f32 0.0, %v1256
      %v1258 = vpop.f32.mrb[0].mxu0
      %v1259 = vadd.f32 0.0, %v1258
      %v1260 = vpop.f32.mrb[0].mxu0
      %v1261 = vadd.f32 0.0, %v1260
      %1262 = vmatprep.mubr.bf16.mxu0 0
      %1263 = vmatmul.mubr.bf16.gmra.mrb[0].mxu0 %v1120
      %v1264 = vpop.f32.mrb[0].mxu0
      %v1265 = vadd.f32 0.0, %v1264
      %v1266 = vpop.f32.mrb[0].mxu0
      %v1267 = vadd.f32 0.0, %v1266
      %v1268 = vpop.f32.mrb[0].mxu0
      %v1269 = vadd.f32 0.0, %v1268
      %v1270 = vpop.f32.mrb[0].mxu0
      %v1271 = vadd.f32 0.0, %v1270
      %1272 = vmatprep.mubr.bf16.mxu0 0
      %1273 = vmatmul.mubr.bf16.gmra.mrb[0].mxu0 %v1123
      %v1274 = vpop.f32.mrb[0].mxu0
      %v1275 = vadd.f32 0.0, %v1274
      %v1276 = vpop.f32.mrb[0].mxu0
      %v1277 = vadd.f32 0.0, %v1276
      %v1278 = vpop.f32.mrb[0].mxu0
      %v1279 = vadd.f32 0.0, %v1278
      %v1280 = vpop.f32.mrb[0].mxu0
      %v1281 = vadd.f32 0.0, %v1280
      %1282 = vmatprep.mubr.bf16.mxu0 0
      %1283 = vmatmul.mubr.bf16.gmra.mrb[0].mxu0 %v1126
      %v1284 = vpop.f32.mrb[0].mxu0
      %v1285 = vadd.f32 0.0, %v1284
      %v1286 = vpop.f32.mrb[0].mxu0
      %v1287 = vadd.f32 0.0, %v1286
      %v1288 = vpop.f32.mrb[0].mxu0
      %v1289 = vadd.f32 0.0, %v1288
      %v1290 = vpop.f32.mrb[0].mxu0
      %v1291 = vadd.f32 0.0, %v1290
      %1292 = vmatprep.mubr.bf16.mxu0 0
      %1293 = vmatmul.mubr.bf16.gmra.mrb[0].mxu0 %v1129
      %v1294 = vpop.f32.mrb[0].mxu0
      %v1295 = vadd.f32 0.0, %v1294
      %v1296 = vpop.f32.mrb[0].mxu0
      %v1297 = vadd.f32 0.0, %v1296
      %v1298 = vpop.f32.mrb[0].mxu0
      %v1299 = vadd.f32 0.0, %v1298
      %v1300 = vpop.f32.mrb[0].mxu0
      %v1301 = vadd.f32 0.0, %v1300
      %1302 = vmatprep.mubr.bf16.mxu0 0
      %1303 = vmatmul.mubr.bf16.gmra.mrb[0].mxu0 %v1132
      %v1304 = vpop.f32.mrb[0].mxu0
      %v1305 = vadd.f32 0.0, %v1304
      %v1306 = vpop.f32.mrb[0].mxu0
      %v1307 = vadd.f32 0.0, %v1306
      %v1308 = vpop.f32.mrb[0].mxu0
      %v1309 = vadd.f32 0.0, %v1308
      %v1310 = vpop.f32.mrb[0].mxu0
      %v1311 = vadd.f32 0.0, %v1310
      %1312 = vmatprep.mubr.bf16.mxu0 0
      %1313 = vmatmul.mubr.bf16.gmra.mrb[0].mxu0 %v1135
      %v1314 = vpop.f32.mrb[0].mxu0
      %v1315 = vadd.f32 0.0, %v1314
      %v1316 = vpop.f32.mrb[0].mxu0
      %v1317 = vadd.f32 0.0, %v1316
      %v1318 = vpop.f32.mrb[0].mxu0
      %v1319 = vadd.f32 0.0, %v1318
      %v1320 = vpop.f32.mrb[0].mxu0
      %v1321 = vadd.f32 0.0, %v1320
      %1322 = vmatprep.mubr.bf16.mxu0 0
      %1323 = vmatmul.mubr.bf16.gmra.mrb[0].mxu0 %v1138
      %v1324 = vpop.f32.mrb[0].mxu0
      %v1325 = vadd.f32 0.0, %v1324
      %v1326 = vpop.f32.mrb[0].mxu0
      %v1327 = vadd.f32 0.0, %v1326
      %v1328 = vpop.f32.mrb[0].mxu0
      %v1329 = vadd.f32 0.0, %v1328
      %v1330 = vpop.f32.mrb[0].mxu0
      %v1331 = vadd.f32 0.0, %v1330
      %1332 = vmatprep.mubr.bf16.mxu0 0
      %1333 = vmatmul.mubr.bf16.gmra.mrb[0].mxu0 %v1141
      %v1334 = vpop.f32.mrb[0].mxu0
      %v1335 = vadd.f32 0.0, %v1334
      %v1336 = vpop.f32.mrb[0].mxu0
      %v1337 = vadd.f32 0.0, %v1336
      %v1338 = vpop.f32.mrb[0].mxu0
      %v1339 = vadd.f32 0.0, %v1338
      %v1340 = vpop.f32.mrb[0].mxu0
      %v1341 = vadd.f32 0.0, %v1340
      %1342 = vdwg.mxu0
      %v1344 = vsel %vm1094, %v774, 0
      %v1347 = vsel %vm1094, %v775, 0
      %v1350 = vsel %vm1094, %v776, 0
      %v1353 = vsel %vm1094, %v777, 0
      %v1356 = vsel %vm1094, %v778, 0
      %v1359 = vsel %vm1094, %v779, 0
      %v1362 = vsel %vm1094, %v780, 0
      %v1365 = vsel %vm1094, %v781, 0
      %v1368 = vsel %vm1094, %v782, 0
      %v1371 = vsel %vm1094, %v783, 0
      %v1374 = vsel %vm1094, %v784, 0
      %v1377 = vsel %vm1094, %v785, 0
      %v1380 = vsel %vm1094, %v786, 0
      %v1383 = vsel %vm1094, %v787, 0
      %v1386 = vsel %vm1094, %v788, 0
      %v1389 = vsel %vm1094, %v789, 0
      %v1392 = vsel %vm1143, %v468, 0
      %v1395 = vsel %vm1143, %v469, 0
      %1397 = vmatprep.subr.bf16.mxu0 %v1395
      %1398 = vmatpush1.bf16.msra.mxu0 %v1392
      %1399 = vmatprep.subr.bf16.mxu0 0
      %1400 = vmatpush1.bf16.msra.mxu0 0
      %1401 = vmatprep.subr.bf16.mxu0 0
      %1402 = vmatpush1.bf16.msra.mxu0 0
      %1403 = vmatprep.subr.bf16.mxu0 0
      %1404 = vmatpush1.bf16.msra.mxu0 0
      %1405 = vmatprep.subr.bf16.mxu0 0
      %1406 = vmatpush1.bf16.msra.mxu0 0
      %1407 = vmatprep.subr.bf16.mxu0 0
      %1408 = vmatpush1.bf16.msra.mxu0 0
      %1409 = vmatprep.subr.bf16.mxu0 0
      %1410 = vmatpush1.bf16.msra.mxu0 0
      %1411 = vmatprep.subr.bf16.mxu0 0
      %1412 = vmatpush1.bf16.msra.mxu0 0
      %1413 = vmatprep.subr.bf16.mxu0 0
      %1414 = vmatpush1.bf16.msra.mxu0 0
      %1415 = vmatprep.subr.bf16.mxu0 0
      %1416 = vmatpush1.bf16.msra.mxu0 0
      %1417 = vmatprep.subr.bf16.mxu0 0
      %1418 = vmatpush1.bf16.msra.mxu0 0
      %1419 = vmatprep.subr.bf16.mxu0 0
      %1420 = vmatpush1.bf16.msra.mxu0 0
      %1421 = vmatprep.subr.bf16.mxu0 0
      %1422 = vmatpush1.bf16.msra.mxu0 0
      %1423 = vmatprep.subr.bf16.mxu0 0
      %1424 = vmatpush1.bf16.msra.mxu0 0
      %1425 = vmatprep.subr.bf16.mxu0 0
      %1426 = vmatpush1.bf16.msra.mxu0 0
      %1427 = vmatprep.subr.bf16.mxu0 0
      %1428 = vmatpush1.bf16.msra.mxu0 0
      %1429 = vmatprep.mubr.bf16.mxu0 0
      %1430 = vmatmul.mubr.bf16.gmra.mrb[0].mxu0 %v1344
      %v1431 = vpop.f32.mrb[0].mxu0
      %v1432 = vadd.f32 %v1185, %v1431
      %v1433 = vpop.f32.mrb[0].mxu0
      %v1434 = vadd.f32 %v1187, %v1433
      %v1435 = vpop.f32.mrb[0].mxu0
      %v1436 = vadd.f32 %v1189, %v1435
      %v1437 = vpop.f32.mrb[0].mxu0
      %v1438 = vadd.f32 %v1191, %v1437
      %1439 = vmatprep.mubr.bf16.mxu0 0
      %1440 = vmatmul.mubr.bf16.gmra.mrb[0].mxu0 %v1347
      %v1441 = vpop.f32.mrb[0].mxu0
      %v1442 = vadd.f32 %v1195, %v1441
      %v1443 = vpop.f32.mrb[0].mxu0
      %v1444 = vadd.f32 %v1197, %v1443
      %v1445 = vpop.f32.mrb[0].mxu0
      %v1446 = vadd.f32 %v1199, %v1445
      %v1447 = vpop.f32.mrb[0].mxu0
      %v1448 = vadd.f32 %v1201, %v1447
      %1449 = vmatprep.mubr.bf16.mxu0 0
      %1450 = vmatmul.mubr.bf16.gmra.mrb[0].mxu0 %v1350
      %v1451 = vpop.f32.mrb[0].mxu0
      %v1452 = vadd.f32 %v1205, %v1451
      %v1453 = vpop.f32.mrb[0].mxu0
      %v1454 = vadd.f32 %v1207, %v1453
      %v1455 = vpop.f32.mrb[0].mxu0
      %v1456 = vadd.f32 %v1209, %v1455
      %v1457 = vpop.f32.mrb[0].mxu0
      %v1458 = vadd.f32 %v1211, %v1457
      %1459 = vmatprep.mubr.bf16.mxu0 0
      %1460 = vmatmul.mubr.bf16.gmra.mrb[0].mxu0 %v1353
      %v1461 = vpop.f32.mrb[0].mxu0
      %v1462 = vadd.f32 %v1215, %v1461
      %v1463 = vpop.f32.mrb[0].mxu0
      %v1464 = vadd.f32 %v1217, %v1463
      %v1465 = vpop.f32.mrb[0].mxu0
      %v1466 = vadd.f32 %v1219, %v1465
      %v1467 = vpop.f32.mrb[0].mxu0
      %v1468 = vadd.f32 %v1221, %v1467
      %1469 = vmatprep.mubr.bf16.mxu0 0
      %1470 = vmatmul.mubr.bf16.gmra.mrb[0].mxu0 %v1356
      %v1471 = vpop.f32.mrb[0].mxu0
      %v1472 = vadd.f32 %v1225, %v1471
      %v1473 = vpop.f32.mrb[0].mxu0
      %v1474 = vadd.f32 %v1227, %v1473
      %v1475 = vpop.f32.mrb[0].mxu0
      %v1476 = vadd.f32 %v1229, %v1475
      %v1477 = vpop.f32.mrb[0].mxu0
      %v1478 = vadd.f32 %v1231, %v1477
      %1479 = vmatprep.mubr.bf16.mxu0 0
      %1480 = vmatmul.mubr.bf16.gmra.mrb[0].mxu0 %v1359
      %v1481 = vpop.f32.mrb[0].mxu0
      %v1482 = vadd.f32 %v1235, %v1481
      %v1483 = vpop.f32.mrb[0].mxu0
      %v1484 = vadd.f32 %v1237, %v1483
      %v1485 = vpop.f32.mrb[0].mxu0
      %v1486 = vadd.f32 %v1239, %v1485
      %v1487 = vpop.f32.mrb[0].mxu0
      %v1488 = vadd.f32 %v1241, %v1487
      %1489 = vmatprep.mubr.bf16.mxu0 0
      %1490 = vmatmul.mubr.bf16.gmra.mrb[0].mxu0 %v1362
      %v1491 = vpop.f32.mrb[0].mxu0
      %v1492 = vadd.f32 %v1245, %v1491
      %v1493 = vpop.f32.mrb[0].mxu0
      %v1494 = vadd.f32 %v1247, %v1493
      %v1495 = vpop.f32.mrb[0].mxu0
      %v1496 = vadd.f32 %v1249, %v1495
      %v1497 = vpop.f32.mrb[0].mxu0
      %v1498 = vadd.f32 %v1251, %v1497
      %1499 = vmatprep.mubr.bf16.mxu0 0
      %1500 = vmatmul.mubr.bf16.gmra.mrb[0].mxu0 %v1365
      %v1501 = vpop.f32.mrb[0].mxu0
      %v1502 = vadd.f32 %v1255, %v1501
      %v1503 = vpop.f32.mrb[0].mxu0
      %v1504 = vadd.f32 %v1257, %v1503
      %v1505 = vpop.f32.mrb[0].mxu0
      %v1506 = vadd.f32 %v1259, %v1505
      %v1507 = vpop.f32.mrb[0].mxu0
      %v1508 = vadd.f32 %v1261, %v1507
      %1509 = vmatprep.mubr.bf16.mxu0 0
      %1510 = vmatmul.mubr.bf16.gmra.mrb[0].mxu0 %v1368
      %v1511 = vpop.f32.mrb[0].mxu0
      %v1512 = vadd.f32 %v1265, %v1511
      %v1513 = vpop.f32.mrb[0].mxu0
      %v1514 = vadd.f32 %v1267, %v1513
      %v1515 = vpop.f32.mrb[0].mxu0
      %v1516 = vadd.f32 %v1269, %v1515
      %v1517 = vpop.f32.mrb[0].mxu0
      %v1518 = vadd.f32 %v1271, %v1517
      %1519 = vmatprep.mubr.bf16.mxu0 0
      %1520 = vmatmul.mubr.bf16.gmra.mrb[0].mxu0 %v1371
      %v1521 = vpop.f32.mrb[0].mxu0
      %v1522 = vadd.f32 %v1275, %v1521
      %v1523 = vpop.f32.mrb[0].mxu0
      %v1524 = vadd.f32 %v1277, %v1523
      %v1525 = vpop.f32.mrb[0].mxu0
      %v1526 = vadd.f32 %v1279, %v1525
      %v1527 = vpop.f32.mrb[0].mxu0
      %v1528 = vadd.f32 %v1281, %v1527
      %1529 = vmatprep.mubr.bf16.mxu0 0
      %1530 = vmatmul.mubr.bf16.gmra.mrb[0].mxu0 %v1374
      %v1531 = vpop.f32.mrb[0].mxu0
      %v1532 = vadd.f32 %v1285, %v1531
      %v1533 = vpop.f32.mrb[0].mxu0
      %v1534 = vadd.f32 %v1287, %v1533
      %v1535 = vpop.f32.mrb[0].mxu0
      %v1536 = vadd.f32 %v1289, %v1535
      %v1537 = vpop.f32.mrb[0].mxu0
      %v1538 = vadd.f32 %v1291, %v1537
      %1539 = vmatprep.mubr.bf16.mxu0 0
      %1540 = vmatmul.mubr.bf16.gmra.mrb[0].mxu0 %v1377
      %v1541 = vpop.f32.mrb[0].mxu0
      %v1542 = vadd.f32 %v1295, %v1541
      %v1543 = vpop.f32.mrb[0].mxu0
      %v1544 = vadd.f32 %v1297, %v1543
      %v1545 = vpop.f32.mrb[0].mxu0
      %v1546 = vadd.f32 %v1299, %v1545
      %v1547 = vpop.f32.mrb[0].mxu0
      %v1548 = vadd.f32 %v1301, %v1547
      %1549 = vmatprep.mubr.bf16.mxu0 0
      %1550 = vmatmul.mubr.bf16.gmra.mrb[0].mxu0 %v1380
      %v1551 = vpop.f32.mrb[0].mxu0
      %v1552 = vadd.f32 %v1305, %v1551
      %v1553 = vpop.f32.mrb[0].mxu0
      %v1554 = vadd.f32 %v1307, %v1553
      %v1555 = vpop.f32.mrb[0].mxu0
      %v1556 = vadd.f32 %v1309, %v1555
      %v1557 = vpop.f32.mrb[0].mxu0
      %v1558 = vadd.f32 %v1311, %v1557
      %1559 = vmatprep.mubr.bf16.mxu0 0
      %1560 = vmatmul.mubr.bf16.gmra.mrb[0].mxu0 %v1383
      %v1561 = vpop.f32.mrb[0].mxu0
      %v1562 = vadd.f32 %v1315, %v1561
      %v1563 = vpop.f32.mrb[0].mxu0
      %v1564 = vadd.f32 %v1317, %v1563
      %v1565 = vpop.f32.mrb[0].mxu0
      %v1566 = vadd.f32 %v1319, %v1565
      %v1567 = vpop.f32.mrb[0].mxu0
      %v1568 = vadd.f32 %v1321, %v1567
      %1569 = vmatprep.mubr.bf16.mxu0 0
      %1570 = vmatmul.mubr.bf16.gmra.mrb[0].mxu0 %v1386
      %v1571 = vpop.f32.mrb[0].mxu0
      %v1572 = vadd.f32 %v1325, %v1571
      %v1573 = vpop.f32.mrb[0].mxu0
      %v1574 = vadd.f32 %v1327, %v1573
      %v1575 = vpop.f32.mrb[0].mxu0
      %v1576 = vadd.f32 %v1329, %v1575
      %v1577 = vpop.f32.mrb[0].mxu0
      %v1578 = vadd.f32 %v1331, %v1577
      %1579 = vmatprep.mubr.bf16.mxu0 0
      %1580 = vmatmul.mubr.bf16.gmra.mrb[0].mxu0 %v1389
      %v1581 = vpop.f32.mrb[0].mxu0
      %v1582 = vadd.f32 %v1335, %v1581
      %v1583 = vpop.f32.mrb[0].mxu0
      %v1584 = vadd.f32 %v1337, %v1583
      %v1585 = vpop.f32.mrb[0].mxu0
      %v1586 = vadd.f32 %v1339, %v1585
      %v1587 = vpop.f32.mrb[0].mxu0
      %v1588 = vadd.f32 %v1341, %v1587
      %1589 = vdwg.mxu0
      %v1590 = vmax.f32 %v1432, %v1434
      %1591 = vmax.xlane.f32.xlu0 %v1590
      %v1592 = vpop.xlane.xlu0 %1591
      %v1593 = vmax.f32 %v1436, %v1438
      %1594 = vmax.xlane.f32.xlu0 %v1593
      %v1595 = vpop.xlane.xlu0 %1594
      %v1596 = vmax.f32 %v1442, %v1444
      %1597 = vmax.xlane.f32.xlu0 %v1596
      %v1598 = vpop.xlane.xlu0 %1597
      %v1599 = vmax.f32 %v1446, %v1448
      %1600 = vmax.xlane.f32.xlu0 %v1599
      %v1601 = vpop.xlane.xlu0 %1600
      %v1602 = vmax.f32 %v1452, %v1454
      %1603 = vmax.xlane.f32.xlu0 %v1602
      %v1604 = vpop.xlane.xlu0 %1603
      %v1605 = vmax.f32 %v1456, %v1458
      %1606 = vmax.xlane.f32.xlu0 %v1605
      %v1607 = vpop.xlane.xlu0 %1606
      %v1608 = vmax.f32 %v1462, %v1464
      %1609 = vmax.xlane.f32.xlu0 %v1608
      %v1610 = vpop.xlane.xlu0 %1609
      %v1611 = vmax.f32 %v1466, %v1468
      %1612 = vmax.xlane.f32.xlu0 %v1611
      %v1613 = vpop.xlane.xlu0 %1612
      %v1614 = vmax.f32 %v1472, %v1474
      %1615 = vmax.xlane.f32.xlu0 %v1614
      %v1616 = vpop.xlane.xlu0 %1615
      %v1617 = vmax.f32 %v1476, %v1478
      %1618 = vmax.xlane.f32.xlu0 %v1617
      %v1619 = vpop.xlane.xlu0 %1618
      %v1620 = vmax.f32 %v1482, %v1484
      %1621 = vmax.xlane.f32.xlu0 %v1620
      %v1622 = vpop.xlane.xlu0 %1621
      %v1623 = vmax.f32 %v1486, %v1488
      %1624 = vmax.xlane.f32.xlu0 %v1623
      %v1625 = vpop.xlane.xlu0 %1624
      %v1626 = vmax.f32 %v1492, %v1494
      %1627 = vmax.xlane.f32.xlu0 %v1626
      %v1628 = vpop.xlane.xlu0 %1627
      %v1629 = vmax.f32 %v1496, %v1498
      %1630 = vmax.xlane.f32.xlu0 %v1629
      %v1631 = vpop.xlane.xlu0 %1630
      %v1632 = vmax.f32 %v1502, %v1504
      %1633 = vmax.xlane.f32.xlu0 %v1632
      %v1634 = vpop.xlane.xlu0 %1633
      %v1635 = vmax.f32 %v1506, %v1508
      %1636 = vmax.xlane.f32.xlu0 %v1635
      %v1637 = vpop.xlane.xlu0 %1636
      %v1638 = vmax.f32 %v1512, %v1514
      %1639 = vmax.xlane.f32.xlu0 %v1638
      %v1640 = vpop.xlane.xlu0 %1639
      %v1641 = vmax.f32 %v1516, %v1518
      %1642 = vmax.xlane.f32.xlu0 %v1641
      %v1643 = vpop.xlane.xlu0 %1642
      %v1644 = vmax.f32 %v1522, %v1524
      %1645 = vmax.xlane.f32.xlu0 %v1644
      %v1646 = vpop.xlane.xlu0 %1645
      %v1647 = vmax.f32 %v1526, %v1528
      %1648 = vmax.xlane.f32.xlu0 %v1647
      %v1649 = vpop.xlane.xlu0 %1648
      %v1650 = vmax.f32 %v1532, %v1534
      %1651 = vmax.xlane.f32.xlu0 %v1650
      %v1652 = vpop.xlane.xlu0 %1651
      %v1653 = vmax.f32 %v1536, %v1538
      %1654 = vmax.xlane.f32.xlu0 %v1653
      %v1655 = vpop.xlane.xlu0 %1654
      %v1656 = vmax.f32 %v1542, %v1544
      %1657 = vmax.xlane.f32.xlu0 %v1656
      %v1658 = vpop.xlane.xlu0 %1657
      %v1659 = vmax.f32 %v1546, %v1548
      %1660 = vmax.xlane.f32.xlu0 %v1659
      %v1661 = vpop.xlane.xlu0 %1660
      %v1662 = vmax.f32 %v1552, %v1554
      %1663 = vmax.xlane.f32.xlu0 %v1662
      %v1664 = vpop.xlane.xlu0 %1663
      %v1665 = vmax.f32 %v1556, %v1558
      %1666 = vmax.xlane.f32.xlu0 %v1665
      %v1667 = vpop.xlane.xlu0 %1666
      %v1668 = vmax.f32 %v1562, %v1564
      %1669 = vmax.xlane.f32.xlu0 %v1668
      %v1670 = vpop.xlane.xlu0 %1669
      %v1671 = vmax.f32 %v1566, %v1568
      %1672 = vmax.xlane.f32.xlu0 %v1671
      %v1673 = vpop.xlane.xlu0 %1672
      %v1674 = vmax.f32 %v1572, %v1574
      %1675 = vmax.xlane.f32.xlu0 %v1674
      %v1676 = vpop.xlane.xlu0 %1675
      %v1677 = vmax.f32 %v1576, %v1578
      %1678 = vmax.xlane.f32.xlu0 %v1677
      %v1679 = vpop.xlane.xlu0 %1678
      %v1680 = vmax.f32 %v1582, %v1584
      %1681 = vmax.xlane.f32.xlu0 %v1680
      %v1682 = vpop.xlane.xlu0 %1681
      %v1683 = vmax.f32 %v1586, %v1588
      %1684 = vmax.xlane.f32.xlu0 %v1683
      %v1685 = vpop.xlane.xlu0 %1684
      %v1686 = vsub.f32 %v1432, %v1592
      %v1687 = vsub.f32 %v1434, %v1592
      %v1688 = vsub.f32 %v1436, %v1595
      %v1689 = vsub.f32 %v1438, %v1595
      %v1690 = vsub.f32 %v1442, %v1598
      %v1691 = vsub.f32 %v1444, %v1598
      %v1692 = vsub.f32 %v1446, %v1601
      %v1693 = vsub.f32 %v1448, %v1601
      %v1694 = vsub.f32 %v1452, %v1604
      %v1695 = vsub.f32 %v1454, %v1604
      %v1696 = vsub.f32 %v1456, %v1607
      %v1697 = vsub.f32 %v1458, %v1607
      %v1698 = vsub.f32 %v1462, %v1610
      %v1699 = vsub.f32 %v1464, %v1610
      %v1700 = vsub.f32 %v1466, %v1613
      %v1701 = vsub.f32 %v1468, %v1613
      %v1702 = vsub.f32 %v1472, %v1616
      %v1703 = vsub.f32 %v1474, %v1616
      %v1704 = vsub.f32 %v1476, %v1619
      %v1705 = vsub.f32 %v1478, %v1619
      %v1706 = vsub.f32 %v1482, %v1622
      %v1707 = vsub.f32 %v1484, %v1622
      %v1708 = vsub.f32 %v1486, %v1625
      %v1709 = vsub.f32 %v1488, %v1625
      %v1710 = vsub.f32 %v1492, %v1628
      %v1711 = vsub.f32 %v1494, %v1628
      %v1712 = vsub.f32 %v1496, %v1631
      %v1713 = vsub.f32 %v1498, %v1631
      %v1714 = vsub.f32 %v1502, %v1634
      %v1715 = vsub.f32 %v1504, %v1634
      %v1716 = vsub.f32 %v1506, %v1637
      %v1717 = vsub.f32 %v1508, %v1637
      %v1718 = vsub.f32 %v1512, %v1640
      %v1719 = vsub.f32 %v1514, %v1640
      %v1720 = vsub.f32 %v1516, %v1643
      %v1721 = vsub.f32 %v1518, %v1643
      %v1722 = vsub.f32 %v1522, %v1646
      %v1723 = vsub.f32 %v1524, %v1646
      %v1724 = vsub.f32 %v1526, %v1649
      %v1725 = vsub.f32 %v1528, %v1649
      %v1726 = vsub.f32 %v1532, %v1652
      %v1727 = vsub.f32 %v1534, %v1652
      %v1728 = vsub.f32 %v1536, %v1655
      %v1729 = vsub.f32 %v1538, %v1655
      %v1730 = vsub.f32 %v1542, %v1658
      %v1731 = vsub.f32 %v1544, %v1658
      %v1732 = vsub.f32 %v1546, %v1661
      %v1733 = vsub.f32 %v1548, %v1661
      %v1734 = vsub.f32 %v1552, %v1664
      %v1735 = vsub.f32 %v1554, %v1664
      %v1736 = vsub.f32 %v1556, %v1667
      %v1737 = vsub.f32 %v1558, %v1667
      %v1738 = vsub.f32 %v1562, %v1670
      %v1739 = vsub.f32 %v1564, %v1670
      %v1740 = vsub.f32 %v1566, %v1673
      %v1741 = vsub.f32 %v1568, %v1673
      %v1742 = vsub.f32 %v1572, %v1676
      %v1743 = vsub.f32 %v1574, %v1676
      %v1744 = vsub.f32 %v1576, %v1679
      %v1745 = vsub.f32 %v1578, %v1679
      %v1746 = vsub.f32 %v1582, %v1682
      %v1747 = vsub.f32 %v1584, %v1682
      %v1748 = vsub.f32 %v1586, %v1685
      %v1749 = vsub.f32 %v1588, %v1685
      %v1750 = vmul.f32 %v1686, 1.442695
      %v1751 = vpow.pop %v1750
      %v1752 = vmul.f32 %v1687, 1.442695
      %v1753 = vpow.pop %v1752
      %v1754 = vmul.f32 %v1688, 1.442695
      %v1755 = vpow.pop %v1754
      %v1756 = vmul.f32 %v1689, 1.442695
      %v1757 = vpow.pop %v1756
      %v1758 = vmul.f32 %v1690, 1.442695
      %v1759 = vpow.pop %v1758
      %v1760 = vmul.f32 %v1691, 1.442695
      %v1761 = vpow.pop %v1760
      %v1762 = vmul.f32 %v1692, 1.442695
      %v1763 = vpow.pop %v1762
      %v1764 = vmul.f32 %v1693, 1.442695
      %v1765 = vpow.pop %v1764
      %v1766 = vmul.f32 %v1694, 1.442695
      %v1767 = vpow.pop %v1766
      %v1768 = vmul.f32 %v1695, 1.442695
      %v1769 = vpow.pop %v1768
      %v1770 = vmul.f32 %v1696, 1.442695
      %v1771 = vpow.pop %v1770
      %v1772 = vmul.f32 %v1697, 1.442695
      %v1773 = vpow.pop %v1772
      %v1774 = vmul.f32 %v1698, 1.442695
      %v1775 = vpow.pop %v1774
      %v1776 = vmul.f32 %v1699, 1.442695
      %v1777 = vpow.pop %v1776
      %v1778 = vmul.f32 %v1700, 1.442695
      %v1779 = vpow.pop %v1778
      %v1780 = vmul.f32 %v1701, 1.442695
      %v1781 = vpow.pop %v1780
      %v1782 = vmul.f32 %v1702, 1.442695
      %v1783 = vpow.pop %v1782
      %v1784 = vmul.f32 %v1703, 1.442695
      %v1785 = vpow.pop %v1784
      %v1786 = vmul.f32 %v1704, 1.442695
      %v1787 = vpow.pop %v1786
      %v1788 = vmul.f32 %v1705, 1.442695
      %v1789 = vpow.pop %v1788
      %v1790 = vmul.f32 %v1706, 1.442695
      %v1791 = vpow.pop %v1790
      %v1792 = vmul.f32 %v1707, 1.442695
      %v1793 = vpow.pop %v1792
      %v1794 = vmul.f32 %v1708, 1.442695
      %v1795 = vpow.pop %v1794
      %v1796 = vmul.f32 %v1709, 1.442695
      %v1797 = vpow.pop %v1796
      %v1798 = vmul.f32 %v1710, 1.442695
      %v1799 = vpow.pop %v1798
      %v1800 = vmul.f32 %v1711, 1.442695
      %v1801 = vpow.pop %v1800
      %v1802 = vmul.f32 %v1712, 1.442695
      %v1803 = vpow.pop %v1802
      %v1804 = vmul.f32 %v1713, 1.442695
      %v1805 = vpow.pop %v1804
      %v1806 = vmul.f32 %v1714, 1.442695
      %v1807 = vpow.pop %v1806
      %v1808 = vmul.f32 %v1715, 1.442695
      %v1809 = vpow.pop %v1808
      %v1810 = vmul.f32 %v1716, 1.442695
      %v1811 = vpow.pop %v1810
      %v1812 = vmul.f32 %v1717, 1.442695
      %v1813 = vpow.pop %v1812
      %v1814 = vmul.f32 %v1718, 1.442695
      %v1815 = vpow.pop %v1814
      %v1816 = vmul.f32 %v1719, 1.442695
      %v1817 = vpow.pop %v1816
      %v1818 = vmul.f32 %v1720, 1.442695
      %v1819 = vpow.pop %v1818
      %v1820 = vmul.f32 %v1721, 1.442695
      %v1821 = vpow.pop %v1820
      %v1822 = vmul.f32 %v1722, 1.442695
      %v1823 = vpow.pop %v1822
      %v1824 = vmul.f32 %v1723, 1.442695
      %v1825 = vpow.pop %v1824
      %v1826 = vmul.f32 %v1724, 1.442695
      %v1827 = vpow.pop %v1826
      %v1828 = vmul.f32 %v1725, 1.442695
      %v1829 = vpow.pop %v1828
      %v1830 = vmul.f32 %v1726, 1.442695
      %v1831 = vpow.pop %v1830
      %v1832 = vmul.f32 %v1727, 1.442695
      %v1833 = vpow.pop %v1832
      %v1834 = vmul.f32 %v1728, 1.442695
      %v1835 = vpow.pop %v1834
      %v1836 = vmul.f32 %v1729, 1.442695
      %v1837 = vpow.pop %v1836
      %v1838 = vmul.f32 %v1730, 1.442695
      %v1839 = vpow.pop %v1838
      %v1840 = vmul.f32 %v1731, 1.442695
      %v1841 = vpow.pop %v1840
      %v1842 = vmul.f32 %v1732, 1.442695
      %v1843 = vpow.pop %v1842
      %v1844 = vmul.f32 %v1733, 1.442695
      %v1845 = vpow.pop %v1844
      %v1846 = vmul.f32 %v1734, 1.442695
      %v1847 = vpow.pop %v1846
      %v1848 = vmul.f32 %v1735, 1.442695
      %v1849 = vpow.pop %v1848
      %v1850 = vmul.f32 %v1736, 1.442695
      %v1851 = vpow.pop %v1850
      %v1852 = vmul.f32 %v1737, 1.442695
      %v1853 = vpow.pop %v1852
      %v1854 = vmul.f32 %v1738, 1.442695
      %v1855 = vpow.pop %v1854
      %v1856 = vmul.f32 %v1739, 1.442695
      %v1857 = vpow.pop %v1856
      %v1858 = vmul.f32 %v1740, 1.442695
      %v1859 = vpow.pop %v1858
      %v1860 = vmul.f32 %v1741, 1.442695
      %v1861 = vpow.pop %v1860
      %v1862 = vmul.f32 %v1742, 1.442695
      %v1863 = vpow.pop %v1862
      %v1864 = vmul.f32 %v1743, 1.442695
      %v1865 = vpow.pop %v1864
      %v1866 = vmul.f32 %v1744, 1.442695
      %v1867 = vpow.pop %v1866
      %v1868 = vmul.f32 %v1745, 1.442695
      %v1869 = vpow.pop %v1868
      %v1870 = vmul.f32 %v1746, 1.442695
      %v1871 = vpow.pop %v1870
      %v1872 = vmul.f32 %v1747, 1.442695
      %v1873 = vpow.pop %v1872
      %v1874 = vmul.f32 %v1748, 1.442695
      %v1875 = vpow.pop %v1874
      %v1876 = vmul.f32 %v1749, 1.442695
      %v1877 = vpow.pop %v1876
      %v1878 = vadd.f32 %v1751, %v1753
      %1879 = vadd.xlane.f32.xlu0 %v1878
      %v1880 = vpop.xlane.xlu0 %1879
      %v1881 = vadd.f32 %v1755, %v1757
      %1882 = vadd.xlane.f32.xlu0 %v1881
      %v1883 = vpop.xlane.xlu0 %1882
      %v1884 = vadd.f32 %v1759, %v1761
      %1885 = vadd.xlane.f32.xlu0 %v1884
      %v1886 = vpop.xlane.xlu0 %1885
      %v1887 = vadd.f32 %v1763, %v1765
      %1888 = vadd.xlane.f32.xlu0 %v1887
      %v1889 = vpop.xlane.xlu0 %1888
      %v1890 = vadd.f32 %v1767, %v1769
      %1891 = vadd.xlane.f32.xlu0 %v1890
      %v1892 = vpop.xlane.xlu0 %1891
      %v1893 = vadd.f32 %v1771, %v1773
      %1894 = vadd.xlane.f32.xlu0 %v1893
      %v1895 = vpop.xlane.xlu0 %1894
      %v1896 = vadd.f32 %v1775, %v1777
      %1897 = vadd.xlane.f32.xlu0 %v1896
      %v1898 = vpop.xlane.xlu0 %1897
      %v1899 = vadd.f32 %v1779, %v1781
      %1900 = vadd.xlane.f32.xlu0 %v1899
      %v1901 = vpop.xlane.xlu0 %1900
      %v1902 = vadd.f32 %v1783, %v1785
      %1903 = vadd.xlane.f32.xlu0 %v1902
      %v1904 = vpop.xlane.xlu0 %1903
      %v1905 = vadd.f32 %v1787, %v1789
      %1906 = vadd.xlane.f32.xlu0 %v1905
      %v1907 = vpop.xlane.xlu0 %1906
      %v1908 = vadd.f32 %v1791, %v1793
      %1909 = vadd.xlane.f32.xlu0 %v1908
      %v1910 = vpop.xlane.xlu0 %1909
      %v1911 = vadd.f32 %v1795, %v1797
      %1912 = vadd.xlane.f32.xlu0 %v1911
      %v1913 = vpop.xlane.xlu0 %1912
      %v1914 = vadd.f32 %v1799, %v1801
      %1915 = vadd.xlane.f32.xlu0 %v1914
      %v1916 = vpop.xlane.xlu0 %1915
      %v1917 = vadd.f32 %v1803, %v1805
      %1918 = vadd.xlane.f32.xlu0 %v1917
      %v1919 = vpop.xlane.xlu0 %1918
      %v1920 = vadd.f32 %v1807, %v1809
      %1921 = vadd.xlane.f32.xlu0 %v1920
      %v1922 = vpop.xlane.xlu0 %1921
      %v1923 = vadd.f32 %v1811, %v1813
      %1924 = vadd.xlane.f32.xlu0 %v1923
      %v1925 = vpop.xlane.xlu0 %1924
      %v1926 = vadd.f32 %v1815, %v1817
      %1927 = vadd.xlane.f32.xlu0 %v1926
      %v1928 = vpop.xlane.xlu0 %1927
      %v1929 = vadd.f32 %v1819, %v1821
      %1930 = vadd.xlane.f32.xlu0 %v1929
      %v1931 = vpop.xlane.xlu0 %1930
      %v1932 = vadd.f32 %v1823, %v1825
      %1933 = vadd.xlane.f32.xlu0 %v1932
      %v1934 = vpop.xlane.xlu0 %1933
      %v1935 = vadd.f32 %v1827, %v1829
      %1936 = vadd.xlane.f32.xlu0 %v1935
      %v1937 = vpop.xlane.xlu0 %1936
      %v1938 = vadd.f32 %v1831, %v1833
      %1939 = vadd.xlane.f32.xlu0 %v1938
      %v1940 = vpop.xlane.xlu0 %1939
      %v1941 = vadd.f32 %v1835, %v1837
      %1942 = vadd.xlane.f32.xlu0 %v1941
      %v1943 = vpop.xlane.xlu0 %1942
      %v1944 = vadd.f32 %v1839, %v1841
      %1945 = vadd.xlane.f32.xlu0 %v1944
      %v1946 = vpop.xlane.xlu0 %1945
      %v1947 = vadd.f32 %v1843, %v1845
      %1948 = vadd.xlane.f32.xlu0 %v1947
      %v1949 = vpop.xlane.xlu0 %1948
      %v1950 = vadd.f32 %v1847, %v1849
      %1951 = vadd.xlane.f32.xlu0 %v1950
      %v1952 = vpop.xlane.xlu0 %1951
      %v1953 = vadd.f32 %v1851, %v1853
      %1954 = vadd.xlane.f32.xlu0 %v1953
      %v1955 = vpop.xlane.xlu0 %1954
      %v1956 = vadd.f32 %v1855, %v1857
      %1957 = vadd.xlane.f32.xlu0 %v1956
      %v1958 = vpop.xlane.xlu0 %1957
      %v1959 = vadd.f32 %v1859, %v1861
      %1960 = vadd.xlane.f32.xlu0 %v1959
      %v1961 = vpop.xlane.xlu0 %1960
      %v1962 = vadd.f32 %v1863, %v1865
      %1963 = vadd.xlane.f32.xlu0 %v1962
      %v1964 = vpop.xlane.xlu0 %1963
      %v1965 = vadd.f32 %v1867, %v1869
      %1966 = vadd.xlane.f32.xlu0 %v1965
      %v1967 = vpop.xlane.xlu0 %1966
      %v1968 = vadd.f32 %v1871, %v1873
      %1969 = vadd.xlane.f32.xlu0 %v1968
      %v1970 = vpop.xlane.xlu0 %1969
      %v1971 = vadd.f32 %v1875, %v1877
      %1972 = vadd.xlane.f32.xlu0 %v1971
      %v1973 = vpop.xlane.xlu0 %1972
      %v1974 = vrcp.pop %v1880
      %v1975 = vrcp.pop %v1883
      %v1976 = vrcp.pop %v1886
      %v1977 = vrcp.pop %v1889
      %v1978 = vrcp.pop %v1892
      %v1979 = vrcp.pop %v1895
      %v1980 = vrcp.pop %v1898
      %v1981 = vrcp.pop %v1901
      %v1982 = vrcp.pop %v1904
      %v1983 = vrcp.pop %v1907
      %v1984 = vrcp.pop %v1910
      %v1985 = vrcp.pop %v1913
      %v1986 = vrcp.pop %v1916
      %v1987 = vrcp.pop %v1919
      %v1988 = vrcp.pop %v1922
      %v1989 = vrcp.pop %v1925
      %v1990 = vrcp.pop %v1928
      %v1991 = vrcp.pop %v1931
      %v1992 = vrcp.pop %v1934
      %v1993 = vrcp.pop %v1937
      %v1994 = vrcp.pop %v1940
      %v1995 = vrcp.pop %v1943
      %v1996 = vrcp.pop %v1946
      %v1997 = vrcp.pop %v1949
      %v1998 = vrcp.pop %v1952
      %v1999 = vrcp.pop %v1955
      %v2000 = vrcp.pop %v1958
      %v2001 = vrcp.pop %v1961
      %v2002 = vrcp.pop %v1964
      %v2003 = vrcp.pop %v1967
      %v2004 = vrcp.pop %v1970
      %v2005 = vrcp.pop %v1973
      %v2006 = vmul.f32 %v1751, %v1974
      %v2007 = vmul.f32 %v1753, %v1974
      %v2008 = vmul.f32 %v1755, %v1975
      %v2009 = vmul.f32 %v1757, %v1975
      %v2010 = vmul.f32 %v1759, %v1976
      %v2011 = vmul.f32 %v1761, %v1976
      %v2012 = vmul.f32 %v1763, %v1977
      %v2013 = vmul.f32 %v1765, %v1977
      %v2014 = vmul.f32 %v1767, %v1978
      %v2015 = vmul.f32 %v1769, %v1978
      %v2016 = vmul.f32 %v1771, %v1979
      %v2017 = vmul.f32 %v1773, %v1979
      %v2018 = vmul.f32 %v1775, %v1980
      %v2019 = vmul.f32 %v1777, %v1980
      %v2020 = vmul.f32 %v1779, %v1981
      %v2021 = vmul.f32 %v1781, %v1981
      %v2022 = vmul.f32 %v1783, %v1982
      %v2023 = vmul.f32 %v1785, %v1982
      %v2024 = vmul.f32 %v1787, %v1983
      %v2025 = vmul.f32 %v1789, %v1983
      %v2026 = vmul.f32 %v1791, %v1984
      %v2027 = vmul.f32 %v1793, %v1984
      %v2028 = vmul.f32 %v1795, %v1985
      %v2029 = vmul.f32 %v1797, %v1985
      %v2030 = vmul.f32 %v1799, %v1986
      %v2031 = vmul.f32 %v1801, %v1986
      %v2032 = vmul.f32 %v1803, %v1987
      %v2033 = vmul.f32 %v1805, %v1987
      %v2034 = vmul.f32 %v1807, %v1988
      %v2035 = vmul.f32 %v1809, %v1988
      %v2036 = vmul.f32 %v1811, %v1989
      %v2037 = vmul.f32 %v1813, %v1989
      %v2038 = vmul.f32 %v1815, %v1990
      %v2039 = vmul.f32 %v1817, %v1990
      %v2040 = vmul.f32 %v1819, %v1991
      %v2041 = vmul.f32 %v1821, %v1991
      %v2042 = vmul.f32 %v1823, %v1992
      %v2043 = vmul.f32 %v1825, %v1992
      %v2044 = vmul.f32 %v1827, %v1993
      %v2045 = vmul.f32 %v1829, %v1993
      %v2046 = vmul.f32 %v1831, %v1994
      %v2047 = vmul.f32 %v1833, %v1994
      %v2048 = vmul.f32 %v1835, %v1995
      %v2049 = vmul.f32 %v1837, %v1995
      %v2050 = vmul.f32 %v1839, %v1996
      %v2051 = vmul.f32 %v1841, %v1996
      %v2052 = vmul.f32 %v1843, %v1997
      %v2053 = vmul.f32 %v1845, %v1997
      %v2054 = vmul.f32 %v1847, %v1998
      %v2055 = vmul.f32 %v1849, %v1998
      %v2056 = vmul.f32 %v1851, %v1999
      %v2057 = vmul.f32 %v1853, %v1999
      %v2058 = vmul.f32 %v1855, %v2000
      %v2059 = vmul.f32 %v1857, %v2000
      %v2060 = vmul.f32 %v1859, %v2001
      %v2061 = vmul.f32 %v1861, %v2001
      %v2062 = vmul.f32 %v1863, %v2002
      %v2063 = vmul.f32 %v1865, %v2002
      %v2064 = vmul.f32 %v1867, %v2003
      %v2065 = vmul.f32 %v1869, %v2003
      %v2066 = vmul.f32 %v1871, %v2004
      %v2067 = vmul.f32 %v1873, %v2004
      %v2068 = vmul.f32 %v1875, %v2005
      %v2069 = vmul.f32 %v1877, %v2005
      %v2070 = vpack.c.bf16 %v2008, %v2006
      %v2071 = vpack.c.bf16 %v2009, %v2007
      %v2072 = vpack.c.bf16 %v2012, %v2010
      %v2073 = vpack.c.bf16 %v2013, %v2011
      %v2074 = vpack.c.bf16 %v2016, %v2014
      %v2075 = vpack.c.bf16 %v2017, %v2015
      %v2076 = vpack.c.bf16 %v2020, %v2018
      %v2077 = vpack.c.bf16 %v2021, %v2019
      %v2078 = vpack.c.bf16 %v2024, %v2022
      %v2079 = vpack.c.bf16 %v2025, %v2023
      %v2080 = vpack.c.bf16 %v2028, %v2026
      %v2081 = vpack.c.bf16 %v2029, %v2027
      %v2082 = vpack.c.bf16 %v2032, %v2030
      %v2083 = vpack.c.bf16 %v2033, %v2031
      %v2084 = vpack.c.bf16 %v2036, %v2034
      %v2085 = vpack.c.bf16 %v2037, %v2035
      %v2086 = vpack.c.bf16 %v2040, %v2038
      %v2087 = vpack.c.bf16 %v2041, %v2039
      %v2088 = vpack.c.bf16 %v2044, %v2042
      %v2089 = vpack.c.bf16 %v2045, %v2043
      %v2090 = vpack.c.bf16 %v2048, %v2046
      %v2091 = vpack.c.bf16 %v2049, %v2047
      %v2092 = vpack.c.bf16 %v2052, %v2050
      %v2093 = vpack.c.bf16 %v2053, %v2051
      %v2094 = vpack.c.bf16 %v2056, %v2054
      %v2095 = vpack.c.bf16 %v2057, %v2055
      %v2096 = vpack.c.bf16 %v2060, %v2058
      %v2097 = vpack.c.bf16 %v2061, %v2059
      %v2098 = vpack.c.bf16 %v2064, %v2062
      %v2099 = vpack.c.bf16 %v2065, %v2063
      %v2100 = vpack.c.bf16 %v2068, %v2066
      %v2101 = vpack.c.bf16 %v2069, %v2067
      %2102 = vmatprep.subr.bf16.mxu0 0
      %2103 = vmatpush1.bf16.msra.mxu0 %v966
      %2104 = vmatprep.subr.bf16.mxu0 0
      %2105 = vmatpush1.bf16.msra.mxu0 %v967
      %2106 = vmatprep.subr.bf16.mxu0 0
      %2107 = vmatpush1.bf16.msra.mxu0 %v968
      %2108 = vmatprep.subr.bf16.mxu0 0
      %2109 = vmatpush1.bf16.msra.mxu0 %v969
      %2110 = vmatprep.subr.bf16.mxu0 0
      %2111 = vmatpush1.bf16.msra.mxu0 %v970
      %2112 = vmatprep.subr.bf16.mxu0 0
      %2113 = vmatpush1.bf16.msra.mxu0 %v971
      %2114 = vmatprep.subr.bf16.mxu0 0
      %2115 = vmatpush1.bf16.msra.mxu0 %v972
      %2116 = vmatprep.subr.bf16.mxu0 0
      %2117 = vmatpush1.bf16.msra.mxu0 %v973
      %2118 = vmatprep.subr.bf16.mxu0 0
      %2119 = vmatpush1.bf16.msra.mxu0 %v974
      %2120 = vmatprep.subr.bf16.mxu0 0
      %2121 = vmatpush1.bf16.msra.mxu0 %v975
      %2122 = vmatprep.subr.bf16.mxu0 0
      %2123 = vmatpush1.bf16.msra.mxu0 %v976
      %2124 = vmatprep.subr.bf16.mxu0 0
      %2125 = vmatpush1.bf16.msra.mxu0 %v977
      %2126 = vmatprep.subr.bf16.mxu0 0
      %2127 = vmatpush1.bf16.msra.mxu0 %v978
      %2128 = vmatprep.subr.bf16.mxu0 0
      %2129 = vmatpush1.bf16.msra.mxu0 %v979
      %2130 = vmatprep.subr.bf16.mxu0 0
      %2131 = vmatpush1.bf16.msra.mxu0 %v980
      %2132 = vmatprep.subr.bf16.mxu0 0
      %2133 = vmatpush1.bf16.msra.mxu0 %v981
      %2134 = vmatprep.mubr.bf16.mxu0 %v2071
      %2135 = vmatmul.mubr.bf16.gmra.mrb[0].mxu0 %v2070
      %v2136 = vpop.f32.mrb[0].mxu0
      %v2137 = vadd.f32 0.0, %v2136
      %v2138 = vpop.f32.mrb[0].mxu0
      %v2139 = vpop.f32.mrb[0].mxu0
      %v2140 = vadd.f32 0.0, %v2139
      %v2141 = vpop.f32.mrb[0].mxu0
      %2142 = vmatprep.mubr.bf16.mxu0 %v2073
      %2143 = vmatmul.mubr.bf16.gmra.mrb[0].mxu0 %v2072
      %v2144 = vpop.f32.mrb[0].mxu0
      %v2145 = vadd.f32 0.0, %v2144
      %v2146 = vpop.f32.mrb[0].mxu0
      %v2147 = vpop.f32.mrb[0].mxu0
      %v2148 = vadd.f32 0.0, %v2147
      %v2149 = vpop.f32.mrb[0].mxu0
      %2150 = vmatprep.mubr.bf16.mxu0 %v2075
      %2151 = vmatmul.mubr.bf16.gmra.mrb[0].mxu0 %v2074
      %v2152 = vpop.f32.mrb[0].mxu0
      %v2153 = vadd.f32 0.0, %v2152
      %v2154 = vpop.f32.mrb[0].mxu0
      %v2155 = vpop.f32.mrb[0].mxu0
      %v2156 = vadd.f32 0.0, %v2155
      %v2157 = vpop.f32.mrb[0].mxu0
      %2158 = vmatprep.mubr.bf16.mxu0 %v2077
      %2159 = vmatmul.mubr.bf16.gmra.mrb[0].mxu0 %v2076
      %v2160 = vpop.f32.mrb[0].mxu0
      %v2161 = vadd.f32 0.0, %v2160
      %v2162 = vpop.f32.mrb[0].mxu0
      %v2163 = vpop.f32.mrb[0].mxu0
      %v2164 = vadd.f32 0.0, %v2163
      %v2165 = vpop.f32.mrb[0].mxu0
      %2166 = vmatprep.mubr.bf16.mxu0 %v2079
      %2167 = vmatmul.mubr.bf16.gmra.mrb[0].mxu0 %v2078
      %v2168 = vpop.f32.mrb[0].mxu0
      %v2169 = vadd.f32 0.0, %v2168
      %v2170 = vpop.f32.mrb[0].mxu0
      %v2171 = vpop.f32.mrb[0].mxu0
      %v2172 = vadd.f32 0.0, %v2171
      %v2173 = vpop.f32.mrb[0].mxu0
      %2174 = vmatprep.mubr.bf16.mxu0 %v2081
      %2175 = vmatmul.mubr.bf16.gmra.mrb[0].mxu0 %v2080
      %v2176 = vpop.f32.mrb[0].mxu0
      %v2177 = vadd.f32 0.0, %v2176
      %v2178 = vpop.f32.mrb[0].mxu0
      %v2179 = vpop.f32.mrb[0].mxu0
      %v2180 = vadd.f32 0.0, %v2179
      %v2181 = vpop.f32.mrb[0].mxu0
      %2182 = vmatprep.mubr.bf16.mxu0 %v2083
      %2183 = vmatmul.mubr.bf16.gmra.mrb[0].mxu0 %v2082
      %v2184 = vpop.f32.mrb[0].mxu0
      %v2185 = vadd.f32 0.0, %v2184
      %v2186 = vpop.f32.mrb[0].mxu0
      %v2187 = vpop.f32.mrb[0].mxu0
      %v2188 = vadd.f32 0.0, %v2187
      %v2189 = vpop.f32.mrb[0].mxu0
      %2190 = vmatprep.mubr.bf16.mxu0 %v2085
      %2191 = vmatmul.mubr.bf16.gmra.mrb[0].mxu0 %v2084
      %v2192 = vpop.f32.mrb[0].mxu0
      %v2193 = vadd.f32 0.0, %v2192
      %v2194 = vpop.f32.mrb[0].mxu0
      %v2195 = vpop.f32.mrb[0].mxu0
      %v2196 = vadd.f32 0.0, %v2195
      %v2197 = vpop.f32.mrb[0].mxu0
      %2198 = vmatprep.mubr.bf16.mxu0 %v2087
      %2199 = vmatmul.mubr.bf16.gmra.mrb[0].mxu0 %v2086
      %v2200 = vpop.f32.mrb[0].mxu0
      %v2201 = vadd.f32 0.0, %v2200
      %v2202 = vpop.f32.mrb[0].mxu0
      %v2203 = vpop.f32.mrb[0].mxu0
      %v2204 = vadd.f32 0.0, %v2203
      %v2205 = vpop.f32.mrb[0].mxu0
      %2206 = vmatprep.mubr.bf16.mxu0 %v2089
      %2207 = vmatmul.mubr.bf16.gmra.mrb[0].mxu0 %v2088
      %v2208 = vpop.f32.mrb[0].mxu0
      %v2209 = vadd.f32 0.0, %v2208
      %v2210 = vpop.f32.mrb[0].mxu0
      %v2211 = vpop.f32.mrb[0].mxu0
      %v2212 = vadd.f32 0.0, %v2211
      %v2213 = vpop.f32.mrb[0].mxu0
      %2214 = vmatprep.mubr.bf16.mxu0 %v2091
      %2215 = vmatmul.mubr.bf16.gmra.mrb[0].mxu0 %v2090
      %v2216 = vpop.f32.mrb[0].mxu0
      %v2217 = vadd.f32 0.0, %v2216
      %v2218 = vpop.f32.mrb[0].mxu0
      %v2219 = vpop.f32.mrb[0].mxu0
      %v2220 = vadd.f32 0.0, %v2219
      %v2221 = vpop.f32.mrb[0].mxu0
      %2222 = vmatprep.mubr.bf16.mxu0 %v2093
      %2223 = vmatmul.mubr.bf16.gmra.mrb[0].mxu0 %v2092
      %v2224 = vpop.f32.mrb[0].mxu0
      %v2225 = vadd.f32 0.0, %v2224
      %v2226 = vpop.f32.mrb[0].mxu0
      %v2227 = vpop.f32.mrb[0].mxu0
      %v2228 = vadd.f32 0.0, %v2227
      %v2229 = vpop.f32.mrb[0].mxu0
      %2230 = vmatprep.mubr.bf16.mxu0 %v2095
      %2231 = vmatmul.mubr.bf16.gmra.mrb[0].mxu0 %v2094
      %v2232 = vpop.f32.mrb[0].mxu0
      %v2233 = vadd.f32 0.0, %v2232
      %v2234 = vpop.f32.mrb[0].mxu0
      %v2235 = vpop.f32.mrb[0].mxu0
      %v2236 = vadd.f32 0.0, %v2235
      %v2237 = vpop.f32.mrb[0].mxu0
      %2238 = vmatprep.mubr.bf16.mxu0 %v2097
      %2239 = vmatmul.mubr.bf16.gmra.mrb[0].mxu0 %v2096
      %v2240 = vpop.f32.mrb[0].mxu0
      %v2241 = vadd.f32 0.0, %v2240
      %v2242 = vpop.f32.mrb[0].mxu0
      %v2243 = vpop.f32.mrb[0].mxu0
      %v2244 = vadd.f32 0.0, %v2243
      %v2245 = vpop.f32.mrb[0].mxu0
      %2246 = vmatprep.mubr.bf16.mxu0 %v2099
      %2247 = vmatmul.mubr.bf16.gmra.mrb[0].mxu0 %v2098
      %v2248 = vpop.f32.mrb[0].mxu0
      %v2249 = vadd.f32 0.0, %v2248
      %v2250 = vpop.f32.mrb[0].mxu0
      %v2251 = vpop.f32.mrb[0].mxu0
      %v2252 = vadd.f32 0.0, %v2251
      %v2253 = vpop.f32.mrb[0].mxu0
      %2254 = vmatprep.mubr.bf16.mxu0 %v2101
      %2255 = vmatmul.mubr.bf16.gmra.mrb[0].mxu0 %v2100
      %v2256 = vpop.f32.mrb[0].mxu0
      %v2257 = vadd.f32 0.0, %v2256
      %v2258 = vpop.f32.mrb[0].mxu0
      %v2259 = vpop.f32.mrb[0].mxu0
      %v2260 = vadd.f32 0.0, %v2259
      %v2261 = vpop.f32.mrb[0].mxu0
      %2262 = vdwg.mxu0
      %s2263 = scalar_lea.vmem %s6, 128
      %v2264 = vld [vmem:[%s2263] sm:$0xf]
      %v2265 = vld [vmem:[%s2263 + $0x4] sm:$0xf]
      %v2266 = vld [vmem:[%s2263 + $0x8] sm:$0xf]
      %v2267 = vld [vmem:[%s2263 + $0xc] sm:$0xf]
      %v2268 = vld [vmem:[%s2263 + $0x10] sm:$0xf]
      %v2269 = vld [vmem:[%s2263 + $0x14] sm:$0xf]
      %v2270 = vld [vmem:[%s2263 + $0x18] sm:$0xf]
      %v2271 = vld [vmem:[%s2263 + $0x1c] sm:$0xf]
      %v2272 = vld [vmem:[%s2263 + $0x20] sm:$0xf]
      %v2273 = vld [vmem:[%s2263 + $0x24] sm:$0xf]
      %v2274 = vld [vmem:[%s2263 + $0x28] sm:$0xf]
      %v2275 = vld [vmem:[%s2263 + $0x2c] sm:$0xf]
      %v2276 = vld [vmem:[%s2263 + $0x30] sm:$0xf]
      %v2277 = vld [vmem:[%s2263 + $0x34] sm:$0xf]
      %v2278 = vld [vmem:[%s2263 + $0x38] sm:$0xf]
      %v2279 = vld [vmem:[%s2263 + $0x3c] sm:$0xf]
      %v2280 = vld [vmem:[%s2263 + $0x40] sm:$0xf]
      %v2281 = vld [vmem:[%s2263 + $0x44] sm:$0xf]
      %v2282 = vld [vmem:[%s2263 + $0x48] sm:$0xf]
      %v2283 = vld [vmem:[%s2263 + $0x4c] sm:$0xf]
      %v2284 = vld [vmem:[%s2263 + $0x50] sm:$0xf]
      %v2285 = vld [vmem:[%s2263 + $0x54] sm:$0xf]
      %v2286 = vld [vmem:[%s2263 + $0x58] sm:$0xf]
      %v2287 = vld [vmem:[%s2263 + $0x5c] sm:$0xf]
      %v2288 = vld [vmem:[%s2263 + $0x60] sm:$0xf]
      %v2289 = vld [vmem:[%s2263 + $0x64] sm:$0xf]
      %v2290 = vld [vmem:[%s2263 + $0x68] sm:$0xf]
      %v2291 = vld [vmem:[%s2263 + $0x6c] sm:$0xf]
      %v2292 = vld [vmem:[%s2263 + $0x70] sm:$0xf]
      %v2293 = vld [vmem:[%s2263 + $0x74] sm:$0xf]
      %v2294 = vld [vmem:[%s2263 + $0x78] sm:$0xf]
      %v2295 = vld [vmem:[%s2263 + $0x7c] sm:$0xf]
      %v2328 = vunpack.c.l.b16 %v2264
      %v2329 = vunpack.c.l.b16 %v2265
      %v2330 = vunpack.c.l.b16 %v2266
      %v2331 = vunpack.c.l.b16 %v2267
      %v2332 = vunpack.c.l.b16 %v2268
      %v2333 = vunpack.c.l.b16 %v2269
      %v2334 = vunpack.c.l.b16 %v2270
      %v2335 = vunpack.c.l.b16 %v2271
      %v2336 = vunpack.c.l.b16 %v2272
      %v2337 = vunpack.c.l.b16 %v2273
      %v2338 = vunpack.c.l.b16 %v2274
      %v2339 = vunpack.c.l.b16 %v2275
      %v2340 = vunpack.c.l.b16 %v2276
      %v2341 = vunpack.c.l.b16 %v2277
      %v2342 = vunpack.c.l.b16 %v2278
      %v2343 = vunpack.c.l.b16 %v2279
      %v2344 = vunpack.c.l.b16 %v2280
      %v2345 = vunpack.c.l.b16 %v2281
      %v2346 = vunpack.c.l.b16 %v2282
      %v2347 = vunpack.c.l.b16 %v2283
      %v2348 = vunpack.c.l.b16 %v2284
      %v2349 = vunpack.c.l.b16 %v2285
      %v2350 = vunpack.c.l.b16 %v2286
      %v2351 = vunpack.c.l.b16 %v2287
      %v2352 = vunpack.c.l.b16 %v2288
      %v2353 = vunpack.c.l.b16 %v2289
      %v2354 = vunpack.c.l.b16 %v2290
      %v2355 = vunpack.c.l.b16 %v2291
      %v2356 = vunpack.c.l.b16 %v2292
      %v2357 = vunpack.c.l.b16 %v2293
      %v2358 = vunpack.c.l.b16 %v2294
      %v2359 = vunpack.c.l.b16 %v2295
      %v2360 = vpack.c.b16 %v2329, %v2328
      %v2361 = vpack.c.b16 %v2331, %v2330
      %v2362 = vpack.c.b16 %v2333, %v2332
      %v2363 = vpack.c.b16 %v2335, %v2334
      %v2364 = vpack.c.b16 %v2337, %v2336
      %v2365 = vpack.c.b16 %v2339, %v2338
      %v2366 = vpack.c.b16 %v2341, %v2340
      %v2367 = vpack.c.b16 %v2343, %v2342
      %v2368 = vpack.c.b16 %v2345, %v2344
      %v2369 = vpack.c.b16 %v2347, %v2346
      %v2370 = vpack.c.b16 %v2349, %v2348
      %v2371 = vpack.c.b16 %v2351, %v2350
      %v2372 = vpack.c.b16 %v2353, %v2352
      %v2373 = vpack.c.b16 %v2355, %v2354
      %v2374 = vpack.c.b16 %v2357, %v2356
      %v2375 = vpack.c.b16 %v2359, %v2358
      %v2378 = vrot.slane %v413, 4
      %v2379 = vrot.slane %v414, 4
      %v2381 = vsel %vm1094, %v2360, 0
      %v2384 = vsel %vm1094, %v2361, 0
      %v2387 = vsel %vm1094, %v2362, 0
      %v2390 = vsel %vm1094, %v2363, 0
      %v2393 = vsel %vm1094, %v2364, 0
      %v2396 = vsel %vm1094, %v2365, 0
      %v2399 = vsel %vm1094, %v2366, 0
      %v2402 = vsel %vm1094, %v2367, 0
      %v2405 = vsel %vm1094, %v2368, 0
      %v2408 = vsel %vm1094, %v2369, 0
      %v2411 = vsel %vm1094, %v2370, 0
      %v2414 = vsel %vm1094, %v2371, 0
      %v2417 = vsel %vm1094, %v2372, 0
      %v2420 = vsel %vm1094, %v2373, 0
      %v2423 = vsel %vm1094, %v2374, 0
      %v2426 = vsel %vm1094, %v2375, 0
      %v2429 = vsel %vm1143, %v2378, 0
      %v2432 = vsel %vm1143, %v2379, 0
      %2434 = vmatprep.subr.bf16.mxu0 %v2432
      %2435 = vmatpush1.bf16.msra.mxu0 %v2429
      %2436 = vmatprep.subr.bf16.mxu0 0
      %2437 = vmatpush1.bf16.msra.mxu0 0
      %2438 = vmatprep.subr.bf16.mxu0 0
      %2439 = vmatpush1.bf16.msra.mxu0 0
      %2440 = vmatprep.subr.bf16.mxu0 0
      %2441 = vmatpush1.bf16.msra.mxu0 0
      %2442 = vmatprep.subr.bf16.mxu0 0
      %2443 = vmatpush1.bf16.msra.mxu0 0
      %2444 = vmatprep.subr.bf16.mxu0 0
      %2445 = vmatpush1.bf16.msra.mxu0 0
      %2446 = vmatprep.subr.bf16.mxu0 0
      %2447 = vmatpush1.bf16.msra.mxu0 0
      %2448 = vmatprep.subr.bf16.mxu0 0
      %2449 = vmatpush1.bf16.msra.mxu0 0
      %2450 = vmatprep.subr.bf16.mxu0 0
      %2451 = vmatpush1.bf16.msra.mxu0 0
      %2452 = vmatprep.subr.bf16.mxu0 0
      %2453 = vmatpush1.bf16.msra.mxu0 0
      %2454 = vmatprep.subr.bf16.mxu0 0
      %2455 = vmatpush1.bf16.msra.mxu0 0
      %2456 = vmatprep.subr.bf16.mxu0 0
      %2457 = vmatpush1.bf16.msra.mxu0 0
      %2458 = vmatprep.subr.bf16.mxu0 0
      %2459 = vmatpush1.bf16.msra.mxu0 0
      %2460 = vmatprep.subr.bf16.mxu0 0
      %2461 = vmatpush1.bf16.msra.mxu0 0
      %2462 = vmatprep.subr.bf16.mxu0 0
      %2463 = vmatpush1.bf16.msra.mxu0 0
      %2464 = vmatprep.subr.bf16.mxu0 0
      %2465 = vmatpush1.bf16.msra.mxu0 0
      %2466 = vmatprep.mubr.bf16.mxu0 0
      %2467 = vmatmul.mubr.bf16.gmra.mrb[0].mxu0 %v2381
      %v2468 = vpop.f32.mrb[0].mxu0
      %v2469 = vadd.f32 0.0, %v2468
      %v2470 = vpop.f32.mrb[0].mxu0
      %v2471 = vadd.f32 0.0, %v2470
      %v2472 = vpop.f32.mrb[0].mxu0
      %v2473 = vadd.f32 0.0, %v2472
      %v2474 = vpop.f32.mrb[0].mxu0
      %v2475 = vadd.f32 0.0, %v2474
      %2476 = vmatprep.mubr.bf16.mxu0 0
      %2477 = vmatmul.mubr.bf16.gmra.mrb[0].mxu0 %v2384
      %v2478 = vpop.f32.mrb[0].mxu0
      %v2479 = vadd.f32 0.0, %v2478
      %v2480 = vpop.f32.mrb[0].mxu0
      %v2481 = vadd.f32 0.0, %v2480
      %v2482 = vpop.f32.mrb[0].mxu0
      %v2483 = vadd.f32 0.0, %v2482
      %v2484 = vpop.f32.mrb[0].mxu0
      %v2485 = vadd.f32 0.0, %v2484
      %2486 = vmatprep.mubr.bf16.mxu0 0
      %2487 = vmatmul.mubr.bf16.gmra.mrb[0].mxu0 %v2387
      %v2488 = vpop.f32.mrb[0].mxu0
      %v2489 = vadd.f32 0.0, %v2488
      %v2490 = vpop.f32.mrb[0].mxu0
      %v2491 = vadd.f32 0.0, %v2490
      %v2492 = vpop.f32.mrb[0].mxu0
      %v2493 = vadd.f32 0.0, %v2492
      %v2494 = vpop.f32.mrb[0].mxu0
      %v2495 = vadd.f32 0.0, %v2494
      %2496 = vmatprep.mubr.bf16.mxu0 0
      %2497 = vmatmul.mubr.bf16.gmra.mrb[0].mxu0 %v2390
      %v2498 = vpop.f32.mrb[0].mxu0
      %v2499 = vadd.f32 0.0, %v2498
      %v2500 = vpop.f32.mrb[0].mxu0
      %v2501 = vadd.f32 0.0, %v2500
      %v2502 = vpop.f32.mrb[0].mxu0
      %v2503 = vadd.f32 0.0, %v2502
      %v2504 = vpop.f32.mrb[0].mxu0
      %v2505 = vadd.f32 0.0, %v2504
      %2506 = vmatprep.mubr.bf16.mxu0 0
      %2507 = vmatmul.mubr.bf16.gmra.mrb[0].mxu0 %v2393
      %v2508 = vpop.f32.mrb[0].mxu0
      %v2509 = vadd.f32 0.0, %v2508
      %v2510 = vpop.f32.mrb[0].mxu0
      %v2511 = vadd.f32 0.0, %v2510
      %v2512 = vpop.f32.mrb[0].mxu0
      %v2513 = vadd.f32 0.0, %v2512
      %v2514 = vpop.f32.mrb[0].mxu0
      %v2515 = vadd.f32 0.0, %v2514
      %2516 = vmatprep.mubr.bf16.mxu0 0
      %2517 = vmatmul.mubr.bf16.gmra.mrb[0].mxu0 %v2396
      %v2518 = vpop.f32.mrb[0].mxu0
      %v2519 = vadd.f32 0.0, %v2518
      %v2520 = vpop.f32.mrb[0].mxu0
      %v2521 = vadd.f32 0.0, %v2520
      %v2522 = vpop.f32.mrb[0].mxu0
      %v2523 = vadd.f32 0.0, %v2522
      %v2524 = vpop.f32.mrb[0].mxu0
      %v2525 = vadd.f32 0.0, %v2524
      %2526 = vmatprep.mubr.bf16.mxu0 0
      %2527 = vmatmul.mubr.bf16.gmra.mrb[0].mxu0 %v2399
      %v2528 = vpop.f32.mrb[0].mxu0
      %v2529 = vadd.f32 0.0, %v2528
      %v2530 = vpop.f32.mrb[0].mxu0
      %v2531 = vadd.f32 0.0, %v2530
      %v2532 = vpop.f32.mrb[0].mxu0
      %v2533 = vadd.f32 0.0, %v2532
      %v2534 = vpop.f32.mrb[0].mxu0
      %v2535 = vadd.f32 0.0, %v2534
      %2536 = vmatprep.mubr.bf16.mxu0 0
      %2537 = vmatmul.mubr.bf16.gmra.mrb[0].mxu0 %v2402
      %v2538 = vpop.f32.mrb[0].mxu0
      %v2539 = vadd.f32 0.0, %v2538
      %v2540 = vpop.f32.mrb[0].mxu0
      %v2541 = vadd.f32 0.0, %v2540
      %v2542 = vpop.f32.mrb[0].mxu0
      %v2543 = vadd.f32 0.0, %v2542
      %v2544 = vpop.f32.mrb[0].mxu0
      %v2545 = vadd.f32 0.0, %v2544
      %2546 = vmatprep.mubr.bf16.mxu0 0
      %2547 = vmatmul.mubr.bf16.gmra.mrb[0].mxu0 %v2405
      %v2548 = vpop.f32.mrb[0].mxu0
      %v2549 = vadd.f32 0.0, %v2548
      %v2550 = vpop.f32.mrb[0].mxu0
      %v2551 = vadd.f32 0.0, %v2550
      %v2552 = vpop.f32.mrb[0].mxu0
      %v2553 = vadd.f32 0.0, %v2552
      %v2554 = vpop.f32.mrb[0].mxu0
      %v2555 = vadd.f32 0.0, %v2554
      %2556 = vmatprep.mubr.bf16.mxu0 0
      %2557 = vmatmul.mubr.bf16.gmra.mrb[0].mxu0 %v2408
      %v2558 = vpop.f32.mrb[0].mxu0
      %v2559 = vadd.f32 0.0, %v2558
      %v2560 = vpop.f32.mrb[0].mxu0
      %v2561 = vadd.f32 0.0, %v2560
      %v2562 = vpop.f32.mrb[0].mxu0
      %v2563 = vadd.f32 0.0, %v2562
      %v2564 = vpop.f32.mrb[0].mxu0
      %v2565 = vadd.f32 0.0, %v2564
      %2566 = vmatprep.mubr.bf16.mxu0 0
      %2567 = vmatmul.mubr.bf16.gmra.mrb[0].mxu0 %v2411
      %v2568 = vpop.f32.mrb[0].mxu0
      %v2569 = vadd.f32 0.0, %v2568
      %v2570 = vpop.f32.mrb[0].mxu0
      %v2571 = vadd.f32 0.0, %v2570
      %v2572 = vpop.f32.mrb[0].mxu0
      %v2573 = vadd.f32 0.0, %v2572
      %v2574 = vpop.f32.mrb[0].mxu0
      %v2575 = vadd.f32 0.0, %v2574
      %2576 = vmatprep.mubr.bf16.mxu0 0
      %2577 = vmatmul.mubr.bf16.gmra.mrb[0].mxu0 %v2414
      %v2578 = vpop.f32.mrb[0].mxu0
      %v2579 = vadd.f32 0.0, %v2578
      %v2580 = vpop.f32.mrb[0].mxu0
      %v2581 = vadd.f32 0.0, %v2580
      %v2582 = vpop.f32.mrb[0].mxu0
      %v2583 = vadd.f32 0.0, %v2582
      %v2584 = vpop.f32.mrb[0].mxu0
      %v2585 = vadd.f32 0.0, %v2584
      %2586 = vmatprep.mubr.bf16.mxu0 0
      %2587 = vmatmul.mubr.bf16.gmra.mrb[0].mxu0 %v2417
      %v2588 = vpop.f32.mrb[0].mxu0
      %v2589 = vadd.f32 0.0, %v2588
      %v2590 = vpop.f32.mrb[0].mxu0
      %v2591 = vadd.f32 0.0, %v2590
      %v2592 = vpop.f32.mrb[0].mxu0
      %v2593 = vadd.f32 0.0, %v2592
      %v2594 = vpop.f32.mrb[0].mxu0
      %v2595 = vadd.f32 0.0, %v2594
      %2596 = vmatprep.mubr.bf16.mxu0 0
      %2597 = vmatmul.mubr.bf16.gmra.mrb[0].mxu0 %v2420
      %v2598 = vpop.f32.mrb[0].mxu0
      %v2599 = vadd.f32 0.0, %v2598
      %v2600 = vpop.f32.mrb[0].mxu0
      %v2601 = vadd.f32 0.0, %v2600
      %v2602 = vpop.f32.mrb[0].mxu0
      %v2603 = vadd.f32 0.0, %v2602
      %v2604 = vpop.f32.mrb[0].mxu0
      %v2605 = vadd.f32 0.0, %v2604
      %2606 = vmatprep.mubr.bf16.mxu0 0
      %2607 = vmatmul.mubr.bf16.gmra.mrb[0].mxu0 %v2423
      %v2608 = vpop.f32.mrb[0].mxu0
      %v2609 = vadd.f32 0.0, %v2608
      %v2610 = vpop.f32.mrb[0].mxu0
      %v2611 = vadd.f32 0.0, %v2610
      %v2612 = vpop.f32.mrb[0].mxu0
      %v2613 = vadd.f32 0.0, %v2612
      %v2614 = vpop.f32.mrb[0].mxu0
      %v2615 = vadd.f32 0.0, %v2614
      %2616 = vmatprep.mubr.bf16.mxu0 0
      %2617 = vmatmul.mubr.bf16.gmra.mrb[0].mxu0 %v2426
      %v2618 = vpop.f32.mrb[0].mxu0
      %v2619 = vadd.f32 0.0, %v2618
      %v2620 = vpop.f32.mrb[0].mxu0
      %v2621 = vadd.f32 0.0, %v2620
      %v2622 = vpop.f32.mrb[0].mxu0
      %v2623 = vadd.f32 0.0, %v2622
      %v2624 = vpop.f32.mrb[0].mxu0
      %v2625 = vadd.f32 0.0, %v2624
      %2626 = vdwg.mxu0
      %2643 = vrot.lane.b32.xlu0 %v774, 120
      %v2644 = vpop.permute.xlu0 %2643
      %2645 = vrot.lane.b32.xlu0 %v775, 120
      %v2646 = vpop.permute.xlu0 %2645
      %2647 = vrot.lane.b32.xlu0 %v776, 120
      %v2648 = vpop.permute.xlu0 %2647
      %2649 = vrot.lane.b32.xlu0 %v777, 120
      %v2650 = vpop.permute.xlu0 %2649
      %2651 = vrot.lane.b32.xlu0 %v778, 120
      %v2652 = vpop.permute.xlu0 %2651
      %2653 = vrot.lane.b32.xlu0 %v779, 120
      %v2654 = vpop.permute.xlu0 %2653
      %2655 = vrot.lane.b32.xlu0 %v780, 120
      %v2656 = vpop.permute.xlu0 %2655
      %2657 = vrot.lane.b32.xlu0 %v781, 120
      %v2658 = vpop.permute.xlu0 %2657
      %2659 = vrot.lane.b32.xlu0 %v782, 120
      %v2660 = vpop.permute.xlu0 %2659
      %2661 = vrot.lane.b32.xlu0 %v783, 120
      %v2662 = vpop.permute.xlu0 %2661
      %2663 = vrot.lane.b32.xlu0 %v784, 120
      %v2664 = vpop.permute.xlu0 %2663
      %2665 = vrot.lane.b32.xlu0 %v785, 120
      %v2666 = vpop.permute.xlu0 %2665
      %2667 = vrot.lane.b32.xlu0 %v786, 120
      %v2668 = vpop.permute.xlu0 %2667
      %2669 = vrot.lane.b32.xlu0 %v787, 120
      %v2670 = vpop.permute.xlu0 %2669
      %2671 = vrot.lane.b32.xlu0 %v788, 120
      %v2672 = vpop.permute.xlu0 %2671
      %2673 = vrot.lane.b32.xlu0 %v789, 120
      %v2674 = vpop.permute.xlu0 %2673
      %v2677 = vrot.slane %v468, 4
      %v2678 = vrot.slane %v469, 4
      %v2680 = vsel %vm1094, %v2644, 0
      %v2683 = vsel %vm1094, %v2646, 0
      %v2686 = vsel %vm1094, %v2648, 0
      %v2689 = vsel %vm1094, %v2650, 0
      %v2692 = vsel %vm1094, %v2652, 0
      %v2695 = vsel %vm1094, %v2654, 0
      %v2698 = vsel %vm1094, %v2656, 0
      %v2701 = vsel %vm1094, %v2658, 0
      %v2704 = vsel %vm1094, %v2660, 0
      %v2707 = vsel %vm1094, %v2662, 0
      %v2710 = vsel %vm1094, %v2664, 0
      %v2713 = vsel %vm1094, %v2666, 0
      %v2716 = vsel %vm1094, %v2668, 0
      %v2719 = vsel %vm1094, %v2670, 0
      %v2722 = vsel %vm1094, %v2672, 0
      %v2725 = vsel %vm1094, %v2674, 0
      %v2728 = vsel %vm1143, %v2677, 0
      %v2731 = vsel %vm1143, %v2678, 0
      %2733 = vmatprep.subr.bf16.mxu0 %v2731
      %2734 = vmatpush1.bf16.msra.mxu0 %v2728
      %2735 = vmatprep.subr.bf16.mxu0 0
      %2736 = vmatpush1.bf16.msra.mxu0 0
      %2737 = vmatprep.subr.bf16.mxu0 0
      %2738 = vmatpush1.bf16.msra.mxu0 0
      %2739 = vmatprep.subr.bf16.mxu0 0
      %2740 = vmatpush1.bf16.msra.mxu0 0
      %2741 = vmatprep.subr.bf16.mxu0 0
      %2742 = vmatpush1.bf16.msra.mxu0 0
      %2743 = vmatprep.subr.bf16.mxu0 0
      %2744 = vmatpush1.bf16.msra.mxu0 0
      %2745 = vmatprep.subr.bf16.mxu0 0
      %2746 = vmatpush1.bf16.msra.mxu0 0
      %2747 = vmatprep.subr.bf16.mxu0 0
      %2748 = vmatpush1.bf16.msra.mxu0 0
      %2749 = vmatprep.subr.bf16.mxu0 0
      %2750 = vmatpush1.bf16.msra.mxu0 0
      %2751 = vmatprep.subr.bf16.mxu0 0
      %2752 = vmatpush1.bf16.msra.mxu0 0
      %2753 = vmatprep.subr.bf16.mxu0 0
      %2754 = vmatpush1.bf16.msra.mxu0 0
      %2755 = vmatprep.subr.bf16.mxu0 0
      %2756 = vmatpush1.bf16.msra.mxu0 0
      %2757 = vmatprep.subr.bf16.mxu0 0
      %2758 = vmatpush1.bf16.msra.mxu0 0
      %2759 = vmatprep.subr.bf16.mxu0 0
      %2760 = vmatpush1.bf16.msra.mxu0 0
      %2761 = vmatprep.subr.bf16.mxu0 0
      %2762 = vmatpush1.bf16.msra.mxu0 0
      %2763 = vmatprep.subr.bf16.mxu0 0
      %2764 = vmatpush1.bf16.msra.mxu0 0
      %2765 = vmatprep.mubr.bf16.mxu0 0
      %2766 = vmatmul.mubr.bf16.gmra.mrb[0].mxu0 %v2680
      %v2767 = vpop.f32.mrb[0].mxu0
      %v2768 = vadd.f32 %v2469, %v2767
      %v2769 = vpop.f32.mrb[0].mxu0
      %v2770 = vadd.f32 %v2471, %v2769
      %v2771 = vpop.f32.mrb[0].mxu0
      %v2772 = vadd.f32 %v2473, %v2771
      %v2773 = vpop.f32.mrb[0].mxu0
      %v2774 = vadd.f32 %v2475, %v2773
      %2775 = vmatprep.mubr.bf16.mxu0 0
      %2776 = vmatmul.mubr.bf16.gmra.mrb[0].mxu0 %v2683
      %v2777 = vpop.f32.mrb[0].mxu0
      %v2778 = vadd.f32 %v2479, %v2777
      %v2779 = vpop.f32.mrb[0].mxu0
      %v2780 = vadd.f32 %v2481, %v2779
      %v2781 = vpop.f32.mrb[0].mxu0
      %v2782 = vadd.f32 %v2483, %v2781
      %v2783 = vpop.f32.mrb[0].mxu0
      %v2784 = vadd.f32 %v2485, %v2783
      %2785 = vmatprep.mubr.bf16.mxu0 0
      %2786 = vmatmul.mubr.bf16.gmra.mrb[0].mxu0 %v2686
      %v2787 = vpop.f32.mrb[0].mxu0
      %v2788 = vadd.f32 %v2489, %v2787
      %v2789 = vpop.f32.mrb[0].mxu0
      %v2790 = vadd.f32 %v2491, %v2789
      %v2791 = vpop.f32.mrb[0].mxu0
      %v2792 = vadd.f32 %v2493, %v2791
      %v2793 = vpop.f32.mrb[0].mxu0
      %v2794 = vadd.f32 %v2495, %v2793
      %2795 = vmatprep.mubr.bf16.mxu0 0
      %2796 = vmatmul.mubr.bf16.gmra.mrb[0].mxu0 %v2689
      %v2797 = vpop.f32.mrb[0].mxu0
      %v2798 = vadd.f32 %v2499, %v2797
      %v2799 = vpop.f32.mrb[0].mxu0
      %v2800 = vadd.f32 %v2501, %v2799
      %v2801 = vpop.f32.mrb[0].mxu0
      %v2802 = vadd.f32 %v2503, %v2801
      %v2803 = vpop.f32.mrb[0].mxu0
      %v2804 = vadd.f32 %v2505, %v2803
      %2805 = vmatprep.mubr.bf16.mxu0 0
      %2806 = vmatmul.mubr.bf16.gmra.mrb[0].mxu0 %v2692
      %v2807 = vpop.f32.mrb[0].mxu0
      %v2808 = vadd.f32 %v2509, %v2807
      %v2809 = vpop.f32.mrb[0].mxu0
      %v2810 = vadd.f32 %v2511, %v2809
      %v2811 = vpop.f32.mrb[0].mxu0
      %v2812 = vadd.f32 %v2513, %v2811
      %v2813 = vpop.f32.mrb[0].mxu0
      %v2814 = vadd.f32 %v2515, %v2813
      %2815 = vmatprep.mubr.bf16.mxu0 0
      %2816 = vmatmul.mubr.bf16.gmra.mrb[0].mxu0 %v2695
      %v2817 = vpop.f32.mrb[0].mxu0
      %v2818 = vadd.f32 %v2519, %v2817
      %v2819 = vpop.f32.mrb[0].mxu0
      %v2820 = vadd.f32 %v2521, %v2819
      %v2821 = vpop.f32.mrb[0].mxu0
      %v2822 = vadd.f32 %v2523, %v2821
      %v2823 = vpop.f32.mrb[0].mxu0
      %v2824 = vadd.f32 %v2525, %v2823
      %2825 = vmatprep.mubr.bf16.mxu0 0
      %2826 = vmatmul.mubr.bf16.gmra.mrb[0].mxu0 %v2698
      %v2827 = vpop.f32.mrb[0].mxu0
      %v2828 = vadd.f32 %v2529, %v2827
      %v2829 = vpop.f32.mrb[0].mxu0
      %v2830 = vadd.f32 %v2531, %v2829
      %v2831 = vpop.f32.mrb[0].mxu0
      %v2832 = vadd.f32 %v2533, %v2831
      %v2833 = vpop.f32.mrb[0].mxu0
      %v2834 = vadd.f32 %v2535, %v2833
      %2835 = vmatprep.mubr.bf16.mxu0 0
      %2836 = vmatmul.mubr.bf16.gmra.mrb[0].mxu0 %v2701
      %v2837 = vpop.f32.mrb[0].mxu0
      %v2838 = vadd.f32 %v2539, %v2837
      %v2839 = vpop.f32.mrb[0].mxu0
      %v2840 = vadd.f32 %v2541, %v2839
      %v2841 = vpop.f32.mrb[0].mxu0
      %v2842 = vadd.f32 %v2543, %v2841
      %v2843 = vpop.f32.mrb[0].mxu0
      %v2844 = vadd.f32 %v2545, %v2843
      %2845 = vmatprep.mubr.bf16.mxu0 0
      %2846 = vmatmul.mubr.bf16.gmra.mrb[0].mxu0 %v2704
      %v2847 = vpop.f32.mrb[0].mxu0
      %v2848 = vadd.f32 %v2549, %v2847
      %v2849 = vpop.f32.mrb[0].mxu0
      %v2850 = vadd.f32 %v2551, %v2849
      %v2851 = vpop.f32.mrb[0].mxu0
      %v2852 = vadd.f32 %v2553, %v2851
      %v2853 = vpop.f32.mrb[0].mxu0
      %v2854 = vadd.f32 %v2555, %v2853
      %2855 = vmatprep.mubr.bf16.mxu0 0
      %2856 = vmatmul.mubr.bf16.gmra.mrb[0].mxu0 %v2707
      %v2857 = vpop.f32.mrb[0].mxu0
      %v2858 = vadd.f32 %v2559, %v2857
      %v2859 = vpop.f32.mrb[0].mxu0
      %v2860 = vadd.f32 %v2561, %v2859
      %v2861 = vpop.f32.mrb[0].mxu0
      %v2862 = vadd.f32 %v2563, %v2861
      %v2863 = vpop.f32.mrb[0].mxu0
      %v2864 = vadd.f32 %v2565, %v2863
      %2865 = vmatprep.mubr.bf16.mxu0 0
      %2866 = vmatmul.mubr.bf16.gmra.mrb[0].mxu0 %v2710
      %v2867 = vpop.f32.mrb[0].mxu0
      %v2868 = vadd.f32 %v2569, %v2867
      %v2869 = vpop.f32.mrb[0].mxu0
      %v2870 = vadd.f32 %v2571, %v2869
      %v2871 = vpop.f32.mrb[0].mxu0
      %v2872 = vadd.f32 %v2573, %v2871
      %v2873 = vpop.f32.mrb[0].mxu0
      %v2874 = vadd.f32 %v2575, %v2873
      %2875 = vmatprep.mubr.bf16.mxu0 0
      %2876 = vmatmul.mubr.bf16.gmra.mrb[0].mxu0 %v2713
      %v2877 = vpop.f32.mrb[0].mxu0
      %v2878 = vadd.f32 %v2579, %v2877
      %v2879 = vpop.f32.mrb[0].mxu0
      %v2880 = vadd.f32 %v2581, %v2879
      %v2881 = vpop.f32.mrb[0].mxu0
      %v2882 = vadd.f32 %v2583, %v2881
      %v2883 = vpop.f32.mrb[0].mxu0
      %v2884 = vadd.f32 %v2585, %v2883
      %2885 = vmatprep.mubr.bf16.mxu0 0
      %2886 = vmatmul.mubr.bf16.gmra.mrb[0].mxu0 %v2716
      %v2887 = vpop.f32.mrb[0].mxu0
      %v2888 = vadd.f32 %v2589, %v2887
      %v2889 = vpop.f32.mrb[0].mxu0
      %v2890 = vadd.f32 %v2591, %v2889
      %v2891 = vpop.f32.mrb[0].mxu0
      %v2892 = vadd.f32 %v2593, %v2891
      %v2893 = vpop.f32.mrb[0].mxu0
      %v2894 = vadd.f32 %v2595, %v2893
      %2895 = vmatprep.mubr.bf16.mxu0 0
      %2896 = vmatmul.mubr.bf16.gmra.mrb[0].mxu0 %v2719
      %v2897 = vpop.f32.mrb[0].mxu0
      %v2898 = vadd.f32 %v2599, %v2897
      %v2899 = vpop.f32.mrb[0].mxu0
      %v2900 = vadd.f32 %v2601, %v2899
      %v2901 = vpop.f32.mrb[0].mxu0
      %v2902 = vadd.f32 %v2603, %v2901
      %v2903 = vpop.f32.mrb[0].mxu0
      %v2904 = vadd.f32 %v2605, %v2903
      %2905 = vmatprep.mubr.bf16.mxu0 0
      %2906 = vmatmul.mubr.bf16.gmra.mrb[0].mxu0 %v2722
      %v2907 = vpop.f32.mrb[0].mxu0
      %v2908 = vadd.f32 %v2609, %v2907
      %v2909 = vpop.f32.mrb[0].mxu0
      %v2910 = vadd.f32 %v2611, %v2909
      %v2911 = vpop.f32.mrb[0].mxu0
      %v2912 = vadd.f32 %v2613, %v2911
      %v2913 = vpop.f32.mrb[0].mxu0
      %v2914 = vadd.f32 %v2615, %v2913
      %2915 = vmatprep.mubr.bf16.mxu0 0
      %2916 = vmatmul.mubr.bf16.gmra.mrb[0].mxu0 %v2725
      %v2917 = vpop.f32.mrb[0].mxu0
      %v2918 = vadd.f32 %v2619, %v2917
      %v2919 = vpop.f32.mrb[0].mxu0
      %v2920 = vadd.f32 %v2621, %v2919
      %v2921 = vpop.f32.mrb[0].mxu0
      %v2922 = vadd.f32 %v2623, %v2921
      %v2923 = vpop.f32.mrb[0].mxu0
      %v2924 = vadd.f32 %v2625, %v2923
      %2925 = vdwg.mxu0
      %v2926 = vmax.f32 %v2768, %v2770
      %2927 = vmax.xlane.f32.xlu0 %v2926
      %v2928 = vpop.xlane.xlu0 %2927
      %v2929 = vmax.f32 %v2772, %v2774
      %2930 = vmax.xlane.f32.xlu0 %v2929
      %v2931 = vpop.xlane.xlu0 %2930
      %v2932 = vmax.f32 %v2778, %v2780
      %2933 = vmax.xlane.f32.xlu0 %v2932
      %v2934 = vpop.xlane.xlu0 %2933
      %v2935 = vmax.f32 %v2782, %v2784
      %2936 = vmax.xlane.f32.xlu0 %v2935
      %v2937 = vpop.xlane.xlu0 %2936
      %v2938 = vmax.f32 %v2788, %v2790
      %2939 = vmax.xlane.f32.xlu0 %v2938
      %v2940 = vpop.xlane.xlu0 %2939
      %v2941 = vmax.f32 %v2792, %v2794
      %2942 = vmax.xlane.f32.xlu0 %v2941
      %v2943 = vpop.xlane.xlu0 %2942
      %v2944 = vmax.f32 %v2798, %v2800
      %2945 = vmax.xlane.f32.xlu0 %v2944
      %v2946 = vpop.xlane.xlu0 %2945
      %v2947 = vmax.f32 %v2802, %v2804
      %2948 = vmax.xlane.f32.xlu0 %v2947
      %v2949 = vpop.xlane.xlu0 %2948
      %v2950 = vmax.f32 %v2808, %v2810
      %2951 = vmax.xlane.f32.xlu0 %v2950
      %v2952 = vpop.xlane.xlu0 %2951
      %v2953 = vmax.f32 %v2812, %v2814
      %2954 = vmax.xlane.f32.xlu0 %v2953
      %v2955 = vpop.xlane.xlu0 %2954
      %v2956 = vmax.f32 %v2818, %v2820
      %2957 = vmax.xlane.f32.xlu0 %v2956
      %v2958 = vpop.xlane.xlu0 %2957
      %v2959 = vmax.f32 %v2822, %v2824
      %2960 = vmax.xlane.f32.xlu0 %v2959
      %v2961 = vpop.xlane.xlu0 %2960
      %v2962 = vmax.f32 %v2828, %v2830
      %2963 = vmax.xlane.f32.xlu0 %v2962
      %v2964 = vpop.xlane.xlu0 %2963
      %v2965 = vmax.f32 %v2832, %v2834
      %2966 = vmax.xlane.f32.xlu0 %v2965
      %v2967 = vpop.xlane.xlu0 %2966
      %v2968 = vmax.f32 %v2838, %v2840
      %2969 = vmax.xlane.f32.xlu0 %v2968
      %v2970 = vpop.xlane.xlu0 %2969
      %v2971 = vmax.f32 %v2842, %v2844
      %2972 = vmax.xlane.f32.xlu0 %v2971
      %v2973 = vpop.xlane.xlu0 %2972
      %v2974 = vmax.f32 %v2848, %v2850
      %2975 = vmax.xlane.f32.xlu0 %v2974
      %v2976 = vpop.xlane.xlu0 %2975
      %v2977 = vmax.f32 %v2852, %v2854
      %2978 = vmax.xlane.f32.xlu0 %v2977
      %v2979 = vpop.xlane.xlu0 %2978
      %v2980 = vmax.f32 %v2858, %v2860
      %2981 = vmax.xlane.f32.xlu0 %v2980
      %v2982 = vpop.xlane.xlu0 %2981
      %v2983 = vmax.f32 %v2862, %v2864
      %2984 = vmax.xlane.f32.xlu0 %v2983
      %v2985 = vpop.xlane.xlu0 %2984
      %v2986 = vmax.f32 %v2868, %v2870
      %2987 = vmax.xlane.f32.xlu0 %v2986
      %v2988 = vpop.xlane.xlu0 %2987
      %v2989 = vmax.f32 %v2872, %v2874
      %2990 = vmax.xlane.f32.xlu0 %v2989
      %v2991 = vpop.xlane.xlu0 %2990
      %v2992 = vmax.f32 %v2878, %v2880
      %2993 = vmax.xlane.f32.xlu0 %v2992
      %v2994 = vpop.xlane.xlu0 %2993
      %v2995 = vmax.f32 %v2882, %v2884
      %2996 = vmax.xlane.f32.xlu0 %v2995
      %v2997 = vpop.xlane.xlu0 %2996
      %v2998 = vmax.f32 %v2888, %v2890
      %2999 = vmax.xlane.f32.xlu0 %v2998
      %v3000 = vpop.xlane.xlu0 %2999
      %v3001 = vmax.f32 %v2892, %v2894
      %3002 = vmax.xlane.f32.xlu0 %v3001
      %v3003 = vpop.xlane.xlu0 %3002
      %v3004 = vmax.f32 %v2898, %v2900
      %3005 = vmax.xlane.f32.xlu0 %v3004
      %v3006 = vpop.xlane.xlu0 %3005
      %v3007 = vmax.f32 %v2902, %v2904
      %3008 = vmax.xlane.f32.xlu0 %v3007
      %v3009 = vpop.xlane.xlu0 %3008
      %v3010 = vmax.f32 %v2908, %v2910
      %3011 = vmax.xlane.f32.xlu0 %v3010
      %v3012 = vpop.xlane.xlu0 %3011
      %v3013 = vmax.f32 %v2912, %v2914
      %3014 = vmax.xlane.f32.xlu0 %v3013
      %v3015 = vpop.xlane.xlu0 %3014
      %v3016 = vmax.f32 %v2918, %v2920
      %3017 = vmax.xlane.f32.xlu0 %v3016
      %v3018 = vpop.xlane.xlu0 %3017
      %v3019 = vmax.f32 %v2922, %v2924
      %3020 = vmax.xlane.f32.xlu0 %v3019
      %v3021 = vpop.xlane.xlu0 %3020
      %v3022 = vsub.f32 %v2768, %v2928
      %v3023 = vsub.f32 %v2770, %v2928
      %v3024 = vsub.f32 %v2772, %v2931
      %v3025 = vsub.f32 %v2774, %v2931
      %v3026 = vsub.f32 %v2778, %v2934
      %v3027 = vsub.f32 %v2780, %v2934
      %v3028 = vsub.f32 %v2782, %v2937
      %v3029 = vsub.f32 %v2784, %v2937
      %v3030 = vsub.f32 %v2788, %v2940
      %v3031 = vsub.f32 %v2790, %v2940
      %v3032 = vsub.f32 %v2792, %v2943
      %v3033 = vsub.f32 %v2794, %v2943
      %v3034 = vsub.f32 %v2798, %v2946
      %v3035 = vsub.f32 %v2800, %v2946
      %v3036 = vsub.f32 %v2802, %v2949
      %v3037 = vsub.f32 %v2804, %v2949
      %v3038 = vsub.f32 %v2808, %v2952
      %v3039 = vsub.f32 %v2810, %v2952
      %v3040 = vsub.f32 %v2812, %v2955
      %v3041 = vsub.f32 %v2814, %v2955
      %v3042 = vsub.f32 %v2818, %v2958
      %v3043 = vsub.f32 %v2820, %v2958
      %v3044 = vsub.f32 %v2822, %v2961
      %v3045 = vsub.f32 %v2824, %v2961
      %v3046 = vsub.f32 %v2828, %v2964
      %v3047 = vsub.f32 %v2830, %v2964
      %v3048 = vsub.f32 %v2832, %v2967
      %v3049 = vsub.f32 %v2834, %v2967
      %v3050 = vsub.f32 %v2838, %v2970
      %v3051 = vsub.f32 %v2840, %v2970
      %v3052 = vsub.f32 %v2842, %v2973
      %v3053 = vsub.f32 %v2844, %v2973
      %v3054 = vsub.f32 %v2848, %v2976
      %v3055 = vsub.f32 %v2850, %v2976
      %v3056 = vsub.f32 %v2852, %v2979
      %v3057 = vsub.f32 %v2854, %v2979
      %v3058 = vsub.f32 %v2858, %v2982
      %v3059 = vsub.f32 %v2860, %v2982
      %v3060 = vsub.f32 %v2862, %v2985
      %v3061 = vsub.f32 %v2864, %v2985
      %v3062 = vsub.f32 %v2868, %v2988
      %v3063 = vsub.f32 %v2870, %v2988
      %v3064 = vsub.f32 %v2872, %v2991
      %v3065 = vsub.f32 %v2874, %v2991
      %v3066 = vsub.f32 %v2878, %v2994
      %v3067 = vsub.f32 %v2880, %v2994
      %v3068 = vsub.f32 %v2882, %v2997
      %v3069 = vsub.f32 %v2884, %v2997
      %v3070 = vsub.f32 %v2888, %v3000
      %v3071 = vsub.f32 %v2890, %v3000
      %v3072 = vsub.f32 %v2892, %v3003
      %v3073 = vsub.f32 %v2894, %v3003
      %v3074 = vsub.f32 %v2898, %v3006
      %v3075 = vsub.f32 %v2900, %v3006
      %v3076 = vsub.f32 %v2902, %v3009
      %v3077 = vsub.f32 %v2904, %v3009
      %v3078 = vsub.f32 %v2908, %v3012
      %v3079 = vsub.f32 %v2910, %v3012
      %v3080 = vsub.f32 %v2912, %v3015
      %v3081 = vsub.f32 %v2914, %v3015
      %v3082 = vsub.f32 %v2918, %v3018
      %v3083 = vsub.f32 %v2920, %v3018
      %v3084 = vsub.f32 %v2922, %v3021
      %v3085 = vsub.f32 %v2924, %v3021
      %v3086 = vmul.f32 %v3022, 1.442695
      %v3087 = vpow.pop %v3086
      %v3088 = vmul.f32 %v3023, 1.442695
      %v3089 = vpow.pop %v3088
      %v3090 = vmul.f32 %v3024, 1.442695
      %v3091 = vpow.pop %v3090
      %v3092 = vmul.f32 %v3025, 1.442695
      %v3093 = vpow.pop %v3092
      %v3094 = vmul.f32 %v3026, 1.442695
      %v3095 = vpow.pop %v3094
      %v3096 = vmul.f32 %v3027, 1.442695
      %v3097 = vpow.pop %v3096
      %v3098 = vmul.f32 %v3028, 1.442695
      %v3099 = vpow.pop %v3098
      %v3100 = vmul.f32 %v3029, 1.442695
      %v3101 = vpow.pop %v3100
      %v3102 = vmul.f32 %v3030, 1.442695
      %v3103 = vpow.pop %v3102
      %v3104 = vmul.f32 %v3031, 1.442695
      %v3105 = vpow.pop %v3104
      %v3106 = vmul.f32 %v3032, 1.442695
      %v3107 = vpow.pop %v3106
      %v3108 = vmul.f32 %v3033, 1.442695
      %v3109 = vpow.pop %v3108
      %v3110 = vmul.f32 %v3034, 1.442695
      %v3111 = vpow.pop %v3110
      %v3112 = vmul.f32 %v3035, 1.442695
      %v3113 = vpow.pop %v3112
      %v3114 = vmul.f32 %v3036, 1.442695
      %v3115 = vpow.pop %v3114
      %v3116 = vmul.f32 %v3037, 1.442695
      %v3117 = vpow.pop %v3116
      %v3118 = vmul.f32 %v3038, 1.442695
      %v3119 = vpow.pop %v3118
      %v3120 = vmul.f32 %v3039, 1.442695
      %v3121 = vpow.pop %v3120
      %v3122 = vmul.f32 %v3040, 1.442695
      %v3123 = vpow.pop %v3122
      %v3124 = vmul.f32 %v3041, 1.442695
      %v3125 = vpow.pop %v3124
      %v3126 = vmul.f32 %v3042, 1.442695
      %v3127 = vpow.pop %v3126
      %v3128 = vmul.f32 %v3043, 1.442695
      %v3129 = vpow.pop %v3128
      %v3130 = vmul.f32 %v3044, 1.442695
      %v3131 = vpow.pop %v3130
      %v3132 = vmul.f32 %v3045, 1.442695
      %v3133 = vpow.pop %v3132
      %v3134 = vmul.f32 %v3046, 1.442695
      %v3135 = vpow.pop %v3134
      %v3136 = vmul.f32 %v3047, 1.442695
      %v3137 = vpow.pop %v3136
      %v3138 = vmul.f32 %v3048, 1.442695
      %v3139 = vpow.pop %v3138
      %v3140 = vmul.f32 %v3049, 1.442695
      %v3141 = vpow.pop %v3140
      %v3142 = vmul.f32 %v3050, 1.442695
      %v3143 = vpow.pop %v3142
      %v3144 = vmul.f32 %v3051, 1.442695
      %v3145 = vpow.pop %v3144
      %v3146 = vmul.f32 %v3052, 1.442695
      %v3147 = vpow.pop %v3146
      %v3148 = vmul.f32 %v3053, 1.442695
      %v3149 = vpow.pop %v3148
      %v3150 = vmul.f32 %v3054, 1.442695
      %v3151 = vpow.pop %v3150
      %v3152 = vmul.f32 %v3055, 1.442695
      %v3153 = vpow.pop %v3152
      %v3154 = vmul.f32 %v3056, 1.442695
      %v3155 = vpow.pop %v3154
      %v3156 = vmul.f32 %v3057, 1.442695
      %v3157 = vpow.pop %v3156
      %v3158 = vmul.f32 %v3058, 1.442695
      %v3159 = vpow.pop %v3158
      %v3160 = vmul.f32 %v3059, 1.442695
      %v3161 = vpow.pop %v3160
      %v3162 = vmul.f32 %v3060, 1.442695
      %v3163 = vpow.pop %v3162
      %v3164 = vmul.f32 %v3061, 1.442695
      %v3165 = vpow.pop %v3164
      %v3166 = vmul.f32 %v3062, 1.442695
      %v3167 = vpow.pop %v3166
      %v3168 = vmul.f32 %v3063, 1.442695
      %v3169 = vpow.pop %v3168
      %v3170 = vmul.f32 %v3064, 1.442695
      %v3171 = vpow.pop %v3170
      %v3172 = vmul.f32 %v3065, 1.442695
      %v3173 = vpow.pop %v3172
      %v3174 = vmul.f32 %v3066, 1.442695
      %v3175 = vpow.pop %v3174
      %v3176 = vmul.f32 %v3067, 1.442695
      %v3177 = vpow.pop %v3176
      %v3178 = vmul.f32 %v3068, 1.442695
      %v3179 = vpow.pop %v3178
      %v3180 = vmul.f32 %v3069, 1.442695
      %v3181 = vpow.pop %v3180
      %v3182 = vmul.f32 %v3070, 1.442695
      %v3183 = vpow.pop %v3182
      %v3184 = vmul.f32 %v3071, 1.442695
      %v3185 = vpow.pop %v3184
      %v3186 = vmul.f32 %v3072, 1.442695
      %v3187 = vpow.pop %v3186
      %v3188 = vmul.f32 %v3073, 1.442695
      %v3189 = vpow.pop %v3188
      %v3190 = vmul.f32 %v3074, 1.442695
      %v3191 = vpow.pop %v3190
      %v3192 = vmul.f32 %v3075, 1.442695
      %v3193 = vpow.pop %v3192
      %v3194 = vmul.f32 %v3076, 1.442695
      %v3195 = vpow.pop %v3194
      %v3196 = vmul.f32 %v3077, 1.442695
      %v3197 = vpow.pop %v3196
      %v3198 = vmul.f32 %v3078, 1.442695
      %v3199 = vpow.pop %v3198
      %v3200 = vmul.f32 %v3079, 1.442695
      %v3201 = vpow.pop %v3200
      %v3202 = vmul.f32 %v3080, 1.442695
      %v3203 = vpow.pop %v3202
      %v3204 = vmul.f32 %v3081, 1.442695
      %v3205 = vpow.pop %v3204
      %v3206 = vmul.f32 %v3082, 1.442695
      %v3207 = vpow.pop %v3206
      %v3208 = vmul.f32 %v3083, 1.442695
      %v3209 = vpow.pop %v3208
      %v3210 = vmul.f32 %v3084, 1.442695
      %v3211 = vpow.pop %v3210
      %v3212 = vmul.f32 %v3085, 1.442695
      %v3213 = vpow.pop %v3212
      %v3214 = vadd.f32 %v3087, %v3089
      %3215 = vadd.xlane.f32.xlu0 %v3214
      %v3216 = vpop.xlane.xlu0 %3215
      %v3217 = vadd.f32 %v3091, %v3093
      %3218 = vadd.xlane.f32.xlu0 %v3217
      %v3219 = vpop.xlane.xlu0 %3218
      %v3220 = vadd.f32 %v3095, %v3097
      %3221 = vadd.xlane.f32.xlu0 %v3220
      %v3222 = vpop.xlane.xlu0 %3221
      %v3223 = vadd.f32 %v3099, %v3101
      %3224 = vadd.xlane.f32.xlu0 %v3223
      %v3225 = vpop.xlane.xlu0 %3224
      %v3226 = vadd.f32 %v3103, %v3105
      %3227 = vadd.xlane.f32.xlu0 %v3226
      %v3228 = vpop.xlane.xlu0 %3227
      %v3229 = vadd.f32 %v3107, %v3109
      %3230 = vadd.xlane.f32.xlu0 %v3229
      %v3231 = vpop.xlane.xlu0 %3230
      %v3232 = vadd.f32 %v3111, %v3113
      %3233 = vadd.xlane.f32.xlu0 %v3232
      %v3234 = vpop.xlane.xlu0 %3233
      %v3235 = vadd.f32 %v3115, %v3117
      %3236 = vadd.xlane.f32.xlu0 %v3235
      %v3237 = vpop.xlane.xlu0 %3236
      %v3238 = vadd.f32 %v3119, %v3121
      %3239 = vadd.xlane.f32.xlu0 %v3238
      %v3240 = vpop.xlane.xlu0 %3239
      %v3241 = vadd.f32 %v3123, %v3125
      %3242 = vadd.xlane.f32.xlu0 %v3241
      %v3243 = vpop.xlane.xlu0 %3242
      %v3244 = vadd.f32 %v3127, %v3129
      %3245 = vadd.xlane.f32.xlu0 %v3244
      %v3246 = vpop.xlane.xlu0 %3245
      %v3247 = vadd.f32 %v3131, %v3133
      %3248 = vadd.xlane.f32.xlu0 %v3247
      %v3249 = vpop.xlane.xlu0 %3248
      %v3250 = vadd.f32 %v3135, %v3137
      %3251 = vadd.xlane.f32.xlu0 %v3250
      %v3252 = vpop.xlane.xlu0 %3251
      %v3253 = vadd.f32 %v3139, %v3141
      %3254 = vadd.xlane.f32.xlu0 %v3253
      %v3255 = vpop.xlane.xlu0 %3254
      %v3256 = vadd.f32 %v3143, %v3145
      %3257 = vadd.xlane.f32.xlu0 %v3256
      %v3258 = vpop.xlane.xlu0 %3257
      %v3259 = vadd.f32 %v3147, %v3149
      %3260 = vadd.xlane.f32.xlu0 %v3259
      %v3261 = vpop.xlane.xlu0 %3260
      %v3262 = vadd.f32 %v3151, %v3153
      %3263 = vadd.xlane.f32.xlu0 %v3262
      %v3264 = vpop.xlane.xlu0 %3263
      %v3265 = vadd.f32 %v3155, %v3157
      %3266 = vadd.xlane.f32.xlu0 %v3265
      %v3267 = vpop.xlane.xlu0 %3266
      %v3268 = vadd.f32 %v3159, %v3161
      %3269 = vadd.xlane.f32.xlu0 %v3268
      %v3270 = vpop.xlane.xlu0 %3269
      %v3271 = vadd.f32 %v3163, %v3165
      %3272 = vadd.xlane.f32.xlu0 %v3271
      %v3273 = vpop.xlane.xlu0 %3272
      %v3274 = vadd.f32 %v3167, %v3169
      %3275 = vadd.xlane.f32.xlu0 %v3274
      %v3276 = vpop.xlane.xlu0 %3275
      %v3277 = vadd.f32 %v3171, %v3173
      %3278 = vadd.xlane.f32.xlu0 %v3277
      %v3279 = vpop.xlane.xlu0 %3278
      %v3280 = vadd.f32 %v3175, %v3177
      %3281 = vadd.xlane.f32.xlu0 %v3280
      %v3282 = vpop.xlane.xlu0 %3281
      %v3283 = vadd.f32 %v3179, %v3181
      %3284 = vadd.xlane.f32.xlu0 %v3283
      %v3285 = vpop.xlane.xlu0 %3284
      %v3286 = vadd.f32 %v3183, %v3185
      %3287 = vadd.xlane.f32.xlu0 %v3286
      %v3288 = vpop.xlane.xlu0 %3287
      %v3289 = vadd.f32 %v3187, %v3189
      %3290 = vadd.xlane.f32.xlu0 %v3289
      %v3291 = vpop.xlane.xlu0 %3290
      %v3292 = vadd.f32 %v3191, %v3193
      %3293 = vadd.xlane.f32.xlu0 %v3292
      %v3294 = vpop.xlane.xlu0 %3293
      %v3295 = vadd.f32 %v3195, %v3197
      %3296 = vadd.xlane.f32.xlu0 %v3295
      %v3297 = vpop.xlane.xlu0 %3296
      %v3298 = vadd.f32 %v3199, %v3201
      %3299 = vadd.xlane.f32.xlu0 %v3298
      %v3300 = vpop.xlane.xlu0 %3299
      %v3301 = vadd.f32 %v3203, %v3205
      %3302 = vadd.xlane.f32.xlu0 %v3301
      %v3303 = vpop.xlane.xlu0 %3302
      %v3304 = vadd.f32 %v3207, %v3209
      %3305 = vadd.xlane.f32.xlu0 %v3304
      %v3306 = vpop.xlane.xlu0 %3305
      %v3307 = vadd.f32 %v3211, %v3213
      %3308 = vadd.xlane.f32.xlu0 %v3307
      %v3309 = vpop.xlane.xlu0 %3308
      %v3310 = vrcp.pop %v3216
      %v3311 = vrcp.pop %v3219
      %v3312 = vrcp.pop %v3222
      %v3313 = vrcp.pop %v3225
      %v3314 = vrcp.pop %v3228
      %v3315 = vrcp.pop %v3231
      %v3316 = vrcp.pop %v3234
      %v3317 = vrcp.pop %v3237
      %v3318 = vrcp.pop %v3240
      %v3319 = vrcp.pop %v3243
      %v3320 = vrcp.pop %v3246
      %v3321 = vrcp.pop %v3249
      %v3322 = vrcp.pop %v3252
      %v3323 = vrcp.pop %v3255
      %v3324 = vrcp.pop %v3258
      %v3325 = vrcp.pop %v3261
      %v3326 = vrcp.pop %v3264
      %v3327 = vrcp.pop %v3267
      %v3328 = vrcp.pop %v3270
      %v3329 = vrcp.pop %v3273
      %v3330 = vrcp.pop %v3276
      %v3331 = vrcp.pop %v3279
      %v3332 = vrcp.pop %v3282
      %v3333 = vrcp.pop %v3285
      %v3334 = vrcp.pop %v3288
      %v3335 = vrcp.pop %v3291
      %v3336 = vrcp.pop %v3294
      %v3337 = vrcp.pop %v3297
      %v3338 = vrcp.pop %v3300
      %v3339 = vrcp.pop %v3303
      %v3340 = vrcp.pop %v3306
      %v3341 = vrcp.pop %v3309
      %v3342 = vmul.f32 %v3087, %v3310
      %v3343 = vmul.f32 %v3089, %v3310
      %v3344 = vmul.f32 %v3091, %v3311
      %v3345 = vmul.f32 %v3093, %v3311
      %v3346 = vmul.f32 %v3095, %v3312
      %v3347 = vmul.f32 %v3097, %v3312
      %v3348 = vmul.f32 %v3099, %v3313
      %v3349 = vmul.f32 %v3101, %v3313
      %v3350 = vmul.f32 %v3103, %v3314
      %v3351 = vmul.f32 %v3105, %v3314
      %v3352 = vmul.f32 %v3107, %v3315
      %v3353 = vmul.f32 %v3109, %v3315
      %v3354 = vmul.f32 %v3111, %v3316
      %v3355 = vmul.f32 %v3113, %v3316
      %v3356 = vmul.f32 %v3115, %v3317
      %v3357 = vmul.f32 %v3117, %v3317
      %v3358 = vmul.f32 %v3119, %v3318
      %v3359 = vmul.f32 %v3121, %v3318
      %v3360 = vmul.f32 %v3123, %v3319
      %v3361 = vmul.f32 %v3125, %v3319
      %v3362 = vmul.f32 %v3127, %v3320
      %v3363 = vmul.f32 %v3129, %v3320
      %v3364 = vmul.f32 %v3131, %v3321
      %v3365 = vmul.f32 %v3133, %v3321
      %v3366 = vmul.f32 %v3135, %v3322
      %v3367 = vmul.f32 %v3137, %v3322
      %v3368 = vmul.f32 %v3139, %v3323
      %v3369 = vmul.f32 %v3141, %v3323
      %v3370 = vmul.f32 %v3143, %v3324
      %v3371 = vmul.f32 %v3145, %v3324
      %v3372 = vmul.f32 %v3147, %v3325
      %v3373 = vmul.f32 %v3149, %v3325
      %v3374 = vmul.f32 %v3151, %v3326
      %v3375 = vmul.f32 %v3153, %v3326
      %v3376 = vmul.f32 %v3155, %v3327
      %v3377 = vmul.f32 %v3157, %v3327
      %v3378 = vmul.f32 %v3159, %v3328
      %v3379 = vmul.f32 %v3161, %v3328
      %v3380 = vmul.f32 %v3163, %v3329
      %v3381 = vmul.f32 %v3165, %v3329
      %v3382 = vmul.f32 %v3167, %v3330
      %v3383 = vmul.f32 %v3169, %v3330
      %v3384 = vmul.f32 %v3171, %v3331
      %v3385 = vmul.f32 %v3173, %v3331
      %v3386 = vmul.f32 %v3175, %v3332
      %v3387 = vmul.f32 %v3177, %v3332
      %v3388 = vmul.f32 %v3179, %v3333
      %v3389 = vmul.f32 %v3181, %v3333
      %v3390 = vmul.f32 %v3183, %v3334
      %v3391 = vmul.f32 %v3185, %v3334
      %v3392 = vmul.f32 %v3187, %v3335
      %v3393 = vmul.f32 %v3189, %v3335
      %v3394 = vmul.f32 %v3191, %v3336
      %v3395 = vmul.f32 %v3193, %v3336
      %v3396 = vmul.f32 %v3195, %v3337
      %v3397 = vmul.f32 %v3197, %v3337
      %v3398 = vmul.f32 %v3199, %v3338
      %v3399 = vmul.f32 %v3201, %v3338
      %v3400 = vmul.f32 %v3203, %v3339
      %v3401 = vmul.f32 %v3205, %v3339
      %v3402 = vmul.f32 %v3207, %v3340
      %v3403 = vmul.f32 %v3209, %v3340
      %v3404 = vmul.f32 %v3211, %v3341
      %v3405 = vmul.f32 %v3213, %v3341
      %v3406 = vpack.c.bf16 %v3344, %v3342
      %v3407 = vpack.c.bf16 %v3345, %v3343
      %v3408 = vpack.c.bf16 %v3348, %v3346
      %v3409 = vpack.c.bf16 %v3349, %v3347
      %v3410 = vpack.c.bf16 %v3352, %v3350
      %v3411 = vpack.c.bf16 %v3353, %v3351
      %v3412 = vpack.c.bf16 %v3356, %v3354
      %v3413 = vpack.c.bf16 %v3357, %v3355
      %v3414 = vpack.c.bf16 %v3360, %v3358
      %v3415 = vpack.c.bf16 %v3361, %v3359
      %v3416 = vpack.c.bf16 %v3364, %v3362
      %v3417 = vpack.c.bf16 %v3365, %v3363
      %v3418 = vpack.c.bf16 %v3368, %v3366
      %v3419 = vpack.c.bf16 %v3369, %v3367
      %v3420 = vpack.c.bf16 %v3372, %v3370
      %v3421 = vpack.c.bf16 %v3373, %v3371
      %v3422 = vpack.c.bf16 %v3376, %v3374
      %v3423 = vpack.c.bf16 %v3377, %v3375
      %v3424 = vpack.c.bf16 %v3380, %v3378
      %v3425 = vpack.c.bf16 %v3381, %v3379
      %v3426 = vpack.c.bf16 %v3384, %v3382
      %v3427 = vpack.c.bf16 %v3385, %v3383
      %v3428 = vpack.c.bf16 %v3388, %v3386
      %v3429 = vpack.c.bf16 %v3389, %v3387
      %v3430 = vpack.c.bf16 %v3392, %v3390
      %v3431 = vpack.c.bf16 %v3393, %v3391
      %v3432 = vpack.c.bf16 %v3396, %v3394
      %v3433 = vpack.c.bf16 %v3397, %v3395
      %v3434 = vpack.c.bf16 %v3400, %v3398
      %v3435 = vpack.c.bf16 %v3401, %v3399
      %v3436 = vpack.c.bf16 %v3404, %v3402
      %v3437 = vpack.c.bf16 %v3405, %v3403
      %3454 = vrot.lane.b32.xlu0 %v966, 120
      %v3455 = vpop.permute.xlu0 %3454
      %3456 = vrot.lane.b32.xlu0 %v967, 120
      %v3457 = vpop.permute.xlu0 %3456
      %3458 = vrot.lane.b32.xlu0 %v968, 120
      %v3459 = vpop.permute.xlu0 %3458
      %3460 = vrot.lane.b32.xlu0 %v969, 120
      %v3461 = vpop.permute.xlu0 %3460
      %3462 = vrot.lane.b32.xlu0 %v970, 120
      %v3463 = vpop.permute.xlu0 %3462
      %3464 = vrot.lane.b32.xlu0 %v971, 120
      %v3465 = vpop.permute.xlu0 %3464
      %3466 = vrot.lane.b32.xlu0 %v972, 120
      %v3467 = vpop.permute.xlu0 %3466
      %3468 = vrot.lane.b32.xlu0 %v973, 120
      %v3469 = vpop.permute.xlu0 %3468
      %3470 = vrot.lane.b32.xlu0 %v974, 120
      %v3471 = vpop.permute.xlu0 %3470
      %3472 = vrot.lane.b32.xlu0 %v975, 120
      %v3473 = vpop.permute.xlu0 %3472
      %3474 = vrot.lane.b32.xlu0 %v976, 120
      %v3475 = vpop.permute.xlu0 %3474
      %3476 = vrot.lane.b32.xlu0 %v977, 120
      %v3477 = vpop.permute.xlu0 %3476
      %3478 = vrot.lane.b32.xlu0 %v978, 120
      %v3479 = vpop.permute.xlu0 %3478
      %3480 = vrot.lane.b32.xlu0 %v979, 120
      %v3481 = vpop.permute.xlu0 %3480
      %3482 = vrot.lane.b32.xlu0 %v980, 120
      %v3483 = vpop.permute.xlu0 %3482
      %3484 = vrot.lane.b32.xlu0 %v981, 120
      %v3485 = vpop.permute.xlu0 %3484
      %3502 = vmatprep.subr.bf16.mxu0 0
      %3503 = vmatpush1.bf16.msra.mxu0 %v3455
      %3504 = vmatprep.subr.bf16.mxu0 0
      %3505 = vmatpush1.bf16.msra.mxu0 %v3457
      %3506 = vmatprep.subr.bf16.mxu0 0
      %3507 = vmatpush1.bf16.msra.mxu0 %v3459
      %3508 = vmatprep.subr.bf16.mxu0 0
      %3509 = vmatpush1.bf16.msra.mxu0 %v3461
      %3510 = vmatprep.subr.bf16.mxu0 0
      %3511 = vmatpush1.bf16.msra.mxu0 %v3463
      %3512 = vmatprep.subr.bf16.mxu0 0
      %3513 = vmatpush1.bf16.msra.mxu0 %v3465
      %3514 = vmatprep.subr.bf16.mxu0 0
      %3515 = vmatpush1.bf16.msra.mxu0 %v3467
      %3516 = vmatprep.subr.bf16.mxu0 0
      %3517 = vmatpush1.bf16.msra.mxu0 %v3469
      %3518 = vmatprep.subr.bf16.mxu0 0
      %3519 = vmatpush1.bf16.msra.mxu0 %v3471
      %3520 = vmatprep.subr.bf16.mxu0 0
      %3521 = vmatpush1.bf16.msra.mxu0 %v3473
      %3522 = vmatprep.subr.bf16.mxu0 0
      %3523 = vmatpush1.bf16.msra.mxu0 %v3475
      %3524 = vmatprep.subr.bf16.mxu0 0
      %3525 = vmatpush1.bf16.msra.mxu0 %v3477
      %3526 = vmatprep.subr.bf16.mxu0 0
      %3527 = vmatpush1.bf16.msra.mxu0 %v3479
      %3528 = vmatprep.subr.bf16.mxu0 0
      %3529 = vmatpush1.bf16.msra.mxu0 %v3481
      %3530 = vmatprep.subr.bf16.mxu0 0
      %3531 = vmatpush1.bf16.msra.mxu0 %v3483
      %3532 = vmatprep.subr.bf16.mxu0 0
      %3533 = vmatpush1.bf16.msra.mxu0 %v3485
      %3534 = vmatprep.mubr.bf16.mxu0 %v3407
      %3535 = vmatmul.mubr.bf16.gmra.mrb[0].mxu0 %v3406
      %v3536 = vpop.f32.mrb[0].mxu0
      %v3537 = vadd.f32 0.0, %v3536
      %v3538 = vpop.f32.mrb[0].mxu0
      %v3539 = vpop.f32.mrb[0].mxu0
      %v3540 = vadd.f32 0.0, %v3539
      %v3541 = vpop.f32.mrb[0].mxu0
      %3542 = vmatprep.mubr.bf16.mxu0 %v3409
      %3543 = vmatmul.mubr.bf16.gmra.mrb[0].mxu0 %v3408
      %v3544 = vpop.f32.mrb[0].mxu0
      %v3545 = vadd.f32 0.0, %v3544
      %v3546 = vpop.f32.mrb[0].mxu0
      %v3547 = vpop.f32.mrb[0].mxu0
      %v3548 = vadd.f32 0.0, %v3547
      %v3549 = vpop.f32.mrb[0].mxu0
      %3550 = vmatprep.mubr.bf16.mxu0 %v3411
      %3551 = vmatmul.mubr.bf16.gmra.mrb[0].mxu0 %v3410
      %v3552 = vpop.f32.mrb[0].mxu0
      %v3553 = vadd.f32 0.0, %v3552
      %v3554 = vpop.f32.mrb[0].mxu0
      %v3555 = vpop.f32.mrb[0].mxu0
      %v3556 = vadd.f32 0.0, %v3555
      %v3557 = vpop.f32.mrb[0].mxu0
      %3558 = vmatprep.mubr.bf16.mxu0 %v3413
      %3559 = vmatmul.mubr.bf16.gmra.mrb[0].mxu0 %v3412
      %v3560 = vpop.f32.mrb[0].mxu0
      %v3561 = vadd.f32 0.0, %v3560
      %v3562 = vpop.f32.mrb[0].mxu0
      %v3563 = vpop.f32.mrb[0].mxu0
      %v3564 = vadd.f32 0.0, %v3563
      %v3565 = vpop.f32.mrb[0].mxu0
      %3566 = vmatprep.mubr.bf16.mxu0 %v3415
      %3567 = vmatmul.mubr.bf16.gmra.mrb[0].mxu0 %v3414
      %v3568 = vpop.f32.mrb[0].mxu0
      %v3569 = vadd.f32 0.0, %v3568
      %v3570 = vpop.f32.mrb[0].mxu0
      %v3571 = vpop.f32.mrb[0].mxu0
      %v3572 = vadd.f32 0.0, %v3571
      %v3573 = vpop.f32.mrb[0].mxu0
      %3574 = vmatprep.mubr.bf16.mxu0 %v3417
      %3575 = vmatmul.mubr.bf16.gmra.mrb[0].mxu0 %v3416
      %v3576 = vpop.f32.mrb[0].mxu0
      %v3577 = vadd.f32 0.0, %v3576
      %v3578 = vpop.f32.mrb[0].mxu0
      %v3579 = vpop.f32.mrb[0].mxu0
      %v3580 = vadd.f32 0.0, %v3579
      %v3581 = vpop.f32.mrb[0].mxu0
      %3582 = vmatprep.mubr.bf16.mxu0 %v3419
      %3583 = vmatmul.mubr.bf16.gmra.mrb[0].mxu0 %v3418
      %v3584 = vpop.f32.mrb[0].mxu0
      %v3585 = vadd.f32 0.0, %v3584
      %v3586 = vpop.f32.mrb[0].mxu0
      %v3587 = vpop.f32.mrb[0].mxu0
      %v3588 = vadd.f32 0.0, %v3587
      %v3589 = vpop.f32.mrb[0].mxu0
      %3590 = vmatprep.mubr.bf16.mxu0 %v3421
      %3591 = vmatmul.mubr.bf16.gmra.mrb[0].mxu0 %v3420
      %v3592 = vpop.f32.mrb[0].mxu0
      %v3593 = vadd.f32 0.0, %v3592
      %v3594 = vpop.f32.mrb[0].mxu0
      %v3595 = vpop.f32.mrb[0].mxu0
      %v3596 = vadd.f32 0.0, %v3595
      %v3597 = vpop.f32.mrb[0].mxu0
      %3598 = vmatprep.mubr.bf16.mxu0 %v3423
      %3599 = vmatmul.mubr.bf16.gmra.mrb[0].mxu0 %v3422
      %v3600 = vpop.f32.mrb[0].mxu0
      %v3601 = vadd.f32 0.0, %v3600
      %v3602 = vpop.f32.mrb[0].mxu0
      %v3603 = vpop.f32.mrb[0].mxu0
      %v3604 = vadd.f32 0.0, %v3603
      %v3605 = vpop.f32.mrb[0].mxu0
      %3606 = vmatprep.mubr.bf16.mxu0 %v3425
      %3607 = vmatmul.mubr.bf16.gmra.mrb[0].mxu0 %v3424
      %v3608 = vpop.f32.mrb[0].mxu0
      %v3609 = vadd.f32 0.0, %v3608
      %v3610 = vpop.f32.mrb[0].mxu0
      %v3611 = vpop.f32.mrb[0].mxu0
      %v3612 = vadd.f32 0.0, %v3611
      %v3613 = vpop.f32.mrb[0].mxu0
      %3614 = vmatprep.mubr.bf16.mxu0 %v3427
      %3615 = vmatmul.mubr.bf16.gmra.mrb[0].mxu0 %v3426
      %v3616 = vpop.f32.mrb[0].mxu0
      %v3617 = vadd.f32 0.0, %v3616
      %v3618 = vpop.f32.mrb[0].mxu0
      %v3619 = vpop.f32.mrb[0].mxu0
      %v3620 = vadd.f32 0.0, %v3619
      %v3621 = vpop.f32.mrb[0].mxu0
      %3622 = vmatprep.mubr.bf16.mxu0 %v3429
      %3623 = vmatmul.mubr.bf16.gmra.mrb[0].mxu0 %v3428
      %v3624 = vpop.f32.mrb[0].mxu0
      %v3625 = vadd.f32 0.0, %v3624
      %v3626 = vpop.f32.mrb[0].mxu0
      %v3627 = vpop.f32.mrb[0].mxu0
      %v3628 = vadd.f32 0.0, %v3627
      %v3629 = vpop.f32.mrb[0].mxu0
      %3630 = vmatprep.mubr.bf16.mxu0 %v3431
      %3631 = vmatmul.mubr.bf16.gmra.mrb[0].mxu0 %v3430
      %v3632 = vpop.f32.mrb[0].mxu0
      %v3633 = vadd.f32 0.0, %v3632
      %v3634 = vpop.f32.mrb[0].mxu0
      %v3635 = vpop.f32.mrb[0].mxu0
      %v3636 = vadd.f32 0.0, %v3635
      %v3637 = vpop.f32.mrb[0].mxu0
      %3638 = vmatprep.mubr.bf16.mxu0 %v3433
      %3639 = vmatmul.mubr.bf16.gmra.mrb[0].mxu0 %v3432
      %v3640 = vpop.f32.mrb[0].mxu0
      %v3641 = vadd.f32 0.0, %v3640
      %v3642 = vpop.f32.mrb[0].mxu0
      %v3643 = vpop.f32.mrb[0].mxu0
      %v3644 = vadd.f32 0.0, %v3643
      %v3645 = vpop.f32.mrb[0].mxu0
      %3646 = vmatprep.mubr.bf16.mxu0 %v3435
      %3647 = vmatmul.mubr.bf16.gmra.mrb[0].mxu0 %v3434
      %v3648 = vpop.f32.mrb[0].mxu0
      %v3649 = vadd.f32 0.0, %v3648
      %v3650 = vpop.f32.mrb[0].mxu0
      %v3651 = vpop.f32.mrb[0].mxu0
      %v3652 = vadd.f32 0.0, %v3651
      %v3653 = vpop.f32.mrb[0].mxu0
      %3654 = vmatprep.mubr.bf16.mxu0 %v3437
      %3655 = vmatmul.mubr.bf16.gmra.mrb[0].mxu0 %v3436
      %v3656 = vpop.f32.mrb[0].mxu0
      %v3657 = vadd.f32 0.0, %v3656
      %v3658 = vpop.f32.mrb[0].mxu0
      %v3659 = vpop.f32.mrb[0].mxu0
      %v3660 = vadd.f32 0.0, %v3659
      %v3661 = vpop.f32.mrb[0].mxu0
      %3662 = vdwg.mxu0
      %3695 = vrot.lane.b32.xlu0 %v3537, 8
      %v3696 = vpop.permute.xlu0 %3695
      %3697 = vrot.lane.b32.xlu0 %v3540, 8
      %v3698 = vpop.permute.xlu0 %3697
      %3699 = vrot.lane.b32.xlu0 %v3545, 8
      %v3700 = vpop.permute.xlu0 %3699
      %3701 = vrot.lane.b32.xlu0 %v3548, 8
      %v3702 = vpop.permute.xlu0 %3701
      %3703 = vrot.lane.b32.xlu0 %v3553, 8
      %v3704 = vpop.permute.xlu0 %3703
      %3705 = vrot.lane.b32.xlu0 %v3556, 8
      %v3706 = vpop.permute.xlu0 %3705
      %3707 = vrot.lane.b32.xlu0 %v3561, 8
      %v3708 = vpop.permute.xlu0 %3707
      %3709 = vrot.lane.b32.xlu0 %v3564, 8
      %v3710 = vpop.permute.xlu0 %3709
      %3711 = vrot.lane.b32.xlu0 %v3569, 8
      %v3712 = vpop.permute.xlu0 %3711
      %3713 = vrot.lane.b32.xlu0 %v3572, 8
      %v3714 = vpop.permute.xlu0 %3713
      %3715 = vrot.lane.b32.xlu0 %v3577, 8
      %v3716 = vpop.permute.xlu0 %3715
      %3717 = vrot.lane.b32.xlu0 %v3580, 8
      %v3718 = vpop.permute.xlu0 %3717
      %3719 = vrot.lane.b32.xlu0 %v3585, 8
      %v3720 = vpop.permute.xlu0 %3719
      %3721 = vrot.lane.b32.xlu0 %v3588, 8
      %v3722 = vpop.permute.xlu0 %3721
      %3723 = vrot.lane.b32.xlu0 %v3593, 8
      %v3724 = vpop.permute.xlu0 %3723
      %3725 = vrot.lane.b32.xlu0 %v3596, 8
      %v3726 = vpop.permute.xlu0 %3725
      %3727 = vrot.lane.b32.xlu0 %v3601, 8
      %v3728 = vpop.permute.xlu0 %3727
      %3729 = vrot.lane.b32.xlu0 %v3604, 8
      %v3730 = vpop.permute.xlu0 %3729
      %3731 = vrot.lane.b32.xlu0 %v3609, 8
      %v3732 = vpop.permute.xlu0 %3731
      %3733 = vrot.lane.b32.xlu0 %v3612, 8
      %v3734 = vpop.permute.xlu0 %3733
      %3735 = vrot.lane.b32.xlu0 %v3617, 8
      %v3736 = vpop.permute.xlu0 %3735
      %3737 = vrot.lane.b32.xlu0 %v3620, 8
      %v3738 = vpop.permute.xlu0 %3737
      %3739 = vrot.lane.b32.xlu0 %v3625, 8
      %v3740 = vpop.permute.xlu0 %3739
      %3741 = vrot.lane.b32.xlu0 %v3628, 8
      %v3742 = vpop.permute.xlu0 %3741
      %3743 = vrot.lane.b32.xlu0 %v3633, 8
      %v3744 = vpop.permute.xlu0 %3743
      %3745 = vrot.lane.b32.xlu0 %v3636, 8
      %v3746 = vpop.permute.xlu0 %3745
      %3747 = vrot.lane.b32.xlu0 %v3641, 8
      %v3748 = vpop.permute.xlu0 %3747
      %3749 = vrot.lane.b32.xlu0 %v3644, 8
      %v3750 = vpop.permute.xlu0 %3749
      %3751 = vrot.lane.b32.xlu0 %v3649, 8
      %v3752 = vpop.permute.xlu0 %3751
      %3753 = vrot.lane.b32.xlu0 %v3652, 8
      %v3754 = vpop.permute.xlu0 %3753
      %3755 = vrot.lane.b32.xlu0 %v3657, 8
      %v3756 = vpop.permute.xlu0 %3755
      %3757 = vrot.lane.b32.xlu0 %v3660, 8
      %v3758 = vpop.permute.xlu0 %3757
      %v3791 = vsel %vm1094, %v2137, %v3696
      %v3792 = vsel %vm1094, %v2140, %v3698
      %v3793 = vsel %vm1094, %v2145, %v3700
      %v3794 = vsel %vm1094, %v2148, %v3702
      %v3795 = vsel %vm1094, %v2153, %v3704
      %v3796 = vsel %vm1094, %v2156, %v3706
      %v3797 = vsel %vm1094, %v2161, %v3708
      %v3798 = vsel %vm1094, %v2164, %v3710
      %v3799 = vsel %vm1094, %v2169, %v3712
      %v3800 = vsel %vm1094, %v2172, %v3714
      %v3801 = vsel %vm1094, %v2177, %v3716
      %v3802 = vsel %vm1094, %v2180, %v3718
      %v3803 = vsel %vm1094, %v2185, %v3720
      %v3804 = vsel %vm1094, %v2188, %v3722
      %v3805 = vsel %vm1094, %v2193, %v3724
      %v3806 = vsel %vm1094, %v2196, %v3726
      %v3807 = vsel %vm1094, %v2201, %v3728
      %v3808 = vsel %vm1094, %v2204, %v3730
      %v3809 = vsel %vm1094, %v2209, %v3732
      %v3810 = vsel %vm1094, %v2212, %v3734
      %v3811 = vsel %vm1094, %v2217, %v3736
      %v3812 = vsel %vm1094, %v2220, %v3738
      %v3813 = vsel %vm1094, %v2225, %v3740
      %v3814 = vsel %vm1094, %v2228, %v3742
      %v3815 = vsel %vm1094, %v2233, %v3744
      %v3816 = vsel %vm1094, %v2236, %v3746
      %v3817 = vsel %vm1094, %v2241, %v3748
      %v3818 = vsel %vm1094, %v2244, %v3750
      %v3819 = vsel %vm1094, %v2249, %v3752
      %v3820 = vsel %vm1094, %v2252, %v3754
      %v3821 = vsel %vm1094, %v2257, %v3756
      %v3822 = vsel %vm1094, %v2260, %v3758
      %vm3823 = vcmask 130048
      %3824 = vst.msk [vmem:[%s298] sm:$0xff] %vm3823, %v3791
      %3825 = vst.msk [vmem:[%s298 + $0x8] sm:$0xff] %vm3823, %v3792
      %3826 = vst.msk [vmem:[%s298 + $0x10] sm:$0xff] %vm3823, %v3793
      %3827 = vst.msk [vmem:[%s298 + $0x18] sm:$0xff] %vm3823, %v3794
      %3828 = vst.msk [vmem:[%s298 + $0x20] sm:$0xff] %vm3823, %v3795
      %3829 = vst.msk [vmem:[%s298 + $0x28] sm:$0xff] %vm3823, %v3796
      %3830 = vst.msk [vmem:[%s298 + $0x30] sm:$0xff] %vm3823, %v3797
      %3831 = vst.msk [vmem:[%s298 + $0x38] sm:$0xff] %vm3823, %v3798
      %3832 = vst.msk [vmem:[%s298 + $0x40] sm:$0xff] %vm3823, %v3799
      %3833 = vst.msk [vmem:[%s298 + $0x48] sm:$0xff] %vm3823, %v3800
      %3834 = vst.msk [vmem:[%s298 + $0x50] sm:$0xff] %vm3823, %v3801
      %3835 = vst.msk [vmem:[%s298 + $0x58] sm:$0xff] %vm3823, %v3802
      %3836 = vst.msk [vmem:[%s298 + $0x60] sm:$0xff] %vm3823, %v3803
      %3837 = vst.msk [vmem:[%s298 + $0x68] sm:$0xff] %vm3823, %v3804
      %3838 = vst.msk [vmem:[%s298 + $0x70] sm:$0xff] %vm3823, %v3805
      %3839 = vst.msk [vmem:[%s298 + $0x78] sm:$0xff] %vm3823, %v3806
      %3840 = vst.msk [vmem:[%s298 + $0x80] sm:$0xff] %vm3823, %v3807
      %3841 = vst.msk [vmem:[%s298 + $0x88] sm:$0xff] %vm3823, %v3808
      %3842 = vst.msk [vmem:[%s298 + $0x90] sm:$0xff] %vm3823, %v3809
      %3843 = vst.msk [vmem:[%s298 + $0x98] sm:$0xff] %vm3823, %v3810
      %3844 = vst.msk [vmem:[%s298 + $0xa0] sm:$0xff] %vm3823, %v3811
      %3845 = vst.msk [vmem:[%s298 + $0xa8] sm:$0xff] %vm3823, %v3812
      %3846 = vst.msk [vmem:[%s298 + $0xb0] sm:$0xff] %vm3823, %v3813
      %3847 = vst.msk [vmem:[%s298 + $0xb8] sm:$0xff] %vm3823, %v3814
      %3848 = vst.msk [vmem:[%s298 + $0xc0] sm:$0xff] %vm3823, %v3815
      %3849 = vst.msk [vmem:[%s298 + $0xc8] sm:$0xff] %vm3823, %v3816
      %3850 = vst.msk [vmem:[%s298 + $0xd0] sm:$0xff] %vm3823, %v3817
      %3851 = vst.msk [vmem:[%s298 + $0xd8] sm:$0xff] %vm3823, %v3818
      %3852 = vst.msk [vmem:[%s298 + $0xe0] sm:$0xff] %vm3823, %v3819
      %3853 = vst.msk [vmem:[%s298 + $0xe8] sm:$0xff] %vm3823, %v3820
      %3854 = vst.msk [vmem:[%s298 + $0xf0] sm:$0xff] %vm3823, %v3821
      %3855 = vst.msk [vmem:[%s298 + $0xf8] sm:$0xff] %vm3823, %v3822
      %p3856 = scmp.lt.s32.totalorder %s18, 1
      %s3857 = scalar_select %p3856, %s18, 1
      %s3858 = smul.addr %s3857, 32
      %s3859 = smul.addr %s3858, 8
      %s3860 = scalar_lea.vmem %s7, %s3859
      // Predicated region
      $region49: #{tpu_custom_call.1} parent=47 // pred_check
        %p3861 = pneg %p193
      $region50: #{tpu_custom_call.1} parent=47 // pred_check_branch
        %3863 = sbr.rel (%p3861) target = $region52
      $region51: #{tpu_custom_call.1} parent=47 // pred_region
        _
      $region52: #{tpu_custom_call.1} parent=47 // pred_fallthru
        _
    $region48: #{tpu_custom_call.1} parent=5 // pred_fallthru
      _
    %p3864 = scmp.le.s32.totalorder 2, %s13
    // Predicated region
    $region53: #{tpu_custom_call.1} parent=5 // pred_check
      %p3865 = pneg %p3864
    $region54: #{tpu_custom_call.1} parent=5 // pred_check_branch
      %3867 = sbr.rel (%p3865) target = $region56
    $region55: #{tpu_custom_call.1} parent=5 // pred_region
      %s3868 = ssub.s32 %s13, 2
      // Predicated region
      $region57: #{tpu_custom_call.1} parent=55 // pred_check
        %p3869 = pneg %p199
      $region58: #{tpu_custom_call.1} parent=55 // pred_check_branch
        %3871 = sbr.rel (%p3869) target = $region60
      $region59: #{tpu_custom_call.1} parent=55 // pred_region
        %p3872 = scmp.lt.s32.totalorder %s19, 1
        %s3873 = scalar_select %p3872, %s19, 1
        %s3874 = smul.addr %s3873, 32
        %s3875 = smul.addr %s3874, 8
        %s3876 = scalar_lea.vmem %s7, %s3875
      $region60: #{tpu_custom_call.1} parent=55 // pred_fallthru
        _
    $region56: #{tpu_custom_call.1} parent=5 // pred_fallthru
      _
  $region6: #{tpu_custom_call.1} parent=0 // loop_footer
    %s17 = sadd.s32 1, %s13
  $region7: #{tpu_custom_call.1} parent=0 // loop_footer_branch
    %12 = sbr.rel target = $region3
  $region8: #{tpu_custom_call.1} parent=0 // loop_exit
    _

</llo_original>
